<compile_context>
chip_gen: v7x
topology: tpu7x:2x2x1
jax: 0.10.0
libtpu: 0.0.40
codegen_flags: <defaults>
</compile_context>

<pallas_src>
import functools
import math

import jax
import jax.numpy as jnp
from jax.experimental import pallas as pl
from jax.experimental.pallas import tpu as pltpu

_EPS = 1e-5    # nn.LayerNorm default eps
_GROUP = 4     # tokens packed per 128-lane vreg row (4 * d_model(32) = 128)


def _kernel(x_ref, win_ref, attn_w_ref, cross_w_ref, ff1_w_ref, ff2_w_ref,
            vecD_ref, vecF_ref, wout_ref, seg_ref, bout_ref, out_ref,
            *, num_enc, num_dec, d4):
    f32 = jnp.float32

    vecD = vecD_ref[...]          # (n_vD, 4*D)   tiled biases / LN params
    vecF = vecF_ref[...]          # (L_e+L_d, 4*F) tiled ff1 biases
    seg = seg_ref[...]            # (4*D, 4*D)    block-diag ones/D segmented-mean matrix

    def vD(i):                    # (1, 4*D) row with static index
        return vecD[i][None, :]

    def ln(x, iw, ib):
        # Segmented (per-token 32-lane group) LayerNorm.  mean and E[x^2] are two
        # independent MXU matmuls against the same block-diagonal ones/D matrix,
        # so the reductions overlap and the XLU stays free.
        mu = jnp.dot(x, seg, preferred_element_type=f32)
        ex2 = jnp.dot(x * x, seg, preferred_element_type=f32)
        var = ex2 - mu * mu
        return (x - mu) * jax.lax.rsqrt(var + _EPS) * vD(iw) + vD(ib)

    # input projection (block-diag, 4 tokens/row); vecD[0] = input bias + PE(pos=0), tiled
    x = jnp.dot(x_ref[...], win_ref[...], preferred_element_type=f32) + vD(0)
    x0 = x   # transformer(src, src): decoder tgt equals the encoder input

    # ---- encoder stack (post-LN, ReLU feed-forward); attention folded offline ----
    for l in range(num_enc):
        b = 1 + 6 * l
        sa = jnp.dot(x, attn_w_ref[l], preferred_element_type=f32) + vD(b)
        x = ln(x + sa, b + 2, b + 3)
        h = jnp.maximum(
            jnp.dot(x, ff1_w_ref[l], preferred_element_type=f32) + vecF[l][None, :], 0.0)
        ff = jnp.dot(h, ff2_w_ref[l], preferred_element_type=f32) + vD(b + 1)
        x = ln(x + ff, b + 4, b + 5)
    be = 1 + 6 * num_enc
    mem = ln(x, be, be + 1)       # nn.TransformerEncoder final norm

    # ---- decoder cross-attention, hoisted & fused: depends only on loop-invariant mem ----
    ca_all = jnp.dot(mem, cross_w_ref[...], preferred_element_type=f32)  # (R, L_d*4D)

    # ---- decoder stack ----
    t = x0
    for l in range(num_dec):
        b = be + 2 + 9 * l
        sa = jnp.dot(t, attn_w_ref[num_enc + l], preferred_element_type=f32) + vD(b)
        t = ln(t + sa, b + 3, b + 4)
        ca = ca_all[:, l * d4:(l + 1) * d4] + vD(b + 1)
        t = ln(t + ca, b + 5, b + 6)
        h = jnp.maximum(
            jnp.dot(t, ff1_w_ref[num_enc + l], preferred_element_type=f32)
            + vecF[num_enc + l][None, :], 0.0)
        ff = jnp.dot(h, ff2_w_ref[num_enc + l], preferred_element_type=f32) + vD(b + 2)
        t = ln(t + ff, b + 7, b + 8)
    bd = be + 2 + 9 * num_dec
    t = ln(t, bd, bd + 1)         # nn.TransformerDecoder final norm

    # output projection, lane-dense: out[j, g] = output of token 4*g + j
    out_ref[...] = jax.lax.dot_general(
        wout_ref[...], t, (((1,), (1,)), ((), ())),
        preferred_element_type=f32) + bout_ref[0]


def pack_params(p, group=_GROUP):
    """Fold attention offline (valid ONLY because seq_len == 1, so softmax == 1),
    build `group`-token block-diagonal weights, and pack the small per-layer vectors
    into a few stacked (lane-tiled) arrays."""
    D = p["win"].shape[1]
    L_e = p["e_qkv_w"].shape[0]
    L_d = p["d_sqkv_w"].shape[0]

    eye = jnp.eye(group, dtype=jnp.float32)

    def bdiag(w):                 # block_diag of `group` copies of w
        return jnp.kron(eye, w)

    def tile(v):                  # (1, K) -> (1, group*K)
        return jnp.tile(v, (1, group))

    def fold(wqkv, bqkv, wo, bo):
        # seq_len == 1 -> softmax over a single key == 1 -> attention is linear in V
        w = wqkv[:, 2 * D:] @ wo                  # (D, D)
        b = bqkv[:, 2 * D:] @ wo + bo             # (1, D)
        return w, b

    enc = [fold(p["e_qkv_w"][l], p["e_qkv_b"][l], p["e_out_w"][l], p["e_out_b"][l])
           for l in range(L_e)]
    dsf = [fold(p["d_sqkv_w"][l], p["d_sqkv_b"][l], p["d_sout_w"][l], p["d_sout_b"][l])
           for l in range(L_d)]
    dcr = [fold(p["d_cqkv_w"][l], p["d_cqkv_b"][l], p["d_cout_w"][l], p["d_cout_b"][l])
           for l in range(L_d)]

    attn_w = jnp.stack([bdiag(w) for w, _ in enc] + [bdiag(w) for w, _ in dsf])
    cross_w = jnp.concatenate([bdiag(w) for w, _ in dcr], axis=1)   # (4D, L_d*4D)
    ff1_w = jnp.stack([bdiag(p["e_ff1_w"][l]) for l in range(L_e)]
                      + [bdiag(p["d_ff1_w"][l]) for l in range(L_d)])
    ff2_w = jnp.stack([bdiag(p["e_ff2_w"][l]) for l in range(L_e)]
                      + [bdiag(p["d_ff2_w"][l]) for l in range(L_d)])

    vecD = [tile(p["binp"] + p["pe0"])]           # idx 0: input bias + PE(pos=0)
    vecF = []
    for l in range(L_e):
        vecD += [tile(enc[l][1]), tile(p["e_ff2_b"][l]),
                 tile(p["e_n1_w"][l]), tile(p["e_n1_b"][l]),
                 tile(p["e_n2_w"][l]), tile(p["e_n2_b"][l])]
        vecF.append(tile(p["e_ff1_b"][l]))
    vecD += [tile(p["enc_nw"]), tile(p["enc_nb"])]
    for l in range(L_d):
        vecD += [tile(dsf[l][1]), tile(dcr[l][1]), tile(p["d_ff2_b"][l]),
                 tile(p["d_n1_w"][l]), tile(p["d_n1_b"][l]),
                 tile(p["d_n2_w"][l]), tile(p["d_n2_b"][l]),
                 tile(p["d_n3_w"][l]), tile(p["d_n3_b"][l])]
        vecF.append(tile(p["d_ff1_b"][l]))
    vecD += [tile(p["dec_nw"]), tile(p["dec_nb"])]

    seg = jnp.kron(eye, jnp.ones((D, D), jnp.float32) / D)   # segmented-mean matrix
    wout = bdiag(p["wout"].T)                                 # (group, group*D)

    return dict(
        win=bdiag(p["win"]),                        # (group*input_dim, group*D)
        attn_w=attn_w,                              # (L_e + L_d, 4D, 4D)
        cross_w=cross_w,                            # (4D, L_d*4D)
        ff1_w=ff1_w,                                # (L_e + L_d, 4D, 4F)
        ff2_w=ff2_w,                                # (L_e + L_d, 4F, 4D)
        vecD=jnp.concatenate(vecD, axis=0),         # (6*L_e + 9*L_d + 5, 4D)
        vecF=jnp.concatenate(vecF, axis=0),         # (L_e + L_d, 4F)
        wout=wout, seg=seg,
        bout=p["bout"].reshape(1),                  # (1,) scalar in SMEM
        num_enc=L_e, num_dec=L_d, group=group, d_model=D,
    )


def timeseries_transformer(packed, x):
    N, input_dim = x.shape
    G = packed["group"]
    D4 = G * packed["d_model"]
    L_e, L_d = packed["num_enc"], packed["num_dec"]

    def rup(a, m):
        return ((a + m - 1) // m) * m

    # Token tiling: a single block (weights loaded once) up to 2048 tokens; for larger N,
    # 2048-token blocks so the "parallel" grid has >=2 steps (feeds both v7x TensorCores)
    # while per-block VMEM stays at a few MiB on every generation.
    if N <= 2048:
        N_pad = max(rup(N, 8 * G), 8 * G)   # packed rows are a multiple of 8 sublanes
        TM = N_pad
    else:
        TM = 2048                            # multiple of 4*128 -> lane-aligned out blocks
        N_pad = rup(N, TM)
    if N_pad != N:
        x = jnp.pad(x, ((0, N_pad - N), (0, 0)))

    xg = x.reshape(N_pad // G, G * input_dim)    # pack 4 tokens per row (free in HBM)
    R = TM // G
    NG = N_pad // G

    kernel = functools.partial(_kernel, num_enc=L_e, num_dec=L_d, d4=D4)
    out = pl.pallas_call(
        kernel,
        out_shape=jax.ShapeDtypeStruct((G, NG), jnp.float32),
        grid=(NG // R,),
        in_specs=[
            pl.BlockSpec((R, G * input_dim), lambda i: (i, 0)),
            pl.BlockSpec(packed["win"].shape, lambda i: (0, 0)),
            pl.BlockSpec(packed["attn_w"].shape, lambda i: (0, 0, 0)),
            pl.BlockSpec(packed["cross_w"].shape, lambda i: (0, 0)),
            pl.BlockSpec(packed["ff1_w"].shape, lambda i: (0, 0, 0)),
            pl.BlockSpec(packed["ff2_w"].shape, lambda i: (0, 0, 0)),
            pl.BlockSpec(packed["vecD"].shape, lambda i: (0, 0)),
            pl.BlockSpec(packed["vecF"].shape, lambda i: (0, 0)),
            pl.BlockSpec(packed["wout"].shape, lambda i: (0, 0)),
            pl.BlockSpec(packed["seg"].shape, lambda i: (0, 0)),
            pl.BlockSpec(memory_space=pltpu.MemorySpace.SMEM),
        ],
        out_specs=pl.BlockSpec((G, R), lambda i: (0, i)),
        compiler_params=pltpu.CompilerParams(dimension_semantics=("parallel",)),
    )(xg, packed["win"], packed["attn_w"], packed["cross_w"], packed["ff1_w"],
      packed["ff2_w"], packed["vecD"], packed["vecF"], packed["wout"],
      packed["seg"], packed["bout"])
    # (G, NG) -> (N, 1): out[j, g] is token 4*g + j, so transpose+flatten restores order
    return out.T.reshape(N_pad, 1)[:N]


def init_params(key, input_dim, d_model, num_enc, num_dec, dim_ff):
    D, F = d_model, dim_ff
    keys = iter(jax.random.split(key, 128))

    def w(*shape):
        return (0.02 * jax.random.normal(next(keys), shape)).astype(jnp.float32)

    def stack(fn, n):
        return jnp.stack([fn() for _ in range(n)])

    p = {}
    p["win"] = w(input_dim, D)
    p["binp"] = w(1, D)
    # PositionalEncoding at position 0: sin(0)=0 on even channels, cos(0)=1 on odd channels
    p["pe0"] = jnp.zeros((1, D), jnp.float32).at[0, 1::2].set(1.0)

    p["e_qkv_w"] = stack(lambda: w(D, 3 * D), num_enc)
    p["e_qkv_b"] = stack(lambda: w(1, 3 * D), num_enc)
    p["e_out_w"] = stack(lambda: w(D, D), num_enc)
    p["e_out_b"] = stack(lambda: w(1, D), num_enc)
    p["e_ff1_w"] = stack(lambda: w(D, F), num_enc)
    p["e_ff1_b"] = stack(lambda: w(1, F), num_enc)
    p["e_ff2_w"] = stack(lambda: w(F, D), num_enc)
    p["e_ff2_b"] = stack(lambda: w(1, D), num_enc)
    p["e_n1_w"] = stack(lambda: 1.0 + w(1, D), num_enc)
    p["e_n1_b"] = stack(lambda: w(1, D), num_enc)
    p["e_n2_w"] = stack(lambda: 1.0 + w(1, D), num_enc)
    p["e_n2_b"] = stack(lambda: w(1, D), num_enc)
    p["enc_nw"] = 1.0 + w(1, D)
    p["enc_nb"] = w(1, D)

    p["d_sqkv_w"] = stack(lambda: w(D, 3 * D), num_dec)
    p["d_sqkv_b"] = stack(lambda: w(1, 3 * D), num_dec)
    p["d_sout_w"] = stack(lambda: w(D, D), num_dec)
    p["d_sout_b"] = stack(lambda: w(1, D), num_dec)
    p["d_cqkv_w"] = stack(lambda: w(D, 3 * D), num_dec)
    p["d_cqkv_b"] = stack(lambda: w(1, 3 * D), num_dec)
    p["d_cout_w"] = stack(lambda: w(D, D), num_dec)
    p["d_cout_b"] = stack(lambda: w(1, D), num_dec)
    p["d_ff1_w"] = stack(lambda: w(D, F), num_dec)
    p["d_ff1_b"] = stack(lambda: w(1, F), num_dec)
    p["d_ff2_w"] = stack(lambda: w(F, D), num_dec)
    p["d_ff2_b"] = stack(lambda: w(1, D), num_dec)
    p["d_n1_w"] = stack(lambda: 1.0 + w(1, D), num_dec)
    p["d_n1_b"] = stack(lambda: w(1, D), num_dec)
    p["d_n2_w"] = stack(lambda: 1.0 + w(1, D), num_dec)
    p["d_n2_b"] = stack(lambda: w(1, D), num_dec)
    p["d_n3_w"] = stack(lambda: 1.0 + w(1, D), num_dec)
    p["d_n3_b"] = stack(lambda: w(1, D), num_dec)
    p["dec_nw"] = 1.0 + w(1, D)
    p["dec_nb"] = w(1, D)

    p["wout"] = w(D, 1)
    p["bout"] = w(1, 1)
    return p


def ref_forward(p, x, nhead):
    """Pure-JAX reference with explicit multi-head attention (softmax over the
    length-1 key axis), mirroring PyTorch nn.Transformer in eval mode."""
    D = p["win"].shape[1]
    hd = D // nhead

    def mha(q_in, kv_in, wqkv, bqkv, wo, bo):
        N = q_in.shape[0]
        q = q_in @ wqkv[:, :D] + bqkv[0, :D]
        k = kv_in @ wqkv[:, D:2 * D] + bqkv[0, D:2 * D]
        v = kv_in @ wqkv[:, 2 * D:] + bqkv[0, 2 * D:]
        qh = q.reshape(N, nhead, hd)
        kh = k.reshape(N, nhead, hd)
        vh = v.reshape(N, nhead, hd)
        s = jnp.sum(qh * kh, axis=-1, keepdims=True) / math.sqrt(hd)  # (N, h, 1 key)
        pw = jax.nn.softmax(s, axis=-1)                               # == 1
        attn = (pw * vh).reshape(N, D)
        return attn @ wo + bo[0]

    def ln(xx, wgt, b):
        mu = xx.mean(-1, keepdims=True)
        var = ((xx - mu) ** 2).mean(-1, keepdims=True)
        return (xx - mu) / jnp.sqrt(var + _EPS) * wgt[0] + b[0]

    xx = x @ p["win"] + p["binp"][0] + p["pe0"][0]
    x0 = xx
    for l in range(p["e_qkv_w"].shape[0]):
        sa = mha(xx, xx, p["e_qkv_w"][l], p["e_qkv_b"][l], p["e_out_w"][l], p["e_out_b"][l])
        xx = ln(xx + sa, p["e_n1_w"][l], p["e_n1_b"][l])
        ff = jnp.maximum(xx @ p["e_ff1_w"][l] + p["e_ff1_b"][l][0], 0.0) @ p["e_ff2_w"][l] + p["e_ff2_b"][l][0]
        xx = ln(xx + ff, p["e_n2_w"][l], p["e_n2_b"][l])
    mem = ln(xx, p["enc_nw"], p["enc_nb"])
    t = x0
    for l in range(p["d_sqkv_w"].shape[0]):
        sa = mha(t, t, p["d_sqkv_w"][l], p["d_sqkv_b"][l], p["d_sout_w"][l], p["d_sout_b"][l])
        t = ln(t + sa, p["d_n1_w"][l], p["d_n1_b"][l])
        ca = mha(t, mem, p["d_cqkv_w"][l], p["d_cqkv_b"][l], p["d_cout_w"][l], p["d_cout_b"][l])
        t = ln(t + ca, p["d_n2_w"][l], p["d_n2_b"][l])
        ff = jnp.maximum(t @ p["d_ff1_w"][l] + p["d_ff1_b"][l][0], 0.0) @ p["d_ff2_w"][l] + p["d_ff2_b"][l][0]
        t = ln(t + ff, p["d_n3_w"][l], p["d_n3_b"][l])
    t = ln(t, p["dec_nw"], p["dec_nb"])
    return t @ p["wout"] + p["bout"][0]


if __name__ == "__main__":
    # model hyperparameters (small, consistent with the module's __init__)
    INPUT_DIM, D_MODEL, NHEAD = 8, 32, 4
    NUM_ENC, NUM_DEC, DIM_FF = 2, 2, 64
    N_TOKENS = 16  # src rows; becomes the transformer batch dimension (seq_len is 1)

    key = jax.random.PRNGKey(0)
    kx, kp = jax.random.split(key)
    src = jax.random.normal(kx, (N_TOKENS, INPUT_DIM), dtype=jnp.float32)
    params = init_params(kp, INPUT_DIM, D_MODEL, NUM_ENC, NUM_DEC, DIM_FF)

    packed = pack_params(params)           # offline attention fold + block-diag packing
    out = timeseries_transformer(packed, src)
    out = jax.block_until_ready(out)
    assert out.shape == (N_TOKENS, 1), out.shape

    ref = jax.block_until_ready(ref_forward(params, src, NHEAD))
    assert jnp.allclose(out, ref, atol=1e-4, rtol=1e-4), (out, ref)

    print("KERNEL_OK")
</pallas_src>

<mosaic_0001>
module attributes {stable_mosaic.version = 11 : i64} {
  func.func @_kernel(%arg0: i32, %arg1: memref<8x32xf32, #tpu.memory_space<vmem>>, %arg2: memref<32x128xf32, #tpu.memory_space<vmem>>, %arg3: memref<4x128x128xf32, #tpu.memory_space<vmem>>, %arg4: memref<128x256xf32, #tpu.memory_space<vmem>>, %arg5: memref<4x128x256xf32, #tpu.memory_space<vmem>>, %arg6: memref<4x256x128xf32, #tpu.memory_space<vmem>>, %arg7: memref<35x128xf32, #tpu.memory_space<vmem>>, %arg8: memref<4x256xf32, #tpu.memory_space<vmem>>, %arg9: memref<4x128xf32, #tpu.memory_space<vmem>>, %arg10: memref<128x128xf32, #tpu.memory_space<vmem>>, %arg11: memref<1xf32, #tpu.memory_space<smem>>, %arg12: memref<4x8xf32, #tpu.memory_space<vmem>>) attributes {dimension_semantics = [#tpu.dimension_semantics<parallel>], iteration_bounds = array<i64: 1>, scalar_prefetch = 0 : i64, scratch_operands = 0 : i64, tpu.core_type = #tpu.core_type<tc>, window_params = [{transform_indices = @transform_0, window_bounds = array<i64: 8, 32>}, {pipeline_mode = #tpu.pipeline_mode<synchronous>, transform_indices = @transform_1, window_bounds = array<i64: 32, 128>}, {pipeline_mode = #tpu.pipeline_mode<synchronous>, transform_indices = @transform_2, window_bounds = array<i64: 4, 128, 128>}, {pipeline_mode = #tpu.pipeline_mode<synchronous>, transform_indices = @transform_3, window_bounds = array<i64: 128, 256>}, {pipeline_mode = #tpu.pipeline_mode<synchronous>, transform_indices = @transform_4, window_bounds = array<i64: 4, 128, 256>}, {pipeline_mode = #tpu.pipeline_mode<synchronous>, transform_indices = @transform_5, window_bounds = array<i64: 4, 256, 128>}, {pipeline_mode = #tpu.pipeline_mode<synchronous>, transform_indices = @transform_6, window_bounds = array<i64: 35, 128>}, {pipeline_mode = #tpu.pipeline_mode<synchronous>, transform_indices = @transform_7, window_bounds = array<i64: 4, 256>}, {pipeline_mode = #tpu.pipeline_mode<synchronous>, transform_indices = @transform_8, window_bounds = array<i64: 4, 128>}, {pipeline_mode = #tpu.pipeline_mode<synchronous>, transform_indices = @transform_9, window_bounds = array<i64: 128, 128>}, {transform_indices = @transform_10, window_bounds = array<i64: 1>}, {transform_indices = @transform_11, window_bounds = array<i64: 4, 8>}]} {
    %c0 = arith.constant 0 : index
    %c0_0 = arith.constant 0 : index
    %0 = vector.load %arg7[%c0, %c0_0] : memref<35x128xf32, #tpu.memory_space<vmem>>, vector<35x128xf32>
    %c0_1 = arith.constant 0 : index
    %c0_2 = arith.constant 0 : index
    %1 = vector.load %arg8[%c0_1, %c0_2] : memref<4x256xf32, #tpu.memory_space<vmem>>, vector<4x256xf32>
    %c0_3 = arith.constant 0 : index
    %c0_4 = arith.constant 0 : index
    %2 = vector.load %arg10[%c0_3, %c0_4] : memref<128x128xf32, #tpu.memory_space<vmem>>, vector<128x128xf32>
    %c0_5 = arith.constant 0 : index
    %c0_6 = arith.constant 0 : index
    %3 = vector.load %arg1[%c0_5, %c0_6] : memref<8x32xf32, #tpu.memory_space<vmem>>, vector<8x32xf32>
    %c0_7 = arith.constant 0 : index
    %c0_8 = arith.constant 0 : index
    %4 = vector.load %arg2[%c0_7, %c0_8] : memref<32x128xf32, #tpu.memory_space<vmem>>, vector<32x128xf32>
    %cst = arith.constant dense<0.000000e+00> : vector<8x128xf32>
    %5 = tpu.matmul %3, %4, %cst {dimension_numbers = #tpu.dot_dimension_numbers<[1], [0], [0], [1], [0, 0, 1, 1], [], []>} : vector<8x32xf32>, vector<32x128xf32>, vector<8x128xf32> -> vector<8x128xf32>
    %6 = vector.extract_strided_slice %0 {offsets = [0, 0], sizes = [1, 128], strides = [1, 1]} : vector<35x128xf32> to vector<1x128xf32>
    %7 = vector.shape_cast %6 : vector<1x128xf32> to vector<128xf32>
    %8 = vector.shape_cast %7 : vector<128xf32> to vector<1x128xf32>
    %9 = vector.broadcast %8 : vector<1x128xf32> to vector<8x128xf32>
    %10 = arith.addf %5, %9 : vector<8x128xf32>
    %c0_9 = arith.constant 0 : index
    %c0_10 = arith.constant 0 : index
    %c0_11 = arith.constant 0 : index
    %11 = vector.load %arg3[%c0_9, %c0_10, %c0_11] : memref<4x128x128xf32, #tpu.memory_space<vmem>>, vector<1x128x128xf32>
    %12 = vector.shape_cast %11 : vector<1x128x128xf32> to vector<128x128xf32>
    %cst_12 = arith.constant dense<0.000000e+00> : vector<8x128xf32>
    %13 = tpu.matmul %10, %12, %cst_12 {dimension_numbers = #tpu.dot_dimension_numbers<[1], [0], [0], [1], [0, 0, 1, 1], [], []>} : vector<8x128xf32>, vector<128x128xf32>, vector<8x128xf32> -> vector<8x128xf32>
    %14 = vector.extract_strided_slice %0 {offsets = [1, 0], sizes = [1, 128], strides = [1, 1]} : vector<35x128xf32> to vector<1x128xf32>
    %15 = vector.shape_cast %14 : vector<1x128xf32> to vector<128xf32>
    %16 = vector.shape_cast %15 : vector<128xf32> to vector<1x128xf32>
    %17 = vector.broadcast %16 : vector<1x128xf32> to vector<8x128xf32>
    %18 = arith.addf %13, %17 : vector<8x128xf32>
    %19 = arith.addf %10, %18 : vector<8x128xf32>
    %cst_13 = arith.constant dense<0.000000e+00> : vector<8x128xf32>
    %20 = tpu.matmul %19, %2, %cst_13 {dimension_numbers = #tpu.dot_dimension_numbers<[1], [0], [0], [1], [0, 0, 1, 1], [], []>} : vector<8x128xf32>, vector<128x128xf32>, vector<8x128xf32> -> vector<8x128xf32>
    %21 = arith.mulf %19, %19 : vector<8x128xf32>
    %cst_14 = arith.constant dense<0.000000e+00> : vector<8x128xf32>
    %22 = tpu.matmul %21, %2, %cst_14 {dimension_numbers = #tpu.dot_dimension_numbers<[1], [0], [0], [1], [0, 0, 1, 1], [], []>} : vector<8x128xf32>, vector<128x128xf32>, vector<8x128xf32> -> vector<8x128xf32>
    %23 = arith.mulf %20, %20 : vector<8x128xf32>
    %24 = arith.subf %22, %23 : vector<8x128xf32>
    %25 = arith.subf %19, %20 : vector<8x128xf32>
    %cst_15 = arith.constant 9.99999974E-6 : f32
    %26 = vector.broadcast %cst_15 : f32 to vector<8x128xf32>
    %27 = arith.addf %24, %26 : vector<8x128xf32>
    %28 = math.rsqrt %27 : vector<8x128xf32>
    %29 = arith.mulf %25, %28 : vector<8x128xf32>
    %30 = vector.extract_strided_slice %0 {offsets = [3, 0], sizes = [1, 128], strides = [1, 1]} : vector<35x128xf32> to vector<1x128xf32>
    %31 = vector.shape_cast %30 : vector<1x128xf32> to vector<128xf32>
    %32 = vector.shape_cast %31 : vector<128xf32> to vector<1x128xf32>
    %33 = vector.broadcast %32 : vector<1x128xf32> to vector<8x128xf32>
    %34 = arith.mulf %29, %33 : vector<8x128xf32>
    %35 = vector.extract_strided_slice %0 {offsets = [4, 0], sizes = [1, 128], strides = [1, 1]} : vector<35x128xf32> to vector<1x128xf32>
    %36 = vector.shape_cast %35 : vector<1x128xf32> to vector<128xf32>
    %37 = vector.shape_cast %36 : vector<128xf32> to vector<1x128xf32>
    %38 = vector.broadcast %37 : vector<1x128xf32> to vector<8x128xf32>
    %39 = arith.addf %34, %38 : vector<8x128xf32>
    %c0_16 = arith.constant 0 : index
    %c0_17 = arith.constant 0 : index
    %c0_18 = arith.constant 0 : index
    %40 = vector.load %arg5[%c0_16, %c0_17, %c0_18] : memref<4x128x256xf32, #tpu.memory_space<vmem>>, vector<1x128x256xf32>
    %41 = vector.shape_cast %40 : vector<1x128x256xf32> to vector<128x256xf32>
    %cst_19 = arith.constant dense<0.000000e+00> : vector<8x256xf32>
    %42 = tpu.matmul %39, %41, %cst_19 {dimension_numbers = #tpu.dot_dimension_numbers<[1], [0], [0], [1], [0, 0, 1, 1], [], []>} : vector<8x128xf32>, vector<128x256xf32>, vector<8x256xf32> -> vector<8x256xf32>
    %43 = vector.extract_strided_slice %1 {offsets = [0, 0], sizes = [1, 256], strides = [1, 1]} : vector<4x256xf32> to vector<1x256xf32>
    %44 = vector.shape_cast %43 : vector<1x256xf32> to vector<256xf32>
    %45 = vector.shape_cast %44 : vector<256xf32> to vector<1x256xf32>
    %46 = vector.broadcast %45 : vector<1x256xf32> to vector<8x256xf32>
    %47 = arith.addf %42, %46 : vector<8x256xf32>
    %cst_20 = arith.constant 0.000000e+00 : f32
    %48 = vector.broadcast %cst_20 : f32 to vector<8x256xf32>
    %49 = arith.maximumf %47, %48 : vector<8x256xf32>
    %c0_21 = arith.constant 0 : index
    %c0_22 = arith.constant 0 : index
    %c0_23 = arith.constant 0 : index
    %50 = vector.load %arg6[%c0_21, %c0_22, %c0_23] : memref<4x256x128xf32, #tpu.memory_space<vmem>>, vector<1x256x128xf32>
    %51 = vector.shape_cast %50 : vector<1x256x128xf32> to vector<256x128xf32>
    %cst_24 = arith.constant dense<0.000000e+00> : vector<8x128xf32>
    %52 = tpu.matmul %49, %51, %cst_24 {dimension_numbers = #tpu.dot_dimension_numbers<[1], [0], [0], [1], [0, 0, 1, 1], [], []>} : vector<8x256xf32>, vector<256x128xf32>, vector<8x128xf32> -> vector<8x128xf32>
    %53 = vector.extract_strided_slice %0 {offsets = [2, 0], sizes = [1, 128], strides = [1, 1]} : vector<35x128xf32> to vector<1x128xf32>
    %54 = vector.shape_cast %53 : vector<1x128xf32> to vector<128xf32>
    %55 = vector.shape_cast %54 : vector<128xf32> to vector<1x128xf32>
    %56 = vector.broadcast %55 : vector<1x128xf32> to vector<8x128xf32>
    %57 = arith.addf %52, %56 : vector<8x128xf32>
    %58 = arith.addf %39, %57 : vector<8x128xf32>
    %cst_25 = arith.constant dense<0.000000e+00> : vector<8x128xf32>
    %59 = tpu.matmul %58, %2, %cst_25 {dimension_numbers = #tpu.dot_dimension_numbers<[1], [0], [0], [1], [0, 0, 1, 1], [], []>} : vector<8x128xf32>, vector<128x128xf32>, vector<8x128xf32> -> vector<8x128xf32>
    %60 = arith.mulf %58, %58 : vector<8x128xf32>
    %cst_26 = arith.constant dense<0.000000e+00> : vector<8x128xf32>
    %61 = tpu.matmul %60, %2, %cst_26 {dimension_numbers = #tpu.dot_dimension_numbers<[1], [0], [0], [1], [0, 0, 1, 1], [], []>} : vector<8x128xf32>, vector<128x128xf32>, vector<8x128xf32> -> vector<8x128xf32>
    %62 = arith.mulf %59, %59 : vector<8x128xf32>
    %63 = arith.subf %61, %62 : vector<8x128xf32>
    %64 = arith.subf %58, %59 : vector<8x128xf32>
    %cst_27 = arith.constant 9.99999974E-6 : f32
    %65 = vector.broadcast %cst_27 : f32 to vector<8x128xf32>
    %66 = arith.addf %63, %65 : vector<8x128xf32>
    %67 = math.rsqrt %66 : vector<8x128xf32>
    %68 = arith.mulf %64, %67 : vector<8x128xf32>
    %69 = vector.extract_strided_slice %0 {offsets = [5, 0], sizes = [1, 128], strides = [1, 1]} : vector<35x128xf32> to vector<1x128xf32>
    %70 = vector.shape_cast %69 : vector<1x128xf32> to vector<128xf32>
    %71 = vector.shape_cast %70 : vector<128xf32> to vector<1x128xf32>
    %72 = vector.broadcast %71 : vector<1x128xf32> to vector<8x128xf32>
    %73 = arith.mulf %68, %72 : vector<8x128xf32>
    %74 = vector.extract_strided_slice %0 {offsets = [6, 0], sizes = [1, 128], strides = [1, 1]} : vector<35x128xf32> to vector<1x128xf32>
    %75 = vector.shape_cast %74 : vector<1x128xf32> to vector<128xf32>
    %76 = vector.shape_cast %75 : vector<128xf32> to vector<1x128xf32>
    %77 = vector.broadcast %76 : vector<1x128xf32> to vector<8x128xf32>
    %78 = arith.addf %73, %77 : vector<8x128xf32>
    %c1 = arith.constant 1 : index
    %c0_28 = arith.constant 0 : index
    %c0_29 = arith.constant 0 : index
    %79 = vector.load %arg3[%c1, %c0_28, %c0_29] : memref<4x128x128xf32, #tpu.memory_space<vmem>>, vector<1x128x128xf32>
    %80 = vector.shape_cast %79 : vector<1x128x128xf32> to vector<128x128xf32>
    %cst_30 = arith.constant dense<0.000000e+00> : vector<8x128xf32>
    %81 = tpu.matmul %78, %80, %cst_30 {dimension_numbers = #tpu.dot_dimension_numbers<[1], [0], [0], [1], [0, 0, 1, 1], [], []>} : vector<8x128xf32>, vector<128x128xf32>, vector<8x128xf32> -> vector<8x128xf32>
    %82 = vector.extract_strided_slice %0 {offsets = [7, 0], sizes = [1, 128], strides = [1, 1]} : vector<35x128xf32> to vector<1x128xf32>
    %83 = vector.shape_cast %82 : vector<1x128xf32> to vector<128xf32>
    %84 = vector.shape_cast %83 : vector<128xf32> to vector<1x128xf32>
    %85 = vector.broadcast %84 : vector<1x128xf32> to vector<8x128xf32>
    %86 = arith.addf %81, %85 : vector<8x128xf32>
    %87 = arith.addf %78, %86 : vector<8x128xf32>
    %cst_31 = arith.constant dense<0.000000e+00> : vector<8x128xf32>
    %88 = tpu.matmul %87, %2, %cst_31 {dimension_numbers = #tpu.dot_dimension_numbers<[1], [0], [0], [1], [0, 0, 1, 1], [], []>} : vector<8x128xf32>, vector<128x128xf32>, vector<8x128xf32> -> vector<8x128xf32>
    %89 = arith.mulf %87, %87 : vector<8x128xf32>
    %cst_32 = arith.constant dense<0.000000e+00> : vector<8x128xf32>
    %90 = tpu.matmul %89, %2, %cst_32 {dimension_numbers = #tpu.dot_dimension_numbers<[1], [0], [0], [1], [0, 0, 1, 1], [], []>} : vector<8x128xf32>, vector<128x128xf32>, vector<8x128xf32> -> vector<8x128xf32>
    %91 = arith.mulf %88, %88 : vector<8x128xf32>
    %92 = arith.subf %90, %91 : vector<8x128xf32>
    %93 = arith.subf %87, %88 : vector<8x128xf32>
    %cst_33 = arith.constant 9.99999974E-6 : f32
    %94 = vector.broadcast %cst_33 : f32 to vector<8x128xf32>
    %95 = arith.addf %92, %94 : vector<8x128xf32>
    %96 = math.rsqrt %95 : vector<8x128xf32>
    %97 = arith.mulf %93, %96 : vector<8x128xf32>
    %98 = vector.extract_strided_slice %0 {offsets = [9, 0], sizes = [1, 128], strides = [1, 1]} : vector<35x128xf32> to vector<1x128xf32>
    %99 = vector.shape_cast %98 : vector<1x128xf32> to vector<128xf32>
    %100 = vector.shape_cast %99 : vector<128xf32> to vector<1x128xf32>
    %101 = vector.broadcast %100 : vector<1x128xf32> to vector<8x128xf32>
    %102 = arith.mulf %97, %101 : vector<8x128xf32>
    %103 = vector.extract_strided_slice %0 {offsets = [10, 0], sizes = [1, 128], strides = [1, 1]} : vector<35x128xf32> to vector<1x128xf32>
    %104 = vector.shape_cast %103 : vector<1x128xf32> to vector<128xf32>
    %105 = vector.shape_cast %104 : vector<128xf32> to vector<1x128xf32>
    %106 = vector.broadcast %105 : vector<1x128xf32> to vector<8x128xf32>
    %107 = arith.addf %102, %106 : vector<8x128xf32>
    %c1_34 = arith.constant 1 : index
    %c0_35 = arith.constant 0 : index
    %c0_36 = arith.constant 0 : index
    %108 = vector.load %arg5[%c1_34, %c0_35, %c0_36] : memref<4x128x256xf32, #tpu.memory_space<vmem>>, vector<1x128x256xf32>
    %109 = vector.shape_cast %108 : vector<1x128x256xf32> to vector<128x256xf32>
    %cst_37 = arith.constant dense<0.000000e+00> : vector<8x256xf32>
    %110 = tpu.matmul %107, %109, %cst_37 {dimension_numbers = #tpu.dot_dimension_numbers<[1], [0], [0], [1], [0, 0, 1, 1], [], []>} : vector<8x128xf32>, vector<128x256xf32>, vector<8x256xf32> -> vector<8x256xf32>
    %111 = vector.extract_strided_slice %1 {offsets = [1, 0], sizes = [1, 256], strides = [1, 1]} : vector<4x256xf32> to vector<1x256xf32>
    %112 = vector.shape_cast %111 : vector<1x256xf32> to vector<256xf32>
    %113 = vector.shape_cast %112 : vector<256xf32> to vector<1x256xf32>
    %114 = vector.broadcast %113 : vector<1x256xf32> to vector<8x256xf32>
    %115 = arith.addf %110, %114 : vector<8x256xf32>
    %cst_38 = arith.constant 0.000000e+00 : f32
    %116 = vector.broadcast %cst_38 : f32 to vector<8x256xf32>
    %117 = arith.maximumf %115, %116 : vector<8x256xf32>
    %c1_39 = arith.constant 1 : index
    %c0_40 = arith.constant 0 : index
    %c0_41 = arith.constant 0 : index
    %118 = vector.load %arg6[%c1_39, %c0_40, %c0_41] : memref<4x256x128xf32, #tpu.memory_space<vmem>>, vector<1x256x128xf32>
    %119 = vector.shape_cast %118 : vector<1x256x128xf32> to vector<256x128xf32>
    %cst_42 = arith.constant dense<0.000000e+00> : vector<8x128xf32>
    %120 = tpu.matmul %117, %119, %cst_42 {dimension_numbers = #tpu.dot_dimension_numbers<[1], [0], [0], [1], [0, 0, 1, 1], [], []>} : vector<8x256xf32>, vector<256x128xf32>, vector<8x128xf32> -> vector<8x128xf32>
    %121 = vector.extract_strided_slice %0 {offsets = [8, 0], sizes = [1, 128], strides = [1, 1]} : vector<35x128xf32> to vector<1x128xf32>
    %122 = vector.shape_cast %121 : vector<1x128xf32> to vector<128xf32>
    %123 = vector.shape_cast %122 : vector<128xf32> to vector<1x128xf32>
    %124 = vector.broadcast %123 : vector<1x128xf32> to vector<8x128xf32>
    %125 = arith.addf %120, %124 : vector<8x128xf32>
    %126 = arith.addf %107, %125 : vector<8x128xf32>
    %cst_43 = arith.constant dense<0.000000e+00> : vector<8x128xf32>
    %127 = tpu.matmul %126, %2, %cst_43 {dimension_numbers = #tpu.dot_dimension_numbers<[1], [0], [0], [1], [0, 0, 1, 1], [], []>} : vector<8x128xf32>, vector<128x128xf32>, vector<8x128xf32> -> vector<8x128xf32>
    %128 = arith.mulf %126, %126 : vector<8x128xf32>
    %cst_44 = arith.constant dense<0.000000e+00> : vector<8x128xf32>
    %129 = tpu.matmul %128, %2, %cst_44 {dimension_numbers = #tpu.dot_dimension_numbers<[1], [0], [0], [1], [0, 0, 1, 1], [], []>} : vector<8x128xf32>, vector<128x128xf32>, vector<8x128xf32> -> vector<8x128xf32>
    %130 = arith.mulf %127, %127 : vector<8x128xf32>
    %131 = arith.subf %129, %130 : vector<8x128xf32>
    %132 = arith.subf %126, %127 : vector<8x128xf32>
    %cst_45 = arith.constant 9.99999974E-6 : f32
    %133 = vector.broadcast %cst_45 : f32 to vector<8x128xf32>
    %134 = arith.addf %131, %133 : vector<8x128xf32>
    %135 = math.rsqrt %134 : vector<8x128xf32>
    %136 = arith.mulf %132, %135 : vector<8x128xf32>
    %137 = vector.extract_strided_slice %0 {offsets = [11, 0], sizes = [1, 128], strides = [1, 1]} : vector<35x128xf32> to vector<1x128xf32>
    %138 = vector.shape_cast %137 : vector<1x128xf32> to vector<128xf32>
    %139 = vector.shape_cast %138 : vector<128xf32> to vector<1x128xf32>
    %140 = vector.broadcast %139 : vector<1x128xf32> to vector<8x128xf32>
    %141 = arith.mulf %136, %140 : vector<8x128xf32>
    %142 = vector.extract_strided_slice %0 {offsets = [12, 0], sizes = [1, 128], strides = [1, 1]} : vector<35x128xf32> to vector<1x128xf32>
    %143 = vector.shape_cast %142 : vector<1x128xf32> to vector<128xf32>
    %144 = vector.shape_cast %143 : vector<128xf32> to vector<1x128xf32>
    %145 = vector.broadcast %144 : vector<1x128xf32> to vector<8x128xf32>
    %146 = arith.addf %141, %145 : vector<8x128xf32>
    %cst_46 = arith.constant dense<0.000000e+00> : vector<8x128xf32>
    %147 = tpu.matmul %146, %2, %cst_46 {dimension_numbers = #tpu.dot_dimension_numbers<[1], [0], [0], [1], [0, 0, 1, 1], [], []>} : vector<8x128xf32>, vector<128x128xf32>, vector<8x128xf32> -> vector<8x128xf32>
    %148 = arith.mulf %146, %146 : vector<8x128xf32>
    %cst_47 = arith.constant dense<0.000000e+00> : vector<8x128xf32>
    %149 = tpu.matmul %148, %2, %cst_47 {dimension_numbers = #tpu.dot_dimension_numbers<[1], [0], [0], [1], [0, 0, 1, 1], [], []>} : vector<8x128xf32>, vector<128x128xf32>, vector<8x128xf32> -> vector<8x128xf32>
    %150 = arith.mulf %147, %147 : vector<8x128xf32>
    %151 = arith.subf %149, %150 : vector<8x128xf32>
    %152 = arith.subf %146, %147 : vector<8x128xf32>
    %cst_48 = arith.constant 9.99999974E-6 : f32
    %153 = vector.broadcast %cst_48 : f32 to vector<8x128xf32>
    %154 = arith.addf %151, %153 : vector<8x128xf32>
    %155 = math.rsqrt %154 : vector<8x128xf32>
    %156 = arith.mulf %152, %155 : vector<8x128xf32>
    %157 = vector.extract_strided_slice %0 {offsets = [13, 0], sizes = [1, 128], strides = [1, 1]} : vector<35x128xf32> to vector<1x128xf32>
    %158 = vector.shape_cast %157 : vector<1x128xf32> to vector<128xf32>
    %159 = vector.shape_cast %158 : vector<128xf32> to vector<1x128xf32>
    %160 = vector.broadcast %159 : vector<1x128xf32> to vector<8x128xf32>
    %161 = arith.mulf %156, %160 : vector<8x128xf32>
    %162 = vector.extract_strided_slice %0 {offsets = [14, 0], sizes = [1, 128], strides = [1, 1]} : vector<35x128xf32> to vector<1x128xf32>
    %163 = vector.shape_cast %162 : vector<1x128xf32> to vector<128xf32>
    %164 = vector.shape_cast %163 : vector<128xf32> to vector<1x128xf32>
    %165 = vector.broadcast %164 : vector<1x128xf32> to vector<8x128xf32>
    %166 = arith.addf %161, %165 : vector<8x128xf32>
    %c0_49 = arith.constant 0 : index
    %c0_50 = arith.constant 0 : index
    %167 = vector.load %arg4[%c0_49, %c0_50] : memref<128x256xf32, #tpu.memory_space<vmem>>, vector<128x256xf32>
    %cst_51 = arith.constant dense<0.000000e+00> : vector<8x256xf32>
    %168 = tpu.matmul %166, %167, %cst_51 {dimension_numbers = #tpu.dot_dimension_numbers<[1], [0], [0], [1], [0, 0, 1, 1], [], []>} : vector<8x128xf32>, vector<128x256xf32>, vector<8x256xf32> -> vector<8x256xf32>
    %c2 = arith.constant 2 : index
    %c0_52 = arith.constant 0 : index
    %c0_53 = arith.constant 0 : index
    %169 = vector.load %arg3[%c2, %c0_52, %c0_53] : memref<4x128x128xf32, #tpu.memory_space<vmem>>, vector<1x128x128xf32>
    %170 = vector.shape_cast %169 : vector<1x128x128xf32> to vector<128x128xf32>
    %cst_54 = arith.constant dense<0.000000e+00> : vector<8x128xf32>
    %171 = tpu.matmul %10, %170, %cst_54 {dimension_numbers = #tpu.dot_dimension_numbers<[1], [0], [0], [1], [0, 0, 1, 1], [], []>} : vector<8x128xf32>, vector<128x128xf32>, vector<8x128xf32> -> vector<8x128xf32>
    %172 = vector.extract_strided_slice %0 {offsets = [15, 0], sizes = [1, 128], strides = [1, 1]} : vector<35x128xf32> to vector<1x128xf32>
    %173 = vector.shape_cast %172 : vector<1x128xf32> to vector<128xf32>
    %174 = vector.shape_cast %173 : vector<128xf32> to vector<1x128xf32>
    %175 = vector.broadcast %174 : vector<1x128xf32> to vector<8x128xf32>
    %176 = arith.addf %171, %175 : vector<8x128xf32>
    %177 = arith.addf %10, %176 : vector<8x128xf32>
    %cst_55 = arith.constant dense<0.000000e+00> : vector<8x128xf32>
    %178 = tpu.matmul %177, %2, %cst_55 {dimension_numbers = #tpu.dot_dimension_numbers<[1], [0], [0], [1], [0, 0, 1, 1], [], []>} : vector<8x128xf32>, vector<128x128xf32>, vector<8x128xf32> -> vector<8x128xf32>
    %179 = arith.mulf %177, %177 : vector<8x128xf32>
    %cst_56 = arith.constant dense<0.000000e+00> : vector<8x128xf32>
    %180 = tpu.matmul %179, %2, %cst_56 {dimension_numbers = #tpu.dot_dimension_numbers<[1], [0], [0], [1], [0, 0, 1, 1], [], []>} : vector<8x128xf32>, vector<128x128xf32>, vector<8x128xf32> -> vector<8x128xf32>
    %181 = arith.mulf %178, %178 : vector<8x128xf32>
    %182 = arith.subf %180, %181 : vector<8x128xf32>
    %183 = arith.subf %177, %178 : vector<8x128xf32>
    %cst_57 = arith.constant 9.99999974E-6 : f32
    %184 = vector.broadcast %cst_57 : f32 to vector<8x128xf32>
    %185 = arith.addf %182, %184 : vector<8x128xf32>
    %186 = math.rsqrt %185 : vector<8x128xf32>
    %187 = arith.mulf %183, %186 : vector<8x128xf32>
    %188 = vector.extract_strided_slice %0 {offsets = [18, 0], sizes = [1, 128], strides = [1, 1]} : vector<35x128xf32> to vector<1x128xf32>
    %189 = vector.shape_cast %188 : vector<1x128xf32> to vector<128xf32>
    %190 = vector.shape_cast %189 : vector<128xf32> to vector<1x128xf32>
    %191 = vector.broadcast %190 : vector<1x128xf32> to vector<8x128xf32>
    %192 = arith.mulf %187, %191 : vector<8x128xf32>
    %193 = vector.extract_strided_slice %0 {offsets = [19, 0], sizes = [1, 128], strides = [1, 1]} : vector<35x128xf32> to vector<1x128xf32>
    %194 = vector.shape_cast %193 : vector<1x128xf32> to vector<128xf32>
    %195 = vector.shape_cast %194 : vector<128xf32> to vector<1x128xf32>
    %196 = vector.broadcast %195 : vector<1x128xf32> to vector<8x128xf32>
    %197 = arith.addf %192, %196 : vector<8x128xf32>
    %198 = vector.extract_strided_slice %168 {offsets = [0, 0], sizes = [8, 128], strides = [1, 1]} : vector<8x256xf32> to vector<8x128xf32>
    %199 = vector.extract_strided_slice %0 {offsets = [16, 0], sizes = [1, 128], strides = [1, 1]} : vector<35x128xf32> to vector<1x128xf32>
    %200 = vector.shape_cast %199 : vector<1x128xf32> to vector<128xf32>
    %201 = vector.shape_cast %200 : vector<128xf32> to vector<1x128xf32>
    %202 = vector.broadcast %201 : vector<1x128xf32> to vector<8x128xf32>
    %203 = arith.addf %198, %202 : vector<8x128xf32>
    %204 = arith.addf %197, %203 : vector<8x128xf32>
    %cst_58 = arith.constant dense<0.000000e+00> : vector<8x128xf32>
    %205 = tpu.matmul %204, %2, %cst_58 {dimension_numbers = #tpu.dot_dimension_numbers<[1], [0], [0], [1], [0, 0, 1, 1], [], []>} : vector<8x128xf32>, vector<128x128xf32>, vector<8x128xf32> -> vector<8x128xf32>
    %206 = arith.mulf %204, %204 : vector<8x128xf32>
    %cst_59 = arith.constant dense<0.000000e+00> : vector<8x128xf32>
    %207 = tpu.matmul %206, %2, %cst_59 {dimension_numbers = #tpu.dot_dimension_numbers<[1], [0], [0], [1], [0, 0, 1, 1], [], []>} : vector<8x128xf32>, vector<128x128xf32>, vector<8x128xf32> -> vector<8x128xf32>
    %208 = arith.mulf %205, %205 : vector<8x128xf32>
    %209 = arith.subf %207, %208 : vector<8x128xf32>
    %210 = arith.subf %204, %205 : vector<8x128xf32>
    %cst_60 = arith.constant 9.99999974E-6 : f32
    %211 = vector.broadcast %cst_60 : f32 to vector<8x128xf32>
    %212 = arith.addf %209, %211 : vector<8x128xf32>
    %213 = math.rsqrt %212 : vector<8x128xf32>
    %214 = arith.mulf %210, %213 : vector<8x128xf32>
    %215 = vector.extract_strided_slice %0 {offsets = [20, 0], sizes = [1, 128], strides = [1, 1]} : vector<35x128xf32> to vector<1x128xf32>
    %216 = vector.shape_cast %215 : vector<1x128xf32> to vector<128xf32>
    %217 = vector.shape_cast %216 : vector<128xf32> to vector<1x128xf32>
    %218 = vector.broadcast %217 : vector<1x128xf32> to vector<8x128xf32>
    %219 = arith.mulf %214, %218 : vector<8x128xf32>
    %220 = vector.extract_strided_slice %0 {offsets = [21, 0], sizes = [1, 128], strides = [1, 1]} : vector<35x128xf32> to vector<1x128xf32>
    %221 = vector.shape_cast %220 : vector<1x128xf32> to vector<128xf32>
    %222 = vector.shape_cast %221 : vector<128xf32> to vector<1x128xf32>
    %223 = vector.broadcast %222 : vector<1x128xf32> to vector<8x128xf32>
    %224 = arith.addf %219, %223 : vector<8x128xf32>
    %c2_61 = arith.constant 2 : index
    %c0_62 = arith.constant 0 : index
    %c0_63 = arith.constant 0 : index
    %225 = vector.load %arg5[%c2_61, %c0_62, %c0_63] : memref<4x128x256xf32, #tpu.memory_space<vmem>>, vector<1x128x256xf32>
    %226 = vector.shape_cast %225 : vector<1x128x256xf32> to vector<128x256xf32>
    %cst_64 = arith.constant dense<0.000000e+00> : vector<8x256xf32>
    %227 = tpu.matmul %224, %226, %cst_64 {dimension_numbers = #tpu.dot_dimension_numbers<[1], [0], [0], [1], [0, 0, 1, 1], [], []>} : vector<8x128xf32>, vector<128x256xf32>, vector<8x256xf32> -> vector<8x256xf32>
    %228 = vector.extract_strided_slice %1 {offsets = [2, 0], sizes = [1, 256], strides = [1, 1]} : vector<4x256xf32> to vector<1x256xf32>
    %229 = vector.shape_cast %228 : vector<1x256xf32> to vector<256xf32>
    %230 = vector.shape_cast %229 : vector<256xf32> to vector<1x256xf32>
    %231 = vector.broadcast %230 : vector<1x256xf32> to vector<8x256xf32>
    %232 = arith.addf %227, %231 : vector<8x256xf32>
    %cst_65 = arith.constant 0.000000e+00 : f32
    %233 = vector.broadcast %cst_65 : f32 to vector<8x256xf32>
    %234 = arith.maximumf %232, %233 : vector<8x256xf32>
    %c2_66 = arith.constant 2 : index
    %c0_67 = arith.constant 0 : index
    %c0_68 = arith.constant 0 : index
    %235 = vector.load %arg6[%c2_66, %c0_67, %c0_68] : memref<4x256x128xf32, #tpu.memory_space<vmem>>, vector<1x256x128xf32>
    %236 = vector.shape_cast %235 : vector<1x256x128xf32> to vector<256x128xf32>
    %cst_69 = arith.constant dense<0.000000e+00> : vector<8x128xf32>
    %237 = tpu.matmul %234, %236, %cst_69 {dimension_numbers = #tpu.dot_dimension_numbers<[1], [0], [0], [1], [0, 0, 1, 1], [], []>} : vector<8x256xf32>, vector<256x128xf32>, vector<8x128xf32> -> vector<8x128xf32>
    %238 = vector.extract_strided_slice %0 {offsets = [17, 0], sizes = [1, 128], strides = [1, 1]} : vector<35x128xf32> to vector<1x128xf32>
    %239 = vector.shape_cast %238 : vector<1x128xf32> to vector<128xf32>
    %240 = vector.shape_cast %239 : vector<128xf32> to vector<1x128xf32>
    %241 = vector.broadcast %240 : vector<1x128xf32> to vector<8x128xf32>
    %242 = arith.addf %237, %241 : vector<8x128xf32>
    %243 = arith.addf %224, %242 : vector<8x128xf32>
    %cst_70 = arith.constant dense<0.000000e+00> : vector<8x128xf32>
    %244 = tpu.matmul %243, %2, %cst_70 {dimension_numbers = #tpu.dot_dimension_numbers<[1], [0], [0], [1], [0, 0, 1, 1], [], []>} : vector<8x128xf32>, vector<128x128xf32>, vector<8x128xf32> -> vector<8x128xf32>
    %245 = arith.mulf %243, %243 : vector<8x128xf32>
    %cst_71 = arith.constant dense<0.000000e+00> : vector<8x128xf32>
    %246 = tpu.matmul %245, %2, %cst_71 {dimension_numbers = #tpu.dot_dimension_numbers<[1], [0], [0], [1], [0, 0, 1, 1], [], []>} : vector<8x128xf32>, vector<128x128xf32>, vector<8x128xf32> -> vector<8x128xf32>
    %247 = arith.mulf %244, %244 : vector<8x128xf32>
    %248 = arith.subf %246, %247 : vector<8x128xf32>
    %249 = arith.subf %243, %244 : vector<8x128xf32>
    %cst_72 = arith.constant 9.99999974E-6 : f32
    %250 = vector.broadcast %cst_72 : f32 to vector<8x128xf32>
    %251 = arith.addf %248, %250 : vector<8x128xf32>
    %252 = math.rsqrt %251 : vector<8x128xf32>
    %253 = arith.mulf %249, %252 : vector<8x128xf32>
    %254 = vector.extract_strided_slice %0 {offsets = [22, 0], sizes = [1, 128], strides = [1, 1]} : vector<35x128xf32> to vector<1x128xf32>
    %255 = vector.shape_cast %254 : vector<1x128xf32> to vector<128xf32>
    %256 = vector.shape_cast %255 : vector<128xf32> to vector<1x128xf32>
    %257 = vector.broadcast %256 : vector<1x128xf32> to vector<8x128xf32>
    %258 = arith.mulf %253, %257 : vector<8x128xf32>
    %259 = vector.extract_strided_slice %0 {offsets = [23, 0], sizes = [1, 128], strides = [1, 1]} : vector<35x128xf32> to vector<1x128xf32>
    %260 = vector.shape_cast %259 : vector<1x128xf32> to vector<128xf32>
    %261 = vector.shape_cast %260 : vector<128xf32> to vector<1x128xf32>
    %262 = vector.broadcast %261 : vector<1x128xf32> to vector<8x128xf32>
    %263 = arith.addf %258, %262 : vector<8x128xf32>
    %c3 = arith.constant 3 : index
    %c0_73 = arith.constant 0 : index
    %c0_74 = arith.constant 0 : index
    %264 = vector.load %arg3[%c3, %c0_73, %c0_74] : memref<4x128x128xf32, #tpu.memory_space<vmem>>, vector<1x128x128xf32>
    %265 = vector.shape_cast %264 : vector<1x128x128xf32> to vector<128x128xf32>
    %cst_75 = arith.constant dense<0.000000e+00> : vector<8x128xf32>
    %266 = tpu.matmul %263, %265, %cst_75 {dimension_numbers = #tpu.dot_dimension_numbers<[1], [0], [0], [1], [0, 0, 1, 1], [], []>} : vector<8x128xf32>, vector<128x128xf32>, vector<8x128xf32> -> vector<8x128xf32>
    %267 = vector.extract_strided_slice %0 {offsets = [24, 0], sizes = [1, 128], strides = [1, 1]} : vector<35x128xf32> to vector<1x128xf32>
    %268 = vector.shape_cast %267 : vector<1x128xf32> to vector<128xf32>
    %269 = vector.shape_cast %268 : vector<128xf32> to vector<1x128xf32>
    %270 = vector.broadcast %269 : vector<1x128xf32> to vector<8x128xf32>
    %271 = arith.addf %266, %270 : vector<8x128xf32>
    %272 = arith.addf %263, %271 : vector<8x128xf32>
    %cst_76 = arith.constant dense<0.000000e+00> : vector<8x128xf32>
    %273 = tpu.matmul %272, %2, %cst_76 {dimension_numbers = #tpu.dot_dimension_numbers<[1], [0], [0], [1], [0, 0, 1, 1], [], []>} : vector<8x128xf32>, vector<128x128xf32>, vector<8x128xf32> -> vector<8x128xf32>
    %274 = arith.mulf %272, %272 : vector<8x128xf32>
    %cst_77 = arith.constant dense<0.000000e+00> : vector<8x128xf32>
    %275 = tpu.matmul %274, %2, %cst_77 {dimension_numbers = #tpu.dot_dimension_numbers<[1], [0], [0], [1], [0, 0, 1, 1], [], []>} : vector<8x128xf32>, vector<128x128xf32>, vector<8x128xf32> -> vector<8x128xf32>
    %276 = arith.mulf %273, %273 : vector<8x128xf32>
    %277 = arith.subf %275, %276 : vector<8x128xf32>
    %278 = arith.subf %272, %273 : vector<8x128xf32>
    %cst_78 = arith.constant 9.99999974E-6 : f32
    %279 = vector.broadcast %cst_78 : f32 to vector<8x128xf32>
    %280 = arith.addf %277, %279 : vector<8x128xf32>
    %281 = math.rsqrt %280 : vector<8x128xf32>
    %282 = arith.mulf %278, %281 : vector<8x128xf32>
    %283 = vector.extract_strided_slice %0 {offsets = [27, 0], sizes = [1, 128], strides = [1, 1]} : vector<35x128xf32> to vector<1x128xf32>
    %284 = vector.shape_cast %283 : vector<1x128xf32> to vector<128xf32>
    %285 = vector.shape_cast %284 : vector<128xf32> to vector<1x128xf32>
    %286 = vector.broadcast %285 : vector<1x128xf32> to vector<8x128xf32>
    %287 = arith.mulf %282, %286 : vector<8x128xf32>
    %288 = vector.extract_strided_slice %0 {offsets = [28, 0], sizes = [1, 128], strides = [1, 1]} : vector<35x128xf32> to vector<1x128xf32>
    %289 = vector.shape_cast %288 : vector<1x128xf32> to vector<128xf32>
    %290 = vector.shape_cast %289 : vector<128xf32> to vector<1x128xf32>
    %291 = vector.broadcast %290 : vector<1x128xf32> to vector<8x128xf32>
    %292 = arith.addf %287, %291 : vector<8x128xf32>
    %293 = vector.extract_strided_slice %168 {offsets = [0, 128], sizes = [8, 128], strides = [1, 1]} : vector<8x256xf32> to vector<8x128xf32>
    %294 = vector.extract_strided_slice %0 {offsets = [25, 0], sizes = [1, 128], strides = [1, 1]} : vector<35x128xf32> to vector<1x128xf32>
    %295 = vector.shape_cast %294 : vector<1x128xf32> to vector<128xf32>
    %296 = vector.shape_cast %295 : vector<128xf32> to vector<1x128xf32>
    %297 = vector.broadcast %296 : vector<1x128xf32> to vector<8x128xf32>
    %298 = arith.addf %293, %297 : vector<8x128xf32>
    %299 = arith.addf %292, %298 : vector<8x128xf32>
    %cst_79 = arith.constant dense<0.000000e+00> : vector<8x128xf32>
    %300 = tpu.matmul %299, %2, %cst_79 {dimension_numbers = #tpu.dot_dimension_numbers<[1], [0], [0], [1], [0, 0, 1, 1], [], []>} : vector<8x128xf32>, vector<128x128xf32>, vector<8x128xf32> -> vector<8x128xf32>
    %301 = arith.mulf %299, %299 : vector<8x128xf32>
    %cst_80 = arith.constant dense<0.000000e+00> : vector<8x128xf32>
    %302 = tpu.matmul %301, %2, %cst_80 {dimension_numbers = #tpu.dot_dimension_numbers<[1], [0], [0], [1], [0, 0, 1, 1], [], []>} : vector<8x128xf32>, vector<128x128xf32>, vector<8x128xf32> -> vector<8x128xf32>
    %303 = arith.mulf %300, %300 : vector<8x128xf32>
    %304 = arith.subf %302, %303 : vector<8x128xf32>
    %305 = arith.subf %299, %300 : vector<8x128xf32>
    %cst_81 = arith.constant 9.99999974E-6 : f32
    %306 = vector.broadcast %cst_81 : f32 to vector<8x128xf32>
    %307 = arith.addf %304, %306 : vector<8x128xf32>
    %308 = math.rsqrt %307 : vector<8x128xf32>
    %309 = arith.mulf %305, %308 : vector<8x128xf32>
    %310 = vector.extract_strided_slice %0 {offsets = [29, 0], sizes = [1, 128], strides = [1, 1]} : vector<35x128xf32> to vector<1x128xf32>
    %311 = vector.shape_cast %310 : vector<1x128xf32> to vector<128xf32>
    %312 = vector.shape_cast %311 : vector<128xf32> to vector<1x128xf32>
    %313 = vector.broadcast %312 : vector<1x128xf32> to vector<8x128xf32>
    %314 = arith.mulf %309, %313 : vector<8x128xf32>
    %315 = vector.extract_strided_slice %0 {offsets = [30, 0], sizes = [1, 128], strides = [1, 1]} : vector<35x128xf32> to vector<1x128xf32>
    %316 = vector.shape_cast %315 : vector<1x128xf32> to vector<128xf32>
    %317 = vector.shape_cast %316 : vector<128xf32> to vector<1x128xf32>
    %318 = vector.broadcast %317 : vector<1x128xf32> to vector<8x128xf32>
    %319 = arith.addf %314, %318 : vector<8x128xf32>
    %c3_82 = arith.constant 3 : index
    %c0_83 = arith.constant 0 : index
    %c0_84 = arith.constant 0 : index
    %320 = vector.load %arg5[%c3_82, %c0_83, %c0_84] : memref<4x128x256xf32, #tpu.memory_space<vmem>>, vector<1x128x256xf32>
    %321 = vector.shape_cast %320 : vector<1x128x256xf32> to vector<128x256xf32>
    %cst_85 = arith.constant dense<0.000000e+00> : vector<8x256xf32>
    %322 = tpu.matmul %319, %321, %cst_85 {dimension_numbers = #tpu.dot_dimension_numbers<[1], [0], [0], [1], [0, 0, 1, 1], [], []>} : vector<8x128xf32>, vector<128x256xf32>, vector<8x256xf32> -> vector<8x256xf32>
    %323 = vector.extract_strided_slice %1 {offsets = [3, 0], sizes = [1, 256], strides = [1, 1]} : vector<4x256xf32> to vector<1x256xf32>
    %324 = vector.shape_cast %323 : vector<1x256xf32> to vector<256xf32>
    %325 = vector.shape_cast %324 : vector<256xf32> to vector<1x256xf32>
    %326 = vector.broadcast %325 : vector<1x256xf32> to vector<8x256xf32>
    %327 = arith.addf %322, %326 : vector<8x256xf32>
    %cst_86 = arith.constant 0.000000e+00 : f32
    %328 = vector.broadcast %cst_86 : f32 to vector<8x256xf32>
    %329 = arith.maximumf %327, %328 : vector<8x256xf32>
    %c3_87 = arith.constant 3 : index
    %c0_88 = arith.constant 0 : index
    %c0_89 = arith.constant 0 : index
    %330 = vector.load %arg6[%c3_87, %c0_88, %c0_89] : memref<4x256x128xf32, #tpu.memory_space<vmem>>, vector<1x256x128xf32>
    %331 = vector.shape_cast %330 : vector<1x256x128xf32> to vector<256x128xf32>
    %cst_90 = arith.constant dense<0.000000e+00> : vector<8x128xf32>
    %332 = tpu.matmul %329, %331, %cst_90 {dimension_numbers = #tpu.dot_dimension_numbers<[1], [0], [0], [1], [0, 0, 1, 1], [], []>} : vector<8x256xf32>, vector<256x128xf32>, vector<8x128xf32> -> vector<8x128xf32>
    %333 = vector.extract_strided_slice %0 {offsets = [26, 0], sizes = [1, 128], strides = [1, 1]} : vector<35x128xf32> to vector<1x128xf32>
    %334 = vector.shape_cast %333 : vector<1x128xf32> to vector<128xf32>
    %335 = vector.shape_cast %334 : vector<128xf32> to vector<1x128xf32>
    %336 = vector.broadcast %335 : vector<1x128xf32> to vector<8x128xf32>
    %337 = arith.addf %332, %336 : vector<8x128xf32>
    %338 = arith.addf %319, %337 : vector<8x128xf32>
    %cst_91 = arith.constant dense<0.000000e+00> : vector<8x128xf32>
    %339 = tpu.matmul %338, %2, %cst_91 {dimension_numbers = #tpu.dot_dimension_numbers<[1], [0], [0], [1], [0, 0, 1, 1], [], []>} : vector<8x128xf32>, vector<128x128xf32>, vector<8x128xf32> -> vector<8x128xf32>
    %340 = arith.mulf %338, %338 : vector<8x128xf32>
    %cst_92 = arith.constant dense<0.000000e+00> : vector<8x128xf32>
    %341 = tpu.matmul %340, %2, %cst_92 {dimension_numbers = #tpu.dot_dimension_numbers<[1], [0], [0], [1], [0, 0, 1, 1], [], []>} : vector<8x128xf32>, vector<128x128xf32>, vector<8x128xf32> -> vector<8x128xf32>
    %342 = arith.mulf %339, %339 : vector<8x128xf32>
    %343 = arith.subf %341, %342 : vector<8x128xf32>
    %344 = arith.subf %338, %339 : vector<8x128xf32>
    %cst_93 = arith.constant 9.99999974E-6 : f32
    %345 = vector.broadcast %cst_93 : f32 to vector<8x128xf32>
    %346 = arith.addf %343, %345 : vector<8x128xf32>
    %347 = math.rsqrt %346 : vector<8x128xf32>
    %348 = arith.mulf %344, %347 : vector<8x128xf32>
    %349 = vector.extract_strided_slice %0 {offsets = [31, 0], sizes = [1, 128], strides = [1, 1]} : vector<35x128xf32> to vector<1x128xf32>
    %350 = vector.shape_cast %349 : vector<1x128xf32> to vector<128xf32>
    %351 = vector.shape_cast %350 : vector<128xf32> to vector<1x128xf32>
    %352 = vector.broadcast %351 : vector<1x128xf32> to vector<8x128xf32>
    %353 = arith.mulf %348, %352 : vector<8x128xf32>
    %354 = vector.extract_strided_slice %0 {offsets = [32, 0], sizes = [1, 128], strides = [1, 1]} : vector<35x128xf32> to vector<1x128xf32>
    %355 = vector.shape_cast %354 : vector<1x128xf32> to vector<128xf32>
    %356 = vector.shape_cast %355 : vector<128xf32> to vector<1x128xf32>
    %357 = vector.broadcast %356 : vector<1x128xf32> to vector<8x128xf32>
    %358 = arith.addf %353, %357 : vector<8x128xf32>
    %cst_94 = arith.constant dense<0.000000e+00> : vector<8x128xf32>
    %359 = tpu.matmul %358, %2, %cst_94 {dimension_numbers = #tpu.dot_dimension_numbers<[1], [0], [0], [1], [0, 0, 1, 1], [], []>} : vector<8x128xf32>, vector<128x128xf32>, vector<8x128xf32> -> vector<8x128xf32>
    %360 = arith.mulf %358, %358 : vector<8x128xf32>
    %cst_95 = arith.constant dense<0.000000e+00> : vector<8x128xf32>
    %361 = tpu.matmul %360, %2, %cst_95 {dimension_numbers = #tpu.dot_dimension_numbers<[1], [0], [0], [1], [0, 0, 1, 1], [], []>} : vector<8x128xf32>, vector<128x128xf32>, vector<8x128xf32> -> vector<8x128xf32>
    %362 = arith.mulf %359, %359 : vector<8x128xf32>
    %363 = arith.subf %361, %362 : vector<8x128xf32>
    %364 = arith.subf %358, %359 : vector<8x128xf32>
    %cst_96 = arith.constant 9.99999974E-6 : f32
    %365 = vector.broadcast %cst_96 : f32 to vector<8x128xf32>
    %366 = arith.addf %363, %365 : vector<8x128xf32>
    %367 = math.rsqrt %366 : vector<8x128xf32>
    %368 = arith.mulf %364, %367 : vector<8x128xf32>
    %369 = vector.extract_strided_slice %0 {offsets = [33, 0], sizes = [1, 128], strides = [1, 1]} : vector<35x128xf32> to vector<1x128xf32>
    %370 = vector.shape_cast %369 : vector<1x128xf32> to vector<128xf32>
    %371 = vector.shape_cast %370 : vector<128xf32> to vector<1x128xf32>
    %372 = vector.broadcast %371 : vector<1x128xf32> to vector<8x128xf32>
    %373 = arith.mulf %368, %372 : vector<8x128xf32>
    %374 = vector.extract_strided_slice %0 {offsets = [34, 0], sizes = [1, 128], strides = [1, 1]} : vector<35x128xf32> to vector<1x128xf32>
    %375 = vector.shape_cast %374 : vector<1x128xf32> to vector<128xf32>
    %376 = vector.shape_cast %375 : vector<128xf32> to vector<1x128xf32>
    %377 = vector.broadcast %376 : vector<1x128xf32> to vector<8x128xf32>
    %378 = arith.addf %373, %377 : vector<8x128xf32>
    %c0_97 = arith.constant 0 : index
    %c0_98 = arith.constant 0 : index
    %379 = vector.load %arg9[%c0_97, %c0_98] : memref<4x128xf32, #tpu.memory_space<vmem>>, vector<4x128xf32>
    %cst_99 = arith.constant dense<0.000000e+00> : vector<4x8xf32>
    %380 = tpu.matmul %379, %378, %cst_99 {dimension_numbers = #tpu.dot_dimension_numbers<[1], [1], [0], [0], [0, 0, 1, 0], [], []>} : vector<4x128xf32>, vector<8x128xf32>, vector<4x8xf32> -> vector<4x8xf32>
    %c0_100 = arith.constant 0 : index
    %381 = memref.load %arg11[%c0_100] : memref<1xf32, #tpu.memory_space<smem>>
    %382 = vector.broadcast %381 : f32 to vector<4x8xf32>
    %383 = arith.addf %380, %382 : vector<4x8xf32>
    %c0_101 = arith.constant 0 : index
    %c0_102 = arith.constant 0 : index
    %384 = vector.load %arg12[%c0_101, %c0_102] : memref<4x8xf32, #tpu.memory_space<vmem>>, vector<4x8xf32>
    tpu.vector_store %arg12[%c0_101, %c0_102], %383 {strides = array<i32>} : memref<4x8xf32, #tpu.memory_space<vmem>>, vector<4x8xf32>,
    return
  }
  func.func @transform_0(%arg0: i32) -> (i32, i32) {
    %c0_i32 = arith.constant 0 : i32
    %c0_i32_0 = arith.constant 0 : i32
    return %arg0, %c0_i32 : i32, i32
  }
  func.func @transform_1(%arg0: i32) -> (i32, i32) {
    %c0_i32 = arith.constant 0 : i32
    %c0_i32_0 = arith.constant 0 : i32
    %c0_i32_1 = arith.constant 0 : i32
    return %c0_i32, %c0_i32_0 : i32, i32
  }
  func.func @transform_2(%arg0: i32) -> (i32, i32, i32) {
    %c0_i32 = arith.constant 0 : i32
    %c0_i32_0 = arith.constant 0 : i32
    %c0_i32_1 = arith.constant 0 : i32
    %c0_i32_2 = arith.constant 0 : i32
    return %c0_i32, %c0_i32_0, %c0_i32_1 : i32, i32, i32
  }
  func.func @transform_3(%arg0: i32) -> (i32, i32) {
    %c0_i32 = arith.constant 0 : i32
    %c0_i32_0 = arith.constant 0 : i32
    %c0_i32_1 = arith.constant 0 : i32
    return %c0_i32, %c0_i32_0 : i32, i32
  }
  func.func @transform_4(%arg0: i32) -> (i32, i32, i32) {
    %c0_i32 = arith.constant 0 : i32
    %c0_i32_0 = arith.constant 0 : i32
    %c0_i32_1 = arith.constant 0 : i32
    %c0_i32_2 = arith.constant 0 : i32
    return %c0_i32, %c0_i32_0, %c0_i32_1 : i32, i32, i32
  }
  func.func @transform_5(%arg0: i32) -> (i32, i32, i32) {
    %c0_i32 = arith.constant 0 : i32
    %c0_i32_0 = arith.constant 0 : i32
    %c0_i32_1 = arith.constant 0 : i32
    %c0_i32_2 = arith.constant 0 : i32
    return %c0_i32, %c0_i32_0, %c0_i32_1 : i32, i32, i32
  }
  func.func @transform_6(%arg0: i32) -> (i32, i32) {
    %c0_i32 = arith.constant 0 : i32
    %c0_i32_0 = arith.constant 0 : i32
    %c0_i32_1 = arith.constant 0 : i32
    return %c0_i32, %c0_i32_0 : i32, i32
  }
  func.func @transform_7(%arg0: i32) -> (i32, i32) {
    %c0_i32 = arith.constant 0 : i32
    %c0_i32_0 = arith.constant 0 : i32
    %c0_i32_1 = arith.constant 0 : i32
    return %c0_i32, %c0_i32_0 : i32, i32
  }
  func.func @transform_8(%arg0: i32) -> (i32, i32) {
    %c0_i32 = arith.constant 0 : i32
    %c0_i32_0 = arith.constant 0 : i32
    %c0_i32_1 = arith.constant 0 : i32
    return %c0_i32, %c0_i32_0 : i32, i32
  }
  func.func @transform_9(%arg0: i32) -> (i32, i32) {
    %c0_i32 = arith.constant 0 : i32
    %c0_i32_0 = arith.constant 0 : i32
    %c0_i32_1 = arith.constant 0 : i32
    return %c0_i32, %c0_i32_0 : i32, i32
  }
  func.func @transform_10(%arg0: i32) -> i32 {
    %c0_i32 = arith.constant 0 : i32
    %c0_i32_0 = arith.constant 0 : i32
    return %c0_i32 : i32
  }
  func.func @transform_11(%arg0: i32) -> (i32, i32) {
    %c0_i32 = arith.constant 0 : i32
    %c0_i32_0 = arith.constant 0 : i32
    return %c0_i32, %arg0 : i32, i32
  }
}

</mosaic_0001>

<llo_original>
// kernel: tpu_custom_call.1
$region0: #{tpu_custom_call.1}
  #allocation0 [shape = 'u32[]', space=smem, size = 0x4, offset = 0x4, fixed_abs, tag = 'smem constant byte address 0x4 - core index']
  #allocation1 [shape = 'u32[144,128]{1,0:T(1,128)}', space=vmem, size = 0x12000, scoped, tag = 'internal scratch']
  #allocation2 [shape = 'f32[1]{0:T(128)S(6)}', space=smem, size = 0x200, scoped, tag = 'scoped memory for tpu_custom_call.1']
  %s0 = inlined_call_operand.hbm [shape: f32[8,32], index: 0, kind: input, shape index: {}]
  %s1 = inlined_call_operand.hbm [shape: f32[32,128], index: 1, kind: input, shape index: {}]
  %s2 = inlined_call_operand.hbm [shape: f32[4,128,128], index: 2, kind: input, shape index: {}]
  %s3 = inlined_call_operand.hbm [shape: f32[128,256], index: 3, kind: input, shape index: {}]
  %s4 = inlined_call_operand.hbm [shape: f32[4,128,256], index: 4, kind: input, shape index: {}]
  %s5 = inlined_call_operand.hbm [shape: f32[4,256,128], index: 5, kind: input, shape index: {}]
  %s6 = inlined_call_operand.hbm [shape: f32[35,128], index: 6, kind: input, shape index: {}]
  %s7 = inlined_call_operand.vmem [shape: f32[4,256], index: 7, kind: input, shape index: {}]
  %s8 = inlined_call_operand.vmem [shape: f32[4,128], index: 8, kind: input, shape index: {}]
  %s9 = inlined_call_operand.hbm [shape: f32[128,128], index: 9, kind: input, shape index: {}]
  %s10 = inlined_call_operand.<no memory space> [shape: f32[1], index: 10, kind: input, shape index: {}]
  %s11 = inlined_call_operand.hbm [shape: f32[4,8], index: 11, kind: output, shape index: {}]
  %s12 = sld [smem:[#allocation0]]
  $region86: #{tpu_custom_call.1} parent=0
    _
  %s14 = ssub.s32 1, %s12
  %s15 = scalar_select 0, %s14, %s12
  %16 = sst [smem:[#allocation2]] %s10
  $region1: #{tpu_custom_call.1} parent=0
    #allocation3 [shape = 'u8[4096]{0}', space=vmem, size = 0x1000, scoped, tag = 'input window, operand 0, single buffered']
    #allocation4 [shape = 's32[1]{0}', space=sflag, size = 0x4, scoped, tag = 'scoped memory for tpu_custom_call.1']
    #allocation5 [shape = 's32[1]{0}', space=sflag, size = 0x4, scoped, tag = 'scoped memory for tpu_custom_call.1']
    #allocation6 [shape = 'u8[16384]{0}', space=vmem, size = 0x4000, scoped, tag = 'input window, operand 1, single buffered']
    #allocation7 [shape = 's32[1]{0}', space=sflag, size = 0x4, scoped, tag = 'scoped memory for tpu_custom_call.1']
    #allocation8 [shape = 'u8[262144]{0}', space=vmem, size = 0x40000, scoped, tag = 'input window, operand 2, single buffered']
    #allocation9 [shape = 'u8[131072]{0}', space=vmem, size = 0x20000, scoped, tag = 'input window, operand 3, single buffered']
    #allocation10 [shape = 's32[1]{0}', space=sflag, size = 0x4, scoped, tag = 'scoped memory for tpu_custom_call.1']
    #allocation11 [shape = 'u8[524288]{0}', space=vmem, size = 0x80000, scoped, tag = 'input window, operand 4, single buffered']
    #allocation12 [shape = 'u8[524288]{0}', space=vmem, size = 0x80000, scoped, tag = 'input window, operand 5, single buffered']
    #allocation13 [shape = 's32[1]{0}', space=sflag, size = 0x4, scoped, tag = 'scoped memory for tpu_custom_call.1']
    #allocation14 [shape = 'u8[20480]{0}', space=vmem, size = 0x5000, scoped, tag = 'input window, operand 6, single buffered']
    #allocation15 [shape = 'u8[65536]{0}', space=vmem, size = 0x10000, scoped, tag = 'input window, operand 9, single buffered']
    #allocation16 [shape = 's32[1]{0}', space=sflag, size = 0x4, scoped, tag = 'scoped memory for tpu_custom_call.1']
    #allocation17 [shape = 'u8[2048]{0}', space=vmem, size = 0x800, scoped, tag = 'output window, operand 0, single buffered']
    %17 = vsyncpa [#allocation4], 0
    %18 = vsyncpa [#allocation7], 0
    %19 = vsyncpa [#allocation10], 0
    %20 = vsyncpa [#allocation13], 0
    %21 = vsyncpa [#allocation16], 0
    %22 = vsyncpa [#allocation5], 0
    // Predicated region
    $region2: #{tpu_custom_call.1} parent=1 // pred_check
      _
    $region3: #{tpu_custom_call.1} parent=1 // pred_check_branch
      %24 = sbr.rel (0) target = $region5
    $region4: #{tpu_custom_call.1} parent=1 // pred_region
      %s26 = ssub.s32 128, 128
      %27 = vsyncadd [#allocation4], %s26
      %s29 = sshll.u32 [#allocation3], 4
      %s30 = int_to_ptr.vmem [resolvable:$true] %s29
      %32 = dma.hbm_to_vmem [thread:$0]  %s0, 128, %s30, [#allocation4]
    $region5: #{tpu_custom_call.1} parent=1 // pred_fallthru
      _
    // Predicated region
    $region6: #{tpu_custom_call.1} parent=1 // pred_check
      _
    $region7: #{tpu_custom_call.1} parent=1 // pred_check_branch
      %34 = sbr.rel (0) target = $region9
    $region8: #{tpu_custom_call.1} parent=1 // pred_region
      %s36 = ssub.s32 512, 512
      %37 = vsyncadd [#allocation7], %s36
      %s38 = sshll.u32 [#allocation6], 4
      %s39 = int_to_ptr.vmem [resolvable:$true] %s38
      %44 = dma.hbm_to_vmem [thread:$0]  %s1, 512, %s39, [#allocation7], 128, 128, 8
    $region9: #{tpu_custom_call.1} parent=1 // pred_fallthru
      _
    // Predicated region
    $region10: #{tpu_custom_call.1} parent=1 // pred_check
      _
    $region11: #{tpu_custom_call.1} parent=1 // pred_check_branch
      %46 = sbr.rel (0) target = $region13
    $region12: #{tpu_custom_call.1} parent=1 // pred_region
      %s48 = ssub.s32 8192, 8192
      %49 = vsyncadd [#allocation7], %s48
      %s50 = sshll.u32 [#allocation8], 4
      %s51 = int_to_ptr.vmem [resolvable:$true] %s50
      %56 = dma.hbm_to_vmem [thread:$0]  %s2, 8192, %s51, [#allocation7], 128, 128, 8
    $region13: #{tpu_custom_call.1} parent=1 // pred_fallthru
      _
    // Predicated region
    $region14: #{tpu_custom_call.1} parent=1 // pred_check
      _
    $region15: #{tpu_custom_call.1} parent=1 // pred_check_branch
      %58 = sbr.rel (0) target = $region17
    $region16: #{tpu_custom_call.1} parent=1 // pred_region
      %s60 = ssub.s32 4096, 4096
      %61 = vsyncadd [#allocation10], %s60
      %s62 = sshll.u32 [#allocation9], 4
      %s63 = int_to_ptr.vmem [resolvable:$true] %s62
      %68 = dma.hbm_to_vmem [thread:$0]  %s3, 4096, %s63, [#allocation10], 256, 256, 16
    $region17: #{tpu_custom_call.1} parent=1 // pred_fallthru
      _
    // Predicated region
    $region18: #{tpu_custom_call.1} parent=1 // pred_check
      _
    $region19: #{tpu_custom_call.1} parent=1 // pred_check_branch
      %70 = sbr.rel (0) target = $region21
    $region20: #{tpu_custom_call.1} parent=1 // pred_region
      %s72 = ssub.s32 16384, 16384
      %73 = vsyncadd [#allocation10], %s72
      %s74 = sshll.u32 [#allocation11], 4
      %s75 = int_to_ptr.vmem [resolvable:$true] %s74
      %80 = dma.hbm_to_vmem [thread:$0]  %s4, 16384, %s75, [#allocation10], 256, 256, 16
    $region21: #{tpu_custom_call.1} parent=1 // pred_fallthru
      _
    // Predicated region
    $region22: #{tpu_custom_call.1} parent=1 // pred_check
      _
    $region23: #{tpu_custom_call.1} parent=1 // pred_check_branch
      %82 = sbr.rel (0) target = $region25
    $region24: #{tpu_custom_call.1} parent=1 // pred_region
      %s84 = ssub.s32 16384, 16384
      %85 = vsyncadd [#allocation13], %s84
      %s86 = sshll.u32 [#allocation12], 4
      %s87 = int_to_ptr.vmem [resolvable:$true] %s86
      %92 = dma.hbm_to_vmem [thread:$0]  %s5, 16384, %s87, [#allocation13], 128, 128, 8
    $region25: #{tpu_custom_call.1} parent=1 // pred_fallthru
      _
    // Predicated region
    $region26: #{tpu_custom_call.1} parent=1 // pred_check
      _
    $region27: #{tpu_custom_call.1} parent=1 // pred_check_branch
      %94 = sbr.rel (0) target = $region29
    $region28: #{tpu_custom_call.1} parent=1 // pred_region
      %s96 = ssub.s32 640, 640
      %97 = vsyncadd [#allocation13], %s96
      %s98 = sshll.u32 [#allocation14], 4
      %s99 = int_to_ptr.vmem [resolvable:$true] %s98
      %104 = dma.hbm_to_vmem [thread:$0]  %s6, 640, %s99, [#allocation13], 128, 128, 8
    $region29: #{tpu_custom_call.1} parent=1 // pred_fallthru
      _
    // Predicated region
    $region30: #{tpu_custom_call.1} parent=1 // pred_check
      _
    $region31: #{tpu_custom_call.1} parent=1 // pred_check_branch
      %106 = sbr.rel (0) target = $region33
    $region32: #{tpu_custom_call.1} parent=1 // pred_region
      _
    $region33: #{tpu_custom_call.1} parent=1 // pred_fallthru
      _
    // Predicated region
    $region34: #{tpu_custom_call.1} parent=1 // pred_check
      _
    $region35: #{tpu_custom_call.1} parent=1 // pred_check_branch
      %108 = sbr.rel (0) target = $region37
    $region36: #{tpu_custom_call.1} parent=1 // pred_region
      _
    $region37: #{tpu_custom_call.1} parent=1 // pred_fallthru
      _
    // Predicated region
    $region38: #{tpu_custom_call.1} parent=1 // pred_check
      _
    $region39: #{tpu_custom_call.1} parent=1 // pred_check_branch
      %110 = sbr.rel (0) target = $region41
    $region40: #{tpu_custom_call.1} parent=1 // pred_region
      %s112 = ssub.s32 2048, 2048
      %113 = vsyncadd [#allocation16], %s112
      %s114 = sshll.u32 [#allocation15], 4
      %s115 = int_to_ptr.vmem [resolvable:$true] %s114
      %120 = dma.hbm_to_vmem [thread:$0]  %s9, 2048, %s115, [#allocation16], 128, 128, 8
    $region41: #{tpu_custom_call.1} parent=1 // pred_fallthru
      _
    // Predicated region
    $region42: #{tpu_custom_call.1} parent=1 // pred_check
      _
    $region43: #{tpu_custom_call.1} parent=1 // pred_check_branch
      %122 = sbr.rel (0) target = $region45
    $region44: #{tpu_custom_call.1} parent=1 // pred_region
      _
    $region45: #{tpu_custom_call.1} parent=1 // pred_fallthru
      _
    // Predicated region
    $region46: #{tpu_custom_call.1} parent=1 // pred_check
      _
    $region47: #{tpu_custom_call.1} parent=1 // pred_check_branch
      %124 = sbr.rel (0) target = $region49
    $region48: #{tpu_custom_call.1} parent=1 // pred_region
      %125 = dma.done [#allocation4], 128
    $region49: #{tpu_custom_call.1} parent=1 // pred_fallthru
      _
    // Predicated region
    $region50: #{tpu_custom_call.1} parent=1 // pred_check
      _
    $region51: #{tpu_custom_call.1} parent=1 // pred_check_branch
      %127 = sbr.rel (0) target = $region53
    $region52: #{tpu_custom_call.1} parent=1 // pred_region
      %128 = dma.done [#allocation7], 512
    $region53: #{tpu_custom_call.1} parent=1 // pred_fallthru
      _
    // Predicated region
    $region54: #{tpu_custom_call.1} parent=1 // pred_check
      _
    $region55: #{tpu_custom_call.1} parent=1 // pred_check_branch
      %130 = sbr.rel (0) target = $region57
    $region56: #{tpu_custom_call.1} parent=1 // pred_region
      %131 = dma.done [#allocation7], 8192
    $region57: #{tpu_custom_call.1} parent=1 // pred_fallthru
      _
    // Predicated region
    $region58: #{tpu_custom_call.1} parent=1 // pred_check
      _
    $region59: #{tpu_custom_call.1} parent=1 // pred_check_branch
      %133 = sbr.rel (0) target = $region61
    $region60: #{tpu_custom_call.1} parent=1 // pred_region
      %134 = dma.done [#allocation10], 4096
    $region61: #{tpu_custom_call.1} parent=1 // pred_fallthru
      _
    // Predicated region
    $region62: #{tpu_custom_call.1} parent=1 // pred_check
      _
    $region63: #{tpu_custom_call.1} parent=1 // pred_check_branch
      %136 = sbr.rel (0) target = $region65
    $region64: #{tpu_custom_call.1} parent=1 // pred_region
      %137 = dma.done [#allocation10], 16384
    $region65: #{tpu_custom_call.1} parent=1 // pred_fallthru
      _
    // Predicated region
    $region66: #{tpu_custom_call.1} parent=1 // pred_check
      _
    $region67: #{tpu_custom_call.1} parent=1 // pred_check_branch
      %139 = sbr.rel (0) target = $region69
    $region68: #{tpu_custom_call.1} parent=1 // pred_region
      %140 = dma.done [#allocation13], 16384
    $region69: #{tpu_custom_call.1} parent=1 // pred_fallthru
      _
    // Predicated region
    $region70: #{tpu_custom_call.1} parent=1 // pred_check
      _
    $region71: #{tpu_custom_call.1} parent=1 // pred_check_branch
      %142 = sbr.rel (0) target = $region73
    $region72: #{tpu_custom_call.1} parent=1 // pred_region
      %143 = dma.done [#allocation13], 640
    $region73: #{tpu_custom_call.1} parent=1 // pred_fallthru
      _
    // Predicated region
    $region74: #{tpu_custom_call.1} parent=1 // pred_check
      _
    $region75: #{tpu_custom_call.1} parent=1 // pred_check_branch
      %145 = sbr.rel (0) target = $region77
    $region76: #{tpu_custom_call.1} parent=1 // pred_region
      %146 = dma.done [#allocation16], 2048
    $region77: #{tpu_custom_call.1} parent=1 // pred_fallthru
      _
    %v147 = vld [vmem:[#allocation14] sm:$0xff]
    %v148 = vld [vmem:[#allocation14 + $0x8] sm:$0xff]
    %v149 = vld [vmem:[#allocation14 + $0x10] sm:$0xff]
    %v150 = vld [vmem:[#allocation14 + $0x18] sm:$0xff]
    %v151 = vld [vmem:[#allocation14 + $0x20] sm:$0x7]
    %v152 = vld [vmem:[%s7] sm:$0xff]
    %v153 = vld [vmem:[#allocation15] sm:$0xff]
    %v154 = vld [vmem:[#allocation15 + $0x8] sm:$0xff]
    %v155 = vld [vmem:[#allocation15 + $0x10] sm:$0xff]
    %v156 = vld [vmem:[#allocation15 + $0x18] sm:$0xff]
    %v157 = vld [vmem:[#allocation15 + $0x20] sm:$0xff]
    %v158 = vld [vmem:[#allocation15 + $0x28] sm:$0xff]
    %v159 = vld [vmem:[#allocation15 + $0x30] sm:$0xff]
    %v160 = vld [vmem:[#allocation15 + $0x38] sm:$0xff]
    %v161 = vld [vmem:[#allocation15 + $0x40] sm:$0xff]
    %v162 = vld [vmem:[#allocation15 + $0x48] sm:$0xff]
    %v163 = vld [vmem:[#allocation15 + $0x50] sm:$0xff]
    %v164 = vld [vmem:[#allocation15 + $0x58] sm:$0xff]
    %v165 = vld [vmem:[#allocation15 + $0x60] sm:$0xff]
    %v166 = vld [vmem:[#allocation15 + $0x68] sm:$0xff]
    %v167 = vld [vmem:[#allocation15 + $0x70] sm:$0xff]
    %v168 = vld [vmem:[#allocation15 + $0x78] sm:$0xff]
    %v169 = vld [vmem:[#allocation3] sm:$0xff]
    %v170 = vld [vmem:[#allocation6] sm:$0xff]
    %v171 = vld [vmem:[#allocation6 + $0x8] sm:$0xff]
    %v172 = vld [vmem:[#allocation6 + $0x10] sm:$0xff]
    %v173 = vld [vmem:[#allocation6 + $0x18] sm:$0xff]
    %v174 = vlaneseq
    %v175 = vshrl.u32 %v174, 7
    %v176 = vsub.s32 0, %v175
    %v177 = vrot.slane %v147, %v176
    %vm178 = vcmask 261120
    %v180 = vsel %vm178, %v169, 0
    %182 = vmatprep.subr.mxu0 0.0
    %183 = vmatpush1.msra.mxu0 %v170
    %184 = vmatprep.subr.mxu0 0.0
    %185 = vmatpush1.msra.mxu0 %v171
    %186 = vmatprep.subr.mxu0 0.0
    %187 = vmatpush1.msra.mxu0 %v172
    %188 = vmatprep.subr.mxu0 0.0
    %189 = vmatpush1.msra.mxu0 %v173
    %190 = vmatprep.subr.mxu0 0.0
    %191 = vmatpush1.msra.mxu0 0.0
    %192 = vmatprep.subr.mxu0 0.0
    %193 = vmatpush1.msra.mxu0 0.0
    %194 = vmatprep.subr.mxu0 0.0
    %195 = vmatpush1.msra.mxu0 0.0
    %196 = vmatprep.subr.mxu0 0.0
    %197 = vmatpush1.msra.mxu0 0.0
    %198 = vmatprep.subr.mxu0 0.0
    %199 = vmatpush1.msra.mxu0 0.0
    %200 = vmatprep.subr.mxu0 0.0
    %201 = vmatpush1.msra.mxu0 0.0
    %202 = vmatprep.subr.mxu0 0.0
    %203 = vmatpush1.msra.mxu0 0.0
    %204 = vmatprep.subr.mxu0 0.0
    %205 = vmatpush1.msra.mxu0 0.0
    %206 = vmatprep.subr.mxu0 0.0
    %207 = vmatpush1.msra.mxu0 0.0
    %208 = vmatprep.subr.mxu0 0.0
    %209 = vmatpush1.msra.mxu0 0.0
    %210 = vmatprep.subr.mxu0 0.0
    %211 = vmatpush1.msra.mxu0 0.0
    %212 = vmatprep.subr.mxu0 0.0
    %213 = vmatpush1.msra.mxu0 0.0
    %214 = vmatprep.subr.mxu0 0.0
    %215 = vmatpush1.msra.mxu0 0.0
    %216 = vmatprep.subr.mxu0 0.0
    %217 = vmatpush1.msra.mxu0 0.0
    %218 = vmatprep.subr.mxu0 0.0
    %219 = vmatpush1.msra.mxu0 0.0
    %220 = vmatprep.subr.mxu0 0.0
    %221 = vmatpush1.msra.mxu0 0.0
    %222 = vmatprep.subr.mxu0 0.0
    %223 = vmatpush1.msra.mxu0 0.0
    %224 = vmatprep.subr.mxu0 0.0
    %225 = vmatpush1.msra.mxu0 0.0
    %226 = vmatprep.subr.mxu0 0.0
    %227 = vmatpush1.msra.mxu0 0.0
    %228 = vmatprep.subr.mxu0 0.0
    %229 = vmatpush1.msra.mxu0 0.0
    %230 = vmatprep.subr.mxu0 0.0
    %231 = vmatpush1.msra.mxu0 0.0
    %232 = vmatprep.subr.mxu0 0.0
    %233 = vmatpush1.msra.mxu0 0.0
    %234 = vmatprep.subr.mxu0 0.0
    %235 = vmatpush1.msra.mxu0 0.0
    %236 = vmatprep.subr.mxu0 0.0
    %237 = vmatpush1.msra.mxu0 0.0
    %238 = vmatprep.subr.mxu0 0.0
    %239 = vmatpush1.msra.mxu0 0.0
    %240 = vmatprep.subr.mxu0 0.0
    %241 = vmatpush1.msra.mxu0 0.0
    %242 = vmatprep.subr.mxu0 0.0
    %243 = vmatpush1.msra.mxu0 0.0
    %244 = vmatprep.subr.mxu0 0.0
    %245 = vmatpush1.msra.mxu0 0.0
    %246 = vmatprep.mubr.f32.mxu0 0.0
    %247 = vmatmul.mubr.f32.gmra.mrb[0].mxu0 %v180
    %v248 = vpop.f32.mrb[0].mxu0
    %v249 = vadd.f32 %v177, %v248
    %v250 = vpop.f32.mrb[0].mxu0
    %251 = vdwg.mxu0
    %v252 = vld [vmem:[#allocation8] sm:$0xff]
    %v253 = vld [vmem:[#allocation8 + $0x8] sm:$0xff]
    %v254 = vld [vmem:[#allocation8 + $0x10] sm:$0xff]
    %v255 = vld [vmem:[#allocation8 + $0x18] sm:$0xff]
    %v256 = vld [vmem:[#allocation8 + $0x20] sm:$0xff]
    %v257 = vld [vmem:[#allocation8 + $0x28] sm:$0xff]
    %v258 = vld [vmem:[#allocation8 + $0x30] sm:$0xff]
    %v259 = vld [vmem:[#allocation8 + $0x38] sm:$0xff]
    %v260 = vld [vmem:[#allocation8 + $0x40] sm:$0xff]
    %v261 = vld [vmem:[#allocation8 + $0x48] sm:$0xff]
    %v262 = vld [vmem:[#allocation8 + $0x50] sm:$0xff]
    %v263 = vld [vmem:[#allocation8 + $0x58] sm:$0xff]
    %v264 = vld [vmem:[#allocation8 + $0x60] sm:$0xff]
    %v265 = vld [vmem:[#allocation8 + $0x68] sm:$0xff]
    %v266 = vld [vmem:[#allocation8 + $0x70] sm:$0xff]
    %v267 = vld [vmem:[#allocation8 + $0x78] sm:$0xff]
    %v268 = vlaneseq
    %v269 = vshrl.u32 %v268, 7
    %v270 = vsub.s32 1, %v269
    %v271 = vrot.slane %v147, %v270
    %272 = vmatprep.subr.mxu0 0.0
    %273 = vmatpush1.msra.mxu0 %v252
    %274 = vmatprep.subr.mxu0 0.0
    %275 = vmatpush1.msra.mxu0 %v253
    %276 = vmatprep.subr.mxu0 0.0
    %277 = vmatpush1.msra.mxu0 %v254
    %278 = vmatprep.subr.mxu0 0.0
    %279 = vmatpush1.msra.mxu0 %v255
    %280 = vmatprep.subr.mxu0 0.0
    %281 = vmatpush1.msra.mxu0 %v256
    %282 = vmatprep.subr.mxu0 0.0
    %283 = vmatpush1.msra.mxu0 %v257
    %284 = vmatprep.subr.mxu0 0.0
    %285 = vmatpush1.msra.mxu0 %v258
    %286 = vmatprep.subr.mxu0 0.0
    %287 = vmatpush1.msra.mxu0 %v259
    %288 = vmatprep.subr.mxu0 0.0
    %289 = vmatpush1.msra.mxu0 %v260
    %290 = vmatprep.subr.mxu0 0.0
    %291 = vmatpush1.msra.mxu0 %v261
    %292 = vmatprep.subr.mxu0 0.0
    %293 = vmatpush1.msra.mxu0 %v262
    %294 = vmatprep.subr.mxu0 0.0
    %295 = vmatpush1.msra.mxu0 %v263
    %296 = vmatprep.subr.mxu0 0.0
    %297 = vmatpush1.msra.mxu0 %v264
    %298 = vmatprep.subr.mxu0 0.0
    %299 = vmatpush1.msra.mxu0 %v265
    %300 = vmatprep.subr.mxu0 0.0
    %301 = vmatpush1.msra.mxu0 %v266
    %302 = vmatprep.subr.mxu0 0.0
    %303 = vmatpush1.msra.mxu0 %v267
    %304 = vmatprep.subr.mxu0 0.0
    %305 = vmatpush1.msra.mxu0 0.0
    %306 = vmatprep.subr.mxu0 0.0
    %307 = vmatpush1.msra.mxu0 0.0
    %308 = vmatprep.subr.mxu0 0.0
    %309 = vmatpush1.msra.mxu0 0.0
    %310 = vmatprep.subr.mxu0 0.0
    %311 = vmatpush1.msra.mxu0 0.0
    %312 = vmatprep.subr.mxu0 0.0
    %313 = vmatpush1.msra.mxu0 0.0
    %314 = vmatprep.subr.mxu0 0.0
    %315 = vmatpush1.msra.mxu0 0.0
    %316 = vmatprep.subr.mxu0 0.0
    %317 = vmatpush1.msra.mxu0 0.0
    %318 = vmatprep.subr.mxu0 0.0
    %319 = vmatpush1.msra.mxu0 0.0
    %320 = vmatprep.subr.mxu0 0.0
    %321 = vmatpush1.msra.mxu0 0.0
    %322 = vmatprep.subr.mxu0 0.0
    %323 = vmatpush1.msra.mxu0 0.0
    %324 = vmatprep.subr.mxu0 0.0
    %325 = vmatpush1.msra.mxu0 0.0
    %326 = vmatprep.subr.mxu0 0.0
    %327 = vmatpush1.msra.mxu0 0.0
    %328 = vmatprep.subr.mxu0 0.0
    %329 = vmatpush1.msra.mxu0 0.0
    %330 = vmatprep.subr.mxu0 0.0
    %331 = vmatpush1.msra.mxu0 0.0
    %332 = vmatprep.subr.mxu0 0.0
    %333 = vmatpush1.msra.mxu0 0.0
    %334 = vmatprep.subr.mxu0 0.0
    %335 = vmatpush1.msra.mxu0 0.0
    %336 = vmatprep.mubr.f32.mxu0 0.0
    %337 = vmatmul.mubr.f32.gmra.mrb[0].mxu0 %v249
    %v338 = vpop.f32.mrb[0].mxu0
    %v339 = vadd.f32 %v271, %v338
    %v340 = vpop.f32.mrb[0].mxu0
    %341 = vdwg.mxu0
    %v342 = vadd.f32 %v249, %v339
    %343 = vmatprep.subr.mxu0 0.0
    %344 = vmatpush1.msra.mxu0 %v153
    %345 = vmatprep.subr.mxu0 0.0
    %346 = vmatpush1.msra.mxu0 %v154
    %347 = vmatprep.subr.mxu0 0.0
    %348 = vmatpush1.msra.mxu0 %v155
    %349 = vmatprep.subr.mxu0 0.0
    %350 = vmatpush1.msra.mxu0 %v156
    %351 = vmatprep.subr.mxu0 0.0
    %352 = vmatpush1.msra.mxu0 %v157
    %353 = vmatprep.subr.mxu0 0.0
    %354 = vmatpush1.msra.mxu0 %v158
    %355 = vmatprep.subr.mxu0 0.0
    %356 = vmatpush1.msra.mxu0 %v159
    %357 = vmatprep.subr.mxu0 0.0
    %358 = vmatpush1.msra.mxu0 %v160
    %359 = vmatprep.subr.mxu0 0.0
    %360 = vmatpush1.msra.mxu0 %v161
    %361 = vmatprep.subr.mxu0 0.0
    %362 = vmatpush1.msra.mxu0 %v162
    %363 = vmatprep.subr.mxu0 0.0
    %364 = vmatpush1.msra.mxu0 %v163
    %365 = vmatprep.subr.mxu0 0.0
    %366 = vmatpush1.msra.mxu0 %v164
    %367 = vmatprep.subr.mxu0 0.0
    %368 = vmatpush1.msra.mxu0 %v165
    %369 = vmatprep.subr.mxu0 0.0
    %370 = vmatpush1.msra.mxu0 %v166
    %371 = vmatprep.subr.mxu0 0.0
    %372 = vmatpush1.msra.mxu0 %v167
    %373 = vmatprep.subr.mxu0 0.0
    %374 = vmatpush1.msra.mxu0 %v168
    %375 = vmatprep.subr.mxu0 0.0
    %376 = vmatpush1.msra.mxu0 0.0
    %377 = vmatprep.subr.mxu0 0.0
    %378 = vmatpush1.msra.mxu0 0.0
    %379 = vmatprep.subr.mxu0 0.0
    %380 = vmatpush1.msra.mxu0 0.0
    %381 = vmatprep.subr.mxu0 0.0
    %382 = vmatpush1.msra.mxu0 0.0
    %383 = vmatprep.subr.mxu0 0.0
    %384 = vmatpush1.msra.mxu0 0.0
    %385 = vmatprep.subr.mxu0 0.0
    %386 = vmatpush1.msra.mxu0 0.0
    %387 = vmatprep.subr.mxu0 0.0
    %388 = vmatpush1.msra.mxu0 0.0
    %389 = vmatprep.subr.mxu0 0.0
    %390 = vmatpush1.msra.mxu0 0.0
    %391 = vmatprep.subr.mxu0 0.0
    %392 = vmatpush1.msra.mxu0 0.0
    %393 = vmatprep.subr.mxu0 0.0
    %394 = vmatpush1.msra.mxu0 0.0
    %395 = vmatprep.subr.mxu0 0.0
    %396 = vmatpush1.msra.mxu0 0.0
    %397 = vmatprep.subr.mxu0 0.0
    %398 = vmatpush1.msra.mxu0 0.0
    %399 = vmatprep.subr.mxu0 0.0
    %400 = vmatpush1.msra.mxu0 0.0
    %401 = vmatprep.subr.mxu0 0.0
    %402 = vmatpush1.msra.mxu0 0.0
    %403 = vmatprep.subr.mxu0 0.0
    %404 = vmatpush1.msra.mxu0 0.0
    %405 = vmatprep.subr.mxu0 0.0
    %406 = vmatpush1.msra.mxu0 0.0
    %407 = vmatprep.mubr.f32.mxu0 0.0
    %408 = vmatmul.mubr.f32.gmra.mrb[0].mxu0 %v342
    %v409 = vpop.f32.mrb[0].mxu0
    %v410 = vadd.f32 0.0, %v409
    %v411 = vpop.f32.mrb[0].mxu0
    %412 = vdwg.mxu0
    %v413 = vmul.f32 %v342, %v342
    %414 = vmatprep.subr.mxu0 0.0
    %415 = vmatpush1.msra.mxu0 %v153
    %416 = vmatprep.subr.mxu0 0.0
    %417 = vmatpush1.msra.mxu0 %v154
    %418 = vmatprep.subr.mxu0 0.0
    %419 = vmatpush1.msra.mxu0 %v155
    %420 = vmatprep.subr.mxu0 0.0
    %421 = vmatpush1.msra.mxu0 %v156
    %422 = vmatprep.subr.mxu0 0.0
    %423 = vmatpush1.msra.mxu0 %v157
    %424 = vmatprep.subr.mxu0 0.0
    %425 = vmatpush1.msra.mxu0 %v158
    %426 = vmatprep.subr.mxu0 0.0
    %427 = vmatpush1.msra.mxu0 %v159
    %428 = vmatprep.subr.mxu0 0.0
    %429 = vmatpush1.msra.mxu0 %v160
    %430 = vmatprep.subr.mxu0 0.0
    %431 = vmatpush1.msra.mxu0 %v161
    %432 = vmatprep.subr.mxu0 0.0
    %433 = vmatpush1.msra.mxu0 %v162
    %434 = vmatprep.subr.mxu0 0.0
    %435 = vmatpush1.msra.mxu0 %v163
    %436 = vmatprep.subr.mxu0 0.0
    %437 = vmatpush1.msra.mxu0 %v164
    %438 = vmatprep.subr.mxu0 0.0
    %439 = vmatpush1.msra.mxu0 %v165
    %440 = vmatprep.subr.mxu0 0.0
    %441 = vmatpush1.msra.mxu0 %v166
    %442 = vmatprep.subr.mxu0 0.0
    %443 = vmatpush1.msra.mxu0 %v167
    %444 = vmatprep.subr.mxu0 0.0
    %445 = vmatpush1.msra.mxu0 %v168
    %446 = vmatprep.subr.mxu0 0.0
    %447 = vmatpush1.msra.mxu0 0.0
    %448 = vmatprep.subr.mxu0 0.0
    %449 = vmatpush1.msra.mxu0 0.0
    %450 = vmatprep.subr.mxu0 0.0
    %451 = vmatpush1.msra.mxu0 0.0
    %452 = vmatprep.subr.mxu0 0.0
    %453 = vmatpush1.msra.mxu0 0.0
    %454 = vmatprep.subr.mxu0 0.0
    %455 = vmatpush1.msra.mxu0 0.0
    %456 = vmatprep.subr.mxu0 0.0
    %457 = vmatpush1.msra.mxu0 0.0
    %458 = vmatprep.subr.mxu0 0.0
    %459 = vmatpush1.msra.mxu0 0.0
    %460 = vmatprep.subr.mxu0 0.0
    %461 = vmatpush1.msra.mxu0 0.0
    %462 = vmatprep.subr.mxu0 0.0
    %463 = vmatpush1.msra.mxu0 0.0
    %464 = vmatprep.subr.mxu0 0.0
    %465 = vmatpush1.msra.mxu0 0.0
    %466 = vmatprep.subr.mxu0 0.0
    %467 = vmatpush1.msra.mxu0 0.0
    %468 = vmatprep.subr.mxu0 0.0
    %469 = vmatpush1.msra.mxu0 0.0
    %470 = vmatprep.subr.mxu0 0.0
    %471 = vmatpush1.msra.mxu0 0.0
    %472 = vmatprep.subr.mxu0 0.0
    %473 = vmatpush1.msra.mxu0 0.0
    %474 = vmatprep.subr.mxu0 0.0
    %475 = vmatpush1.msra.mxu0 0.0
    %476 = vmatprep.subr.mxu0 0.0
    %477 = vmatpush1.msra.mxu0 0.0
    %478 = vmatprep.mubr.f32.mxu0 0.0
    %479 = vmatmul.mubr.f32.gmra.mrb[0].mxu0 %v413
    %v480 = vpop.f32.mrb[0].mxu0
    %v481 = vadd.f32 0.0, %v480
    %v482 = vpop.f32.mrb[0].mxu0
    %483 = vdwg.mxu0
    %v484 = vmul.f32 %v410, %v410
    %v485 = vsub.f32 %v481, %v484
    %v486 = vsub.f32 %v342, %v410
    %v487 = vadd.f32 %v485, 1e-05
    %v488 = vrsqrt.pop %v487
    %v489 = vmul.f32 %v486, %v488
    %v490 = vlaneseq
    %v491 = vshrl.u32 %v490, 7
    %v492 = vsub.s32 3, %v491
    %v493 = vrot.slane %v147, %v492
    %v494 = vmul.f32 %v489, %v493
    %v495 = vlaneseq
    %v496 = vshrl.u32 %v495, 7
    %v497 = vsub.s32 4, %v496
    %v498 = vrot.slane %v147, %v497
    %v499 = vadd.f32 %v494, %v498
    %v500 = vld [vmem:[#allocation11] sm:$0xff]
    %v501 = vld [vmem:[#allocation11 + $0x8] sm:$0xff]
    %v502 = vld [vmem:[#allocation11 + $0x10] sm:$0xff]
    %v503 = vld [vmem:[#allocation11 + $0x18] sm:$0xff]
    %v504 = vld [vmem:[#allocation11 + $0x20] sm:$0xff]
    %v505 = vld [vmem:[#allocation11 + $0x28] sm:$0xff]
    %v506 = vld [vmem:[#allocation11 + $0x30] sm:$0xff]
    %v507 = vld [vmem:[#allocation11 + $0x38] sm:$0xff]
    %v508 = vld [vmem:[#allocation11 + $0x40] sm:$0xff]
    %v509 = vld [vmem:[#allocation11 + $0x48] sm:$0xff]
    %v510 = vld [vmem:[#allocation11 + $0x50] sm:$0xff]
    %v511 = vld [vmem:[#allocation11 + $0x58] sm:$0xff]
    %v512 = vld [vmem:[#allocation11 + $0x60] sm:$0xff]
    %v513 = vld [vmem:[#allocation11 + $0x68] sm:$0xff]
    %v514 = vld [vmem:[#allocation11 + $0x70] sm:$0xff]
    %v515 = vld [vmem:[#allocation11 + $0x78] sm:$0xff]
    %v516 = vld [vmem:[#allocation11 + $0x80] sm:$0xff]
    %v517 = vld [vmem:[#allocation11 + $0x88] sm:$0xff]
    %v518 = vld [vmem:[#allocation11 + $0x90] sm:$0xff]
    %v519 = vld [vmem:[#allocation11 + $0x98] sm:$0xff]
    %v520 = vld [vmem:[#allocation11 + $0xa0] sm:$0xff]
    %v521 = vld [vmem:[#allocation11 + $0xa8] sm:$0xff]
    %v522 = vld [vmem:[#allocation11 + $0xb0] sm:$0xff]
    %v523 = vld [vmem:[#allocation11 + $0xb8] sm:$0xff]
    %v524 = vld [vmem:[#allocation11 + $0xc0] sm:$0xff]
    %v525 = vld [vmem:[#allocation11 + $0xc8] sm:$0xff]
    %v526 = vld [vmem:[#allocation11 + $0xd0] sm:$0xff]
    %v527 = vld [vmem:[#allocation11 + $0xd8] sm:$0xff]
    %v528 = vld [vmem:[#allocation11 + $0xe0] sm:$0xff]
    %v529 = vld [vmem:[#allocation11 + $0xe8] sm:$0xff]
    %v530 = vld [vmem:[#allocation11 + $0xf0] sm:$0xff]
    %v531 = vld [vmem:[#allocation11 + $0xf8] sm:$0xff]
    %v533 = vlaneseq
    %v534 = vshrl.u32 %v533, 7
    %v535 = vsub.s32 0, %v534
    %v536 = vrot.slane %v152, %v535
    %v537 = vlaneseq
    %v538 = vshrl.u32 %v537, 7
    %v539 = vsub.s32 4, %v538
    %v540 = vrot.slane %v152, %v539
    %v543 = vlaneseq
    %v544 = vshrl.u32 %v543, 7
    %v545 = vsub.s32 0, %v544
    %v546 = vrot.slane %v536, %v545
    %v547 = vlaneseq
    %v548 = vshrl.u32 %v547, 7
    %v549 = vsub.s32 0, %v548
    %v550 = vrot.slane %v540, %v549
    %551 = vmatprep.subr.mxu0 %v501
    %552 = vmatpush1.msra.mxu0 %v500
    %553 = vmatprep.subr.mxu0 %v503
    %554 = vmatpush1.msra.mxu0 %v502
    %555 = vmatprep.subr.mxu0 %v505
    %556 = vmatpush1.msra.mxu0 %v504
    %557 = vmatprep.subr.mxu0 %v507
    %558 = vmatpush1.msra.mxu0 %v506
    %559 = vmatprep.subr.mxu0 %v509
    %560 = vmatpush1.msra.mxu0 %v508
    %561 = vmatprep.subr.mxu0 %v511
    %562 = vmatpush1.msra.mxu0 %v510
    %563 = vmatprep.subr.mxu0 %v513
    %564 = vmatpush1.msra.mxu0 %v512
    %565 = vmatprep.subr.mxu0 %v515
    %566 = vmatpush1.msra.mxu0 %v514
    %567 = vmatprep.subr.mxu0 %v517
    %568 = vmatpush1.msra.mxu0 %v516
    %569 = vmatprep.subr.mxu0 %v519
    %570 = vmatpush1.msra.mxu0 %v518
    %571 = vmatprep.subr.mxu0 %v521
    %572 = vmatpush1.msra.mxu0 %v520
    %573 = vmatprep.subr.mxu0 %v523
    %574 = vmatpush1.msra.mxu0 %v522
    %575 = vmatprep.subr.mxu0 %v525
    %576 = vmatpush1.msra.mxu0 %v524
    %577 = vmatprep.subr.mxu0 %v527
    %578 = vmatpush1.msra.mxu0 %v526
    %579 = vmatprep.subr.mxu0 %v529
    %580 = vmatpush1.msra.mxu0 %v528
    %581 = vmatprep.subr.mxu0 %v531
    %582 = vmatpush1.msra.mxu0 %v530
    %583 = vmatprep.subr.mxu0 0.0
    %584 = vmatpush1.msra.mxu0 0.0
    %585 = vmatprep.subr.mxu0 0.0
    %586 = vmatpush1.msra.mxu0 0.0
    %587 = vmatprep.subr.mxu0 0.0
    %588 = vmatpush1.msra.mxu0 0.0
    %589 = vmatprep.subr.mxu0 0.0
    %590 = vmatpush1.msra.mxu0 0.0
    %591 = vmatprep.subr.mxu0 0.0
    %592 = vmatpush1.msra.mxu0 0.0
    %593 = vmatprep.subr.mxu0 0.0
    %594 = vmatpush1.msra.mxu0 0.0
    %595 = vmatprep.subr.mxu0 0.0
    %596 = vmatpush1.msra.mxu0 0.0
    %597 = vmatprep.subr.mxu0 0.0
    %598 = vmatpush1.msra.mxu0 0.0
    %599 = vmatprep.subr.mxu0 0.0
    %600 = vmatpush1.msra.mxu0 0.0
    %601 = vmatprep.subr.mxu0 0.0
    %602 = vmatpush1.msra.mxu0 0.0
    %603 = vmatprep.subr.mxu0 0.0
    %604 = vmatpush1.msra.mxu0 0.0
    %605 = vmatprep.subr.mxu0 0.0
    %606 = vmatpush1.msra.mxu0 0.0
    %607 = vmatprep.subr.mxu0 0.0
    %608 = vmatpush1.msra.mxu0 0.0
    %609 = vmatprep.subr.mxu0 0.0
    %610 = vmatpush1.msra.mxu0 0.0
    %611 = vmatprep.subr.mxu0 0.0
    %612 = vmatpush1.msra.mxu0 0.0
    %613 = vmatprep.subr.mxu0 0.0
    %614 = vmatpush1.msra.mxu0 0.0
    %615 = vmatprep.mubr.f32.mxu0 0.0
    %616 = vmatmul.mubr.f32.gmra.mrb[0].mxu0 %v499
    %v617 = vpop.f32.mrb[0].mxu0
    %v618 = vadd.f32 %v546, %v617
    %v619 = vpop.f32.mrb[0].mxu0
    %v620 = vadd.f32 %v550, %v619
    %621 = vdwg.mxu0
    %v622 = vmax.f32 %v618, 0.0
    %v623 = vmax.f32 %v620, 0.0
    %v624 = vld [vmem:[#allocation12] sm:$0xff]
    %v625 = vld [vmem:[#allocation12 + $0x8] sm:$0xff]
    %v626 = vld [vmem:[#allocation12 + $0x10] sm:$0xff]
    %v627 = vld [vmem:[#allocation12 + $0x18] sm:$0xff]
    %v628 = vld [vmem:[#allocation12 + $0x20] sm:$0xff]
    %v629 = vld [vmem:[#allocation12 + $0x28] sm:$0xff]
    %v630 = vld [vmem:[#allocation12 + $0x30] sm:$0xff]
    %v631 = vld [vmem:[#allocation12 + $0x38] sm:$0xff]
    %v632 = vld [vmem:[#allocation12 + $0x40] sm:$0xff]
    %v633 = vld [vmem:[#allocation12 + $0x48] sm:$0xff]
    %v634 = vld [vmem:[#allocation12 + $0x50] sm:$0xff]
    %v635 = vld [vmem:[#allocation12 + $0x58] sm:$0xff]
    %v636 = vld [vmem:[#allocation12 + $0x60] sm:$0xff]
    %v637 = vld [vmem:[#allocation12 + $0x68] sm:$0xff]
    %v638 = vld [vmem:[#allocation12 + $0x70] sm:$0xff]
    %v639 = vld [vmem:[#allocation12 + $0x78] sm:$0xff]
    %v640 = vld [vmem:[#allocation12 + $0x80] sm:$0xff]
    %v641 = vld [vmem:[#allocation12 + $0x88] sm:$0xff]
    %v642 = vld [vmem:[#allocation12 + $0x90] sm:$0xff]
    %v643 = vld [vmem:[#allocation12 + $0x98] sm:$0xff]
    %v644 = vld [vmem:[#allocation12 + $0xa0] sm:$0xff]
    %v645 = vld [vmem:[#allocation12 + $0xa8] sm:$0xff]
    %v646 = vld [vmem:[#allocation12 + $0xb0] sm:$0xff]
    %v647 = vld [vmem:[#allocation12 + $0xb8] sm:$0xff]
    %v648 = vld [vmem:[#allocation12 + $0xc0] sm:$0xff]
    %v649 = vld [vmem:[#allocation12 + $0xc8] sm:$0xff]
    %v650 = vld [vmem:[#allocation12 + $0xd0] sm:$0xff]
    %v651 = vld [vmem:[#allocation12 + $0xd8] sm:$0xff]
    %v652 = vld [vmem:[#allocation12 + $0xe0] sm:$0xff]
    %v653 = vld [vmem:[#allocation12 + $0xe8] sm:$0xff]
    %v654 = vld [vmem:[#allocation12 + $0xf0] sm:$0xff]
    %v655 = vld [vmem:[#allocation12 + $0xf8] sm:$0xff]
    %v656 = vlaneseq
    %v657 = vshrl.u32 %v656, 7
    %v658 = vsub.s32 2, %v657
    %v659 = vrot.slane %v147, %v658
    %660 = vmatprep.subr.mxu0 0.0
    %661 = vmatpush1.msra.mxu0 %v624
    %662 = vmatprep.subr.mxu0 0.0
    %663 = vmatpush1.msra.mxu0 %v625
    %664 = vmatprep.subr.mxu0 0.0
    %665 = vmatpush1.msra.mxu0 %v626
    %666 = vmatprep.subr.mxu0 0.0
    %667 = vmatpush1.msra.mxu0 %v627
    %668 = vmatprep.subr.mxu0 0.0
    %669 = vmatpush1.msra.mxu0 %v628
    %670 = vmatprep.subr.mxu0 0.0
    %671 = vmatpush1.msra.mxu0 %v629
    %672 = vmatprep.subr.mxu0 0.0
    %673 = vmatpush1.msra.mxu0 %v630
    %674 = vmatprep.subr.mxu0 0.0
    %675 = vmatpush1.msra.mxu0 %v631
    %676 = vmatprep.subr.mxu0 0.0
    %677 = vmatpush1.msra.mxu0 %v632
    %678 = vmatprep.subr.mxu0 0.0
    %679 = vmatpush1.msra.mxu0 %v633
    %680 = vmatprep.subr.mxu0 0.0
    %681 = vmatpush1.msra.mxu0 %v634
    %682 = vmatprep.subr.mxu0 0.0
    %683 = vmatpush1.msra.mxu0 %v635
    %684 = vmatprep.subr.mxu0 0.0
    %685 = vmatpush1.msra.mxu0 %v636
    %686 = vmatprep.subr.mxu0 0.0
    %687 = vmatpush1.msra.mxu0 %v637
    %688 = vmatprep.subr.mxu0 0.0
    %689 = vmatpush1.msra.mxu0 %v638
    %690 = vmatprep.subr.mxu0 0.0
    %691 = vmatpush1.msra.mxu0 %v639
    %692 = vmatprep.subr.mxu0 0.0
    %693 = vmatpush1.msra.mxu0 %v640
    %694 = vmatprep.subr.mxu0 0.0
    %695 = vmatpush1.msra.mxu0 %v641
    %696 = vmatprep.subr.mxu0 0.0
    %697 = vmatpush1.msra.mxu0 %v642
    %698 = vmatprep.subr.mxu0 0.0
    %699 = vmatpush1.msra.mxu0 %v643
    %700 = vmatprep.subr.mxu0 0.0
    %701 = vmatpush1.msra.mxu0 %v644
    %702 = vmatprep.subr.mxu0 0.0
    %703 = vmatpush1.msra.mxu0 %v645
    %704 = vmatprep.subr.mxu0 0.0
    %705 = vmatpush1.msra.mxu0 %v646
    %706 = vmatprep.subr.mxu0 0.0
    %707 = vmatpush1.msra.mxu0 %v647
    %708 = vmatprep.subr.mxu0 0.0
    %709 = vmatpush1.msra.mxu0 %v648
    %710 = vmatprep.subr.mxu0 0.0
    %711 = vmatpush1.msra.mxu0 %v649
    %712 = vmatprep.subr.mxu0 0.0
    %713 = vmatpush1.msra.mxu0 %v650
    %714 = vmatprep.subr.mxu0 0.0
    %715 = vmatpush1.msra.mxu0 %v651
    %716 = vmatprep.subr.mxu0 0.0
    %717 = vmatpush1.msra.mxu0 %v652
    %718 = vmatprep.subr.mxu0 0.0
    %719 = vmatpush1.msra.mxu0 %v653
    %720 = vmatprep.subr.mxu0 0.0
    %721 = vmatpush1.msra.mxu0 %v654
    %722 = vmatprep.subr.mxu0 0.0
    %723 = vmatpush1.msra.mxu0 %v655
    %724 = vmatprep.mubr.f32.mxu0 %v623
    %725 = vmatmul.mubr.f32.gmra.mrb[0].mxu0 %v622
    %v726 = vpop.f32.mrb[0].mxu0
    %v727 = vadd.f32 %v659, %v726
    %v728 = vpop.f32.mrb[0].mxu0
    %729 = vdwg.mxu0
    %v730 = vadd.f32 %v499, %v727
    %731 = vmatprep.subr.mxu0 0.0
    %732 = vmatpush1.msra.mxu0 %v153
    %733 = vmatprep.subr.mxu0 0.0
    %734 = vmatpush1.msra.mxu0 %v154
    %735 = vmatprep.subr.mxu0 0.0
    %736 = vmatpush1.msra.mxu0 %v155
    %737 = vmatprep.subr.mxu0 0.0
    %738 = vmatpush1.msra.mxu0 %v156
    %739 = vmatprep.subr.mxu0 0.0
    %740 = vmatpush1.msra.mxu0 %v157
    %741 = vmatprep.subr.mxu0 0.0
    %742 = vmatpush1.msra.mxu0 %v158
    %743 = vmatprep.subr.mxu0 0.0
    %744 = vmatpush1.msra.mxu0 %v159
    %745 = vmatprep.subr.mxu0 0.0
    %746 = vmatpush1.msra.mxu0 %v160
    %747 = vmatprep.subr.mxu0 0.0
    %748 = vmatpush1.msra.mxu0 %v161
    %749 = vmatprep.subr.mxu0 0.0
    %750 = vmatpush1.msra.mxu0 %v162
    %751 = vmatprep.subr.mxu0 0.0
    %752 = vmatpush1.msra.mxu0 %v163
    %753 = vmatprep.subr.mxu0 0.0
    %754 = vmatpush1.msra.mxu0 %v164
    %755 = vmatprep.subr.mxu0 0.0
    %756 = vmatpush1.msra.mxu0 %v165
    %757 = vmatprep.subr.mxu0 0.0
    %758 = vmatpush1.msra.mxu0 %v166
    %759 = vmatprep.subr.mxu0 0.0
    %760 = vmatpush1.msra.mxu0 %v167
    %761 = vmatprep.subr.mxu0 0.0
    %762 = vmatpush1.msra.mxu0 %v168
    %763 = vmatprep.subr.mxu0 0.0
    %764 = vmatpush1.msra.mxu0 0.0
    %765 = vmatprep.subr.mxu0 0.0
    %766 = vmatpush1.msra.mxu0 0.0
    %767 = vmatprep.subr.mxu0 0.0
    %768 = vmatpush1.msra.mxu0 0.0
    %769 = vmatprep.subr.mxu0 0.0
    %770 = vmatpush1.msra.mxu0 0.0
    %771 = vmatprep.subr.mxu0 0.0
    %772 = vmatpush1.msra.mxu0 0.0
    %773 = vmatprep.subr.mxu0 0.0
    %774 = vmatpush1.msra.mxu0 0.0
    %775 = vmatprep.subr.mxu0 0.0
    %776 = vmatpush1.msra.mxu0 0.0
    %777 = vmatprep.subr.mxu0 0.0
    %778 = vmatpush1.msra.mxu0 0.0
    %779 = vmatprep.subr.mxu0 0.0
    %780 = vmatpush1.msra.mxu0 0.0
    %781 = vmatprep.subr.mxu0 0.0
    %782 = vmatpush1.msra.mxu0 0.0
    %783 = vmatprep.subr.mxu0 0.0
    %784 = vmatpush1.msra.mxu0 0.0
    %785 = vmatprep.subr.mxu0 0.0
    %786 = vmatpush1.msra.mxu0 0.0
    %787 = vmatprep.subr.mxu0 0.0
    %788 = vmatpush1.msra.mxu0 0.0
    %789 = vmatprep.subr.mxu0 0.0
    %790 = vmatpush1.msra.mxu0 0.0
    %791 = vmatprep.subr.mxu0 0.0
    %792 = vmatpush1.msra.mxu0 0.0
    %793 = vmatprep.subr.mxu0 0.0
    %794 = vmatpush1.msra.mxu0 0.0
    %795 = vmatprep.mubr.f32.mxu0 0.0
    %796 = vmatmul.mubr.f32.gmra.mrb[0].mxu0 %v730
    %v797 = vpop.f32.mrb[0].mxu0
    %v798 = vadd.f32 0.0, %v797
    %v799 = vpop.f32.mrb[0].mxu0
    %800 = vdwg.mxu0
    %v801 = vmul.f32 %v730, %v730
    %802 = vmatprep.subr.mxu0 0.0
    %803 = vmatpush1.msra.mxu0 %v153
    %804 = vmatprep.subr.mxu0 0.0
    %805 = vmatpush1.msra.mxu0 %v154
    %806 = vmatprep.subr.mxu0 0.0
    %807 = vmatpush1.msra.mxu0 %v155
    %808 = vmatprep.subr.mxu0 0.0
    %809 = vmatpush1.msra.mxu0 %v156
    %810 = vmatprep.subr.mxu0 0.0
    %811 = vmatpush1.msra.mxu0 %v157
    %812 = vmatprep.subr.mxu0 0.0
    %813 = vmatpush1.msra.mxu0 %v158
    %814 = vmatprep.subr.mxu0 0.0
    %815 = vmatpush1.msra.mxu0 %v159
    %816 = vmatprep.subr.mxu0 0.0
    %817 = vmatpush1.msra.mxu0 %v160
    %818 = vmatprep.subr.mxu0 0.0
    %819 = vmatpush1.msra.mxu0 %v161
    %820 = vmatprep.subr.mxu0 0.0
    %821 = vmatpush1.msra.mxu0 %v162
    %822 = vmatprep.subr.mxu0 0.0
    %823 = vmatpush1.msra.mxu0 %v163
    %824 = vmatprep.subr.mxu0 0.0
    %825 = vmatpush1.msra.mxu0 %v164
    %826 = vmatprep.subr.mxu0 0.0
    %827 = vmatpush1.msra.mxu0 %v165
    %828 = vmatprep.subr.mxu0 0.0
    %829 = vmatpush1.msra.mxu0 %v166
    %830 = vmatprep.subr.mxu0 0.0
    %831 = vmatpush1.msra.mxu0 %v167
    %832 = vmatprep.subr.mxu0 0.0
    %833 = vmatpush1.msra.mxu0 %v168
    %834 = vmatprep.subr.mxu0 0.0
    %835 = vmatpush1.msra.mxu0 0.0
    %836 = vmatprep.subr.mxu0 0.0
    %837 = vmatpush1.msra.mxu0 0.0
    %838 = vmatprep.subr.mxu0 0.0
    %839 = vmatpush1.msra.mxu0 0.0
    %840 = vmatprep.subr.mxu0 0.0
    %841 = vmatpush1.msra.mxu0 0.0
    %842 = vmatprep.subr.mxu0 0.0
    %843 = vmatpush1.msra.mxu0 0.0
    %844 = vmatprep.subr.mxu0 0.0
    %845 = vmatpush1.msra.mxu0 0.0
    %846 = vmatprep.subr.mxu0 0.0
    %847 = vmatpush1.msra.mxu0 0.0
    %848 = vmatprep.subr.mxu0 0.0
    %849 = vmatpush1.msra.mxu0 0.0
    %850 = vmatprep.subr.mxu0 0.0
    %851 = vmatpush1.msra.mxu0 0.0
    %852 = vmatprep.subr.mxu0 0.0
    %853 = vmatpush1.msra.mxu0 0.0
    %854 = vmatprep.subr.mxu0 0.0
    %855 = vmatpush1.msra.mxu0 0.0
    %856 = vmatprep.subr.mxu0 0.0
    %857 = vmatpush1.msra.mxu0 0.0
    %858 = vmatprep.subr.mxu0 0.0
    %859 = vmatpush1.msra.mxu0 0.0
    %860 = vmatprep.subr.mxu0 0.0
    %861 = vmatpush1.msra.mxu0 0.0
    %862 = vmatprep.subr.mxu0 0.0
    %863 = vmatpush1.msra.mxu0 0.0
    %864 = vmatprep.subr.mxu0 0.0
    %865 = vmatpush1.msra.mxu0 0.0
    %866 = vmatprep.mubr.f32.mxu0 0.0
    %867 = vmatmul.mubr.f32.gmra.mrb[0].mxu0 %v801
    %v868 = vpop.f32.mrb[0].mxu0
    %v869 = vadd.f32 0.0, %v868
    %v870 = vpop.f32.mrb[0].mxu0
    %871 = vdwg.mxu0
    %v872 = vmul.f32 %v798, %v798
    %v873 = vsub.f32 %v869, %v872
    %v874 = vsub.f32 %v730, %v798
    %v875 = vadd.f32 %v873, 1e-05
    %v876 = vrsqrt.pop %v875
    %v877 = vmul.f32 %v874, %v876
    %v878 = vlaneseq
    %v879 = vshrl.u32 %v878, 7
    %v880 = vsub.s32 5, %v879
    %v881 = vrot.slane %v147, %v880
    %v882 = vmul.f32 %v877, %v881
    %v883 = vlaneseq
    %v884 = vshrl.u32 %v883, 7
    %v885 = vsub.s32 6, %v884
    %v886 = vrot.slane %v147, %v885
    %v887 = vadd.f32 %v882, %v886
    %s888 = scalar_lea.vmem [#allocation8], 128
    %v889 = vld [vmem:[%s888] sm:$0xff]
    %v890 = vld [vmem:[%s888 + $0x8] sm:$0xff]
    %v891 = vld [vmem:[%s888 + $0x10] sm:$0xff]
    %v892 = vld [vmem:[%s888 + $0x18] sm:$0xff]
    %v893 = vld [vmem:[%s888 + $0x20] sm:$0xff]
    %v894 = vld [vmem:[%s888 + $0x28] sm:$0xff]
    %v895 = vld [vmem:[%s888 + $0x30] sm:$0xff]
    %v896 = vld [vmem:[%s888 + $0x38] sm:$0xff]
    %v897 = vld [vmem:[%s888 + $0x40] sm:$0xff]
    %v898 = vld [vmem:[%s888 + $0x48] sm:$0xff]
    %v899 = vld [vmem:[%s888 + $0x50] sm:$0xff]
    %v900 = vld [vmem:[%s888 + $0x58] sm:$0xff]
    %v901 = vld [vmem:[%s888 + $0x60] sm:$0xff]
    %v902 = vld [vmem:[%s888 + $0x68] sm:$0xff]
    %v903 = vld [vmem:[%s888 + $0x70] sm:$0xff]
    %v904 = vld [vmem:[%s888 + $0x78] sm:$0xff]
    %v905 = vlaneseq
    %v906 = vshrl.u32 %v905, 7
    %v907 = vsub.s32 7, %v906
    %v908 = vrot.slane %v147, %v907
    %909 = vmatprep.subr.mxu0 0.0
    %910 = vmatpush1.msra.mxu0 %v889
    %911 = vmatprep.subr.mxu0 0.0
    %912 = vmatpush1.msra.mxu0 %v890
    %913 = vmatprep.subr.mxu0 0.0
    %914 = vmatpush1.msra.mxu0 %v891
    %915 = vmatprep.subr.mxu0 0.0
    %916 = vmatpush1.msra.mxu0 %v892
    %917 = vmatprep.subr.mxu0 0.0
    %918 = vmatpush1.msra.mxu0 %v893
    %919 = vmatprep.subr.mxu0 0.0
    %920 = vmatpush1.msra.mxu0 %v894
    %921 = vmatprep.subr.mxu0 0.0
    %922 = vmatpush1.msra.mxu0 %v895
    %923 = vmatprep.subr.mxu0 0.0
    %924 = vmatpush1.msra.mxu0 %v896
    %925 = vmatprep.subr.mxu0 0.0
    %926 = vmatpush1.msra.mxu0 %v897
    %927 = vmatprep.subr.mxu0 0.0
    %928 = vmatpush1.msra.mxu0 %v898
    %929 = vmatprep.subr.mxu0 0.0
    %930 = vmatpush1.msra.mxu0 %v899
    %931 = vmatprep.subr.mxu0 0.0
    %932 = vmatpush1.msra.mxu0 %v900
    %933 = vmatprep.subr.mxu0 0.0
    %934 = vmatpush1.msra.mxu0 %v901
    %935 = vmatprep.subr.mxu0 0.0
    %936 = vmatpush1.msra.mxu0 %v902
    %937 = vmatprep.subr.mxu0 0.0
    %938 = vmatpush1.msra.mxu0 %v903
    %939 = vmatprep.subr.mxu0 0.0
    %940 = vmatpush1.msra.mxu0 %v904
    %941 = vmatprep.subr.mxu0 0.0
    %942 = vmatpush1.msra.mxu0 0.0
    %943 = vmatprep.subr.mxu0 0.0
    %944 = vmatpush1.msra.mxu0 0.0
    %945 = vmatprep.subr.mxu0 0.0
    %946 = vmatpush1.msra.mxu0 0.0
    %947 = vmatprep.subr.mxu0 0.0
    %948 = vmatpush1.msra.mxu0 0.0
    %949 = vmatprep.subr.mxu0 0.0
    %950 = vmatpush1.msra.mxu0 0.0
    %951 = vmatprep.subr.mxu0 0.0
    %952 = vmatpush1.msra.mxu0 0.0
    %953 = vmatprep.subr.mxu0 0.0
    %954 = vmatpush1.msra.mxu0 0.0
    %955 = vmatprep.subr.mxu0 0.0
    %956 = vmatpush1.msra.mxu0 0.0
    %957 = vmatprep.subr.mxu0 0.0
    %958 = vmatpush1.msra.mxu0 0.0
    %959 = vmatprep.subr.mxu0 0.0
    %960 = vmatpush1.msra.mxu0 0.0
    %961 = vmatprep.subr.mxu0 0.0
    %962 = vmatpush1.msra.mxu0 0.0
    %963 = vmatprep.subr.mxu0 0.0
    %964 = vmatpush1.msra.mxu0 0.0
    %965 = vmatprep.subr.mxu0 0.0
    %966 = vmatpush1.msra.mxu0 0.0
    %967 = vmatprep.subr.mxu0 0.0
    %968 = vmatpush1.msra.mxu0 0.0
    %969 = vmatprep.subr.mxu0 0.0
    %970 = vmatpush1.msra.mxu0 0.0
    %971 = vmatprep.subr.mxu0 0.0
    %972 = vmatpush1.msra.mxu0 0.0
    %973 = vmatprep.mubr.f32.mxu0 0.0
    %974 = vmatmul.mubr.f32.gmra.mrb[0].mxu0 %v887
    %v975 = vpop.f32.mrb[0].mxu0
    %v976 = vadd.f32 %v908, %v975
    %v977 = vpop.f32.mrb[0].mxu0
    %978 = vdwg.mxu0
    %v979 = vadd.f32 %v887, %v976
    %980 = vmatprep.subr.mxu0 0.0
    %981 = vmatpush1.msra.mxu0 %v153
    %982 = vmatprep.subr.mxu0 0.0
    %983 = vmatpush1.msra.mxu0 %v154
    %984 = vmatprep.subr.mxu0 0.0
    %985 = vmatpush1.msra.mxu0 %v155
    %986 = vmatprep.subr.mxu0 0.0
    %987 = vmatpush1.msra.mxu0 %v156
    %988 = vmatprep.subr.mxu0 0.0
    %989 = vmatpush1.msra.mxu0 %v157
    %990 = vmatprep.subr.mxu0 0.0
    %991 = vmatpush1.msra.mxu0 %v158
    %992 = vmatprep.subr.mxu0 0.0
    %993 = vmatpush1.msra.mxu0 %v159
    %994 = vmatprep.subr.mxu0 0.0
    %995 = vmatpush1.msra.mxu0 %v160
    %996 = vmatprep.subr.mxu0 0.0
    %997 = vmatpush1.msra.mxu0 %v161
    %998 = vmatprep.subr.mxu0 0.0
    %999 = vmatpush1.msra.mxu0 %v162
    %1000 = vmatprep.subr.mxu0 0.0
    %1001 = vmatpush1.msra.mxu0 %v163
    %1002 = vmatprep.subr.mxu0 0.0
    %1003 = vmatpush1.msra.mxu0 %v164
    %1004 = vmatprep.subr.mxu0 0.0
    %1005 = vmatpush1.msra.mxu0 %v165
    %1006 = vmatprep.subr.mxu0 0.0
    %1007 = vmatpush1.msra.mxu0 %v166
    %1008 = vmatprep.subr.mxu0 0.0
    %1009 = vmatpush1.msra.mxu0 %v167
    %1010 = vmatprep.subr.mxu0 0.0
    %1011 = vmatpush1.msra.mxu0 %v168
    %1012 = vmatprep.subr.mxu0 0.0
    %1013 = vmatpush1.msra.mxu0 0.0
    %1014 = vmatprep.subr.mxu0 0.0
    %1015 = vmatpush1.msra.mxu0 0.0
    %1016 = vmatprep.subr.mxu0 0.0
    %1017 = vmatpush1.msra.mxu0 0.0
    %1018 = vmatprep.subr.mxu0 0.0
    %1019 = vmatpush1.msra.mxu0 0.0
    %1020 = vmatprep.subr.mxu0 0.0
    %1021 = vmatpush1.msra.mxu0 0.0
    %1022 = vmatprep.subr.mxu0 0.0
    %1023 = vmatpush1.msra.mxu0 0.0
    %1024 = vmatprep.subr.mxu0 0.0
    %1025 = vmatpush1.msra.mxu0 0.0
    %1026 = vmatprep.subr.mxu0 0.0
    %1027 = vmatpush1.msra.mxu0 0.0
    %1028 = vmatprep.subr.mxu0 0.0
    %1029 = vmatpush1.msra.mxu0 0.0
    %1030 = vmatprep.subr.mxu0 0.0
    %1031 = vmatpush1.msra.mxu0 0.0
    %1032 = vmatprep.subr.mxu0 0.0
    %1033 = vmatpush1.msra.mxu0 0.0
    %1034 = vmatprep.subr.mxu0 0.0
    %1035 = vmatpush1.msra.mxu0 0.0
    %1036 = vmatprep.subr.mxu0 0.0
    %1037 = vmatpush1.msra.mxu0 0.0
    %1038 = vmatprep.subr.mxu0 0.0
    %1039 = vmatpush1.msra.mxu0 0.0
    %1040 = vmatprep.subr.mxu0 0.0
    %1041 = vmatpush1.msra.mxu0 0.0
    %1042 = vmatprep.subr.mxu0 0.0
    %1043 = vmatpush1.msra.mxu0 0.0
    %1044 = vmatprep.mubr.f32.mxu0 0.0
    %1045 = vmatmul.mubr.f32.gmra.mrb[0].mxu0 %v979
    %v1046 = vpop.f32.mrb[0].mxu0
    %v1047 = vadd.f32 0.0, %v1046
    %v1048 = vpop.f32.mrb[0].mxu0
    %1049 = vdwg.mxu0
    %v1050 = vmul.f32 %v979, %v979
    %1051 = vmatprep.subr.mxu0 0.0
    %1052 = vmatpush1.msra.mxu0 %v153
    %1053 = vmatprep.subr.mxu0 0.0
    %1054 = vmatpush1.msra.mxu0 %v154
    %1055 = vmatprep.subr.mxu0 0.0
    %1056 = vmatpush1.msra.mxu0 %v155
    %1057 = vmatprep.subr.mxu0 0.0
    %1058 = vmatpush1.msra.mxu0 %v156
    %1059 = vmatprep.subr.mxu0 0.0
    %1060 = vmatpush1.msra.mxu0 %v157
    %1061 = vmatprep.subr.mxu0 0.0
    %1062 = vmatpush1.msra.mxu0 %v158
    %1063 = vmatprep.subr.mxu0 0.0
    %1064 = vmatpush1.msra.mxu0 %v159
    %1065 = vmatprep.subr.mxu0 0.0
    %1066 = vmatpush1.msra.mxu0 %v160
    %1067 = vmatprep.subr.mxu0 0.0
    %1068 = vmatpush1.msra.mxu0 %v161
    %1069 = vmatprep.subr.mxu0 0.0
    %1070 = vmatpush1.msra.mxu0 %v162
    %1071 = vmatprep.subr.mxu0 0.0
    %1072 = vmatpush1.msra.mxu0 %v163
    %1073 = vmatprep.subr.mxu0 0.0
    %1074 = vmatpush1.msra.mxu0 %v164
    %1075 = vmatprep.subr.mxu0 0.0
    %1076 = vmatpush1.msra.mxu0 %v165
    %1077 = vmatprep.subr.mxu0 0.0
    %1078 = vmatpush1.msra.mxu0 %v166
    %1079 = vmatprep.subr.mxu0 0.0
    %1080 = vmatpush1.msra.mxu0 %v167
    %1081 = vmatprep.subr.mxu0 0.0
    %1082 = vmatpush1.msra.mxu0 %v168
    %1083 = vmatprep.subr.mxu0 0.0
    %1084 = vmatpush1.msra.mxu0 0.0
    %1085 = vmatprep.subr.mxu0 0.0
    %1086 = vmatpush1.msra.mxu0 0.0
    %1087 = vmatprep.subr.mxu0 0.0
    %1088 = vmatpush1.msra.mxu0 0.0
    %1089 = vmatprep.subr.mxu0 0.0
    %1090 = vmatpush1.msra.mxu0 0.0
    %1091 = vmatprep.subr.mxu0 0.0
    %1092 = vmatpush1.msra.mxu0 0.0
    %1093 = vmatprep.subr.mxu0 0.0
    %1094 = vmatpush1.msra.mxu0 0.0
    %1095 = vmatprep.subr.mxu0 0.0
    %1096 = vmatpush1.msra.mxu0 0.0
    %1097 = vmatprep.subr.mxu0 0.0
    %1098 = vmatpush1.msra.mxu0 0.0
    %1099 = vmatprep.subr.mxu0 0.0
    %1100 = vmatpush1.msra.mxu0 0.0
    %1101 = vmatprep.subr.mxu0 0.0
    %1102 = vmatpush1.msra.mxu0 0.0
    %1103 = vmatprep.subr.mxu0 0.0
    %1104 = vmatpush1.msra.mxu0 0.0
    %1105 = vmatprep.subr.mxu0 0.0
    %1106 = vmatpush1.msra.mxu0 0.0
    %1107 = vmatprep.subr.mxu0 0.0
    %1108 = vmatpush1.msra.mxu0 0.0
    %1109 = vmatprep.subr.mxu0 0.0
    %1110 = vmatpush1.msra.mxu0 0.0
    %1111 = vmatprep.subr.mxu0 0.0
    %1112 = vmatpush1.msra.mxu0 0.0
    %1113 = vmatprep.subr.mxu0 0.0
    %1114 = vmatpush1.msra.mxu0 0.0
    %1115 = vmatprep.mubr.f32.mxu0 0.0
    %1116 = vmatmul.mubr.f32.gmra.mrb[0].mxu0 %v1050
    %v1117 = vpop.f32.mrb[0].mxu0
    %v1118 = vadd.f32 0.0, %v1117
    %v1119 = vpop.f32.mrb[0].mxu0
    %1120 = vdwg.mxu0
    %v1121 = vmul.f32 %v1047, %v1047
    %v1122 = vsub.f32 %v1118, %v1121
    %v1123 = vsub.f32 %v979, %v1047
    %v1124 = vadd.f32 %v1122, 1e-05
    %v1125 = vrsqrt.pop %v1124
    %v1126 = vmul.f32 %v1123, %v1125
    %v1127 = vlaneseq
    %v1128 = vshrl.u32 %v1127, 7
    %v1129 = vsub.s32 1, %v1128
    %v1130 = vrot.slane %v148, %v1129
    %v1131 = vmul.f32 %v1126, %v1130
    %v1132 = vlaneseq
    %v1133 = vshrl.u32 %v1132, 7
    %v1134 = vsub.s32 2, %v1133
    %v1135 = vrot.slane %v148, %v1134
    %v1136 = vadd.f32 %v1131, %v1135
    %s1137 = scalar_lea.vmem [#allocation11], 256
    %v1138 = vld [vmem:[%s1137] sm:$0xff]
    %v1139 = vld [vmem:[%s1137 + $0x8] sm:$0xff]
    %v1140 = vld [vmem:[%s1137 + $0x10] sm:$0xff]
    %v1141 = vld [vmem:[%s1137 + $0x18] sm:$0xff]
    %v1142 = vld [vmem:[%s1137 + $0x20] sm:$0xff]
    %v1143 = vld [vmem:[%s1137 + $0x28] sm:$0xff]
    %v1144 = vld [vmem:[%s1137 + $0x30] sm:$0xff]
    %v1145 = vld [vmem:[%s1137 + $0x38] sm:$0xff]
    %v1146 = vld [vmem:[%s1137 + $0x40] sm:$0xff]
    %v1147 = vld [vmem:[%s1137 + $0x48] sm:$0xff]
    %v1148 = vld [vmem:[%s1137 + $0x50] sm:$0xff]
    %v1149 = vld [vmem:[%s1137 + $0x58] sm:$0xff]
    %v1150 = vld [vmem:[%s1137 + $0x60] sm:$0xff]
    %v1151 = vld [vmem:[%s1137 + $0x68] sm:$0xff]
    %v1152 = vld [vmem:[%s1137 + $0x70] sm:$0xff]
    %v1153 = vld [vmem:[%s1137 + $0x78] sm:$0xff]
    %v1154 = vld [vmem:[%s1137 + $0x80] sm:$0xff]
    %v1155 = vld [vmem:[%s1137 + $0x88] sm:$0xff]
    %v1156 = vld [vmem:[%s1137 + $0x90] sm:$0xff]
    %v1157 = vld [vmem:[%s1137 + $0x98] sm:$0xff]
    %v1158 = vld [vmem:[%s1137 + $0xa0] sm:$0xff]
    %v1159 = vld [vmem:[%s1137 + $0xa8] sm:$0xff]
    %v1160 = vld [vmem:[%s1137 + $0xb0] sm:$0xff]
    %v1161 = vld [vmem:[%s1137 + $0xb8] sm:$0xff]
    %v1162 = vld [vmem:[%s1137 + $0xc0] sm:$0xff]
    %v1163 = vld [vmem:[%s1137 + $0xc8] sm:$0xff]
    %v1164 = vld [vmem:[%s1137 + $0xd0] sm:$0xff]
    %v1165 = vld [vmem:[%s1137 + $0xd8] sm:$0xff]
    %v1166 = vld [vmem:[%s1137 + $0xe0] sm:$0xff]
    %v1167 = vld [vmem:[%s1137 + $0xe8] sm:$0xff]
    %v1168 = vld [vmem:[%s1137 + $0xf0] sm:$0xff]
    %v1169 = vld [vmem:[%s1137 + $0xf8] sm:$0xff]
    %v1170 = vlaneseq
    %v1171 = vshrl.u32 %v1170, 7
    %v1172 = vsub.s32 1, %v1171
    %v1173 = vrot.slane %v152, %v1172
    %v1174 = vlaneseq
    %v1175 = vshrl.u32 %v1174, 7
    %v1176 = vsub.s32 5, %v1175
    %v1177 = vrot.slane %v152, %v1176
    %v1180 = vlaneseq
    %v1181 = vshrl.u32 %v1180, 7
    %v1182 = vsub.s32 1, %v1181
    %v1183 = vrot.slane %v1173, %v1182
    %v1184 = vlaneseq
    %v1185 = vshrl.u32 %v1184, 7
    %v1186 = vsub.s32 1, %v1185
    %v1187 = vrot.slane %v1177, %v1186
    %1188 = vmatprep.subr.mxu0 %v1139
    %1189 = vmatpush1.msra.mxu0 %v1138
    %1190 = vmatprep.subr.mxu0 %v1141
    %1191 = vmatpush1.msra.mxu0 %v1140
    %1192 = vmatprep.subr.mxu0 %v1143
    %1193 = vmatpush1.msra.mxu0 %v1142
    %1194 = vmatprep.subr.mxu0 %v1145
    %1195 = vmatpush1.msra.mxu0 %v1144
    %1196 = vmatprep.subr.mxu0 %v1147
    %1197 = vmatpush1.msra.mxu0 %v1146
    %1198 = vmatprep.subr.mxu0 %v1149
    %1199 = vmatpush1.msra.mxu0 %v1148
    %1200 = vmatprep.subr.mxu0 %v1151
    %1201 = vmatpush1.msra.mxu0 %v1150
    %1202 = vmatprep.subr.mxu0 %v1153
    %1203 = vmatpush1.msra.mxu0 %v1152
    %1204 = vmatprep.subr.mxu0 %v1155
    %1205 = vmatpush1.msra.mxu0 %v1154
    %1206 = vmatprep.subr.mxu0 %v1157
    %1207 = vmatpush1.msra.mxu0 %v1156
    %1208 = vmatprep.subr.mxu0 %v1159
    %1209 = vmatpush1.msra.mxu0 %v1158
    %1210 = vmatprep.subr.mxu0 %v1161
    %1211 = vmatpush1.msra.mxu0 %v1160
    %1212 = vmatprep.subr.mxu0 %v1163
    %1213 = vmatpush1.msra.mxu0 %v1162
    %1214 = vmatprep.subr.mxu0 %v1165
    %1215 = vmatpush1.msra.mxu0 %v1164
    %1216 = vmatprep.subr.mxu0 %v1167
    %1217 = vmatpush1.msra.mxu0 %v1166
    %1218 = vmatprep.subr.mxu0 %v1169
    %1219 = vmatpush1.msra.mxu0 %v1168
    %1220 = vmatprep.subr.mxu0 0.0
    %1221 = vmatpush1.msra.mxu0 0.0
    %1222 = vmatprep.subr.mxu0 0.0
    %1223 = vmatpush1.msra.mxu0 0.0
    %1224 = vmatprep.subr.mxu0 0.0
    %1225 = vmatpush1.msra.mxu0 0.0
    %1226 = vmatprep.subr.mxu0 0.0
    %1227 = vmatpush1.msra.mxu0 0.0
    %1228 = vmatprep.subr.mxu0 0.0
    %1229 = vmatpush1.msra.mxu0 0.0
    %1230 = vmatprep.subr.mxu0 0.0
    %1231 = vmatpush1.msra.mxu0 0.0
    %1232 = vmatprep.subr.mxu0 0.0
    %1233 = vmatpush1.msra.mxu0 0.0
    %1234 = vmatprep.subr.mxu0 0.0
    %1235 = vmatpush1.msra.mxu0 0.0
    %1236 = vmatprep.subr.mxu0 0.0
    %1237 = vmatpush1.msra.mxu0 0.0
    %1238 = vmatprep.subr.mxu0 0.0
    %1239 = vmatpush1.msra.mxu0 0.0
    %1240 = vmatprep.subr.mxu0 0.0
    %1241 = vmatpush1.msra.mxu0 0.0
    %1242 = vmatprep.subr.mxu0 0.0
    %1243 = vmatpush1.msra.mxu0 0.0
    %1244 = vmatprep.subr.mxu0 0.0
    %1245 = vmatpush1.msra.mxu0 0.0
    %1246 = vmatprep.subr.mxu0 0.0
    %1247 = vmatpush1.msra.mxu0 0.0
    %1248 = vmatprep.subr.mxu0 0.0
    %1249 = vmatpush1.msra.mxu0 0.0
    %1250 = vmatprep.subr.mxu0 0.0
    %1251 = vmatpush1.msra.mxu0 0.0
    %1252 = vmatprep.mubr.f32.mxu0 0.0
    %1253 = vmatmul.mubr.f32.gmra.mrb[0].mxu0 %v1136
    %v1254 = vpop.f32.mrb[0].mxu0
    %v1255 = vadd.f32 %v1183, %v1254
    %v1256 = vpop.f32.mrb[0].mxu0
    %v1257 = vadd.f32 %v1187, %v1256
    %1258 = vdwg.mxu0
    %v1259 = vmax.f32 %v1255, 0.0
    %v1260 = vmax.f32 %v1257, 0.0
    %s1261 = scalar_lea.vmem [#allocation12], 256
    %v1262 = vld [vmem:[%s1261] sm:$0xff]
    %v1263 = vld [vmem:[%s1261 + $0x8] sm:$0xff]
    %v1264 = vld [vmem:[%s1261 + $0x10] sm:$0xff]
    %v1265 = vld [vmem:[%s1261 + $0x18] sm:$0xff]
    %v1266 = vld [vmem:[%s1261 + $0x20] sm:$0xff]
    %v1267 = vld [vmem:[%s1261 + $0x28] sm:$0xff]
    %v1268 = vld [vmem:[%s1261 + $0x30] sm:$0xff]
    %v1269 = vld [vmem:[%s1261 + $0x38] sm:$0xff]
    %v1270 = vld [vmem:[%s1261 + $0x40] sm:$0xff]
    %v1271 = vld [vmem:[%s1261 + $0x48] sm:$0xff]
    %v1272 = vld [vmem:[%s1261 + $0x50] sm:$0xff]
    %v1273 = vld [vmem:[%s1261 + $0x58] sm:$0xff]
    %v1274 = vld [vmem:[%s1261 + $0x60] sm:$0xff]
    %v1275 = vld [vmem:[%s1261 + $0x68] sm:$0xff]
    %v1276 = vld [vmem:[%s1261 + $0x70] sm:$0xff]
    %v1277 = vld [vmem:[%s1261 + $0x78] sm:$0xff]
    %v1278 = vld [vmem:[%s1261 + $0x80] sm:$0xff]
    %v1279 = vld [vmem:[%s1261 + $0x88] sm:$0xff]
    %v1280 = vld [vmem:[%s1261 + $0x90] sm:$0xff]
    %v1281 = vld [vmem:[%s1261 + $0x98] sm:$0xff]
    %v1282 = vld [vmem:[%s1261 + $0xa0] sm:$0xff]
    %v1283 = vld [vmem:[%s1261 + $0xa8] sm:$0xff]
    %v1284 = vld [vmem:[%s1261 + $0xb0] sm:$0xff]
    %v1285 = vld [vmem:[%s1261 + $0xb8] sm:$0xff]
    %v1286 = vld [vmem:[%s1261 + $0xc0] sm:$0xff]
    %v1287 = vld [vmem:[%s1261 + $0xc8] sm:$0xff]
    %v1288 = vld [vmem:[%s1261 + $0xd0] sm:$0xff]
    %v1289 = vld [vmem:[%s1261 + $0xd8] sm:$0xff]
    %v1290 = vld [vmem:[%s1261 + $0xe0] sm:$0xff]
    %v1291 = vld [vmem:[%s1261 + $0xe8] sm:$0xff]
    %v1292 = vld [vmem:[%s1261 + $0xf0] sm:$0xff]
    %v1293 = vld [vmem:[%s1261 + $0xf8] sm:$0xff]
    %v1294 = vlaneseq
    %v1295 = vshrl.u32 %v1294, 7
    %v1296 = vsub.s32 0, %v1295
    %v1297 = vrot.slane %v148, %v1296
    %1298 = vmatprep.subr.mxu0 0.0
    %1299 = vmatpush1.msra.mxu0 %v1262
    %1300 = vmatprep.subr.mxu0 0.0
    %1301 = vmatpush1.msra.mxu0 %v1263
    %1302 = vmatprep.subr.mxu0 0.0
    %1303 = vmatpush1.msra.mxu0 %v1264
    %1304 = vmatprep.subr.mxu0 0.0
    %1305 = vmatpush1.msra.mxu0 %v1265
    %1306 = vmatprep.subr.mxu0 0.0
    %1307 = vmatpush1.msra.mxu0 %v1266
    %1308 = vmatprep.subr.mxu0 0.0
    %1309 = vmatpush1.msra.mxu0 %v1267
    %1310 = vmatprep.subr.mxu0 0.0
    %1311 = vmatpush1.msra.mxu0 %v1268
    %1312 = vmatprep.subr.mxu0 0.0
    %1313 = vmatpush1.msra.mxu0 %v1269
    %1314 = vmatprep.subr.mxu0 0.0
    %1315 = vmatpush1.msra.mxu0 %v1270
    %1316 = vmatprep.subr.mxu0 0.0
    %1317 = vmatpush1.msra.mxu0 %v1271
    %1318 = vmatprep.subr.mxu0 0.0
    %1319 = vmatpush1.msra.mxu0 %v1272
    %1320 = vmatprep.subr.mxu0 0.0
    %1321 = vmatpush1.msra.mxu0 %v1273
    %1322 = vmatprep.subr.mxu0 0.0
    %1323 = vmatpush1.msra.mxu0 %v1274
    %1324 = vmatprep.subr.mxu0 0.0
    %1325 = vmatpush1.msra.mxu0 %v1275
    %1326 = vmatprep.subr.mxu0 0.0
    %1327 = vmatpush1.msra.mxu0 %v1276
    %1328 = vmatprep.subr.mxu0 0.0
    %1329 = vmatpush1.msra.mxu0 %v1277
    %1330 = vmatprep.subr.mxu0 0.0
    %1331 = vmatpush1.msra.mxu0 %v1278
    %1332 = vmatprep.subr.mxu0 0.0
    %1333 = vmatpush1.msra.mxu0 %v1279
    %1334 = vmatprep.subr.mxu0 0.0
    %1335 = vmatpush1.msra.mxu0 %v1280
    %1336 = vmatprep.subr.mxu0 0.0
    %1337 = vmatpush1.msra.mxu0 %v1281
    %1338 = vmatprep.subr.mxu0 0.0
    %1339 = vmatpush1.msra.mxu0 %v1282
    %1340 = vmatprep.subr.mxu0 0.0
    %1341 = vmatpush1.msra.mxu0 %v1283
    %1342 = vmatprep.subr.mxu0 0.0
    %1343 = vmatpush1.msra.mxu0 %v1284
    %1344 = vmatprep.subr.mxu0 0.0
    %1345 = vmatpush1.msra.mxu0 %v1285
    %1346 = vmatprep.subr.mxu0 0.0
    %1347 = vmatpush1.msra.mxu0 %v1286
    %1348 = vmatprep.subr.mxu0 0.0
    %1349 = vmatpush1.msra.mxu0 %v1287
    %1350 = vmatprep.subr.mxu0 0.0
    %1351 = vmatpush1.msra.mxu0 %v1288
    %1352 = vmatprep.subr.mxu0 0.0
    %1353 = vmatpush1.msra.mxu0 %v1289
    %1354 = vmatprep.subr.mxu0 0.0
    %1355 = vmatpush1.msra.mxu0 %v1290
    %1356 = vmatprep.subr.mxu0 0.0
    %1357 = vmatpush1.msra.mxu0 %v1291
    %1358 = vmatprep.subr.mxu0 0.0
    %1359 = vmatpush1.msra.mxu0 %v1292
    %1360 = vmatprep.subr.mxu0 0.0
    %1361 = vmatpush1.msra.mxu0 %v1293
    %1362 = vmatprep.mubr.f32.mxu0 %v1260
    %1363 = vmatmul.mubr.f32.gmra.mrb[0].mxu0 %v1259
    %v1364 = vpop.f32.mrb[0].mxu0
    %v1365 = vadd.f32 %v1297, %v1364
    %v1366 = vpop.f32.mrb[0].mxu0
    %1367 = vdwg.mxu0
    %v1368 = vadd.f32 %v1136, %v1365
    %1369 = vmatprep.subr.mxu0 0.0
    %1370 = vmatpush1.msra.mxu0 %v153
    %1371 = vmatprep.subr.mxu0 0.0
    %1372 = vmatpush1.msra.mxu0 %v154
    %1373 = vmatprep.subr.mxu0 0.0
    %1374 = vmatpush1.msra.mxu0 %v155
    %1375 = vmatprep.subr.mxu0 0.0
    %1376 = vmatpush1.msra.mxu0 %v156
    %1377 = vmatprep.subr.mxu0 0.0
    %1378 = vmatpush1.msra.mxu0 %v157
    %1379 = vmatprep.subr.mxu0 0.0
    %1380 = vmatpush1.msra.mxu0 %v158
    %1381 = vmatprep.subr.mxu0 0.0
    %1382 = vmatpush1.msra.mxu0 %v159
    %1383 = vmatprep.subr.mxu0 0.0
    %1384 = vmatpush1.msra.mxu0 %v160
    %1385 = vmatprep.subr.mxu0 0.0
    %1386 = vmatpush1.msra.mxu0 %v161
    %1387 = vmatprep.subr.mxu0 0.0
    %1388 = vmatpush1.msra.mxu0 %v162
    %1389 = vmatprep.subr.mxu0 0.0
    %1390 = vmatpush1.msra.mxu0 %v163
    %1391 = vmatprep.subr.mxu0 0.0
    %1392 = vmatpush1.msra.mxu0 %v164
    %1393 = vmatprep.subr.mxu0 0.0
    %1394 = vmatpush1.msra.mxu0 %v165
    %1395 = vmatprep.subr.mxu0 0.0
    %1396 = vmatpush1.msra.mxu0 %v166
    %1397 = vmatprep.subr.mxu0 0.0
    %1398 = vmatpush1.msra.mxu0 %v167
    %1399 = vmatprep.subr.mxu0 0.0
    %1400 = vmatpush1.msra.mxu0 %v168
    %1401 = vmatprep.subr.mxu0 0.0
    %1402 = vmatpush1.msra.mxu0 0.0
    %1403 = vmatprep.subr.mxu0 0.0
    %1404 = vmatpush1.msra.mxu0 0.0
    %1405 = vmatprep.subr.mxu0 0.0
    %1406 = vmatpush1.msra.mxu0 0.0
    %1407 = vmatprep.subr.mxu0 0.0
    %1408 = vmatpush1.msra.mxu0 0.0
    %1409 = vmatprep.subr.mxu0 0.0
    %1410 = vmatpush1.msra.mxu0 0.0
    %1411 = vmatprep.subr.mxu0 0.0
    %1412 = vmatpush1.msra.mxu0 0.0
    %1413 = vmatprep.subr.mxu0 0.0
    %1414 = vmatpush1.msra.mxu0 0.0
    %1415 = vmatprep.subr.mxu0 0.0
    %1416 = vmatpush1.msra.mxu0 0.0
    %1417 = vmatprep.subr.mxu0 0.0
    %1418 = vmatpush1.msra.mxu0 0.0
    %1419 = vmatprep.subr.mxu0 0.0
    %1420 = vmatpush1.msra.mxu0 0.0
    %1421 = vmatprep.subr.mxu0 0.0
    %1422 = vmatpush1.msra.mxu0 0.0
    %1423 = vmatprep.subr.mxu0 0.0
    %1424 = vmatpush1.msra.mxu0 0.0
    %1425 = vmatprep.subr.mxu0 0.0
    %1426 = vmatpush1.msra.mxu0 0.0
    %1427 = vmatprep.subr.mxu0 0.0
    %1428 = vmatpush1.msra.mxu0 0.0
    %1429 = vmatprep.subr.mxu0 0.0
    %1430 = vmatpush1.msra.mxu0 0.0
    %1431 = vmatprep.subr.mxu0 0.0
    %1432 = vmatpush1.msra.mxu0 0.0
    %1433 = vmatprep.mubr.f32.mxu0 0.0
    %1434 = vmatmul.mubr.f32.gmra.mrb[0].mxu0 %v1368
    %v1435 = vpop.f32.mrb[0].mxu0
    %v1436 = vadd.f32 0.0, %v1435
    %v1437 = vpop.f32.mrb[0].mxu0
    %1438 = vdwg.mxu0
    %v1439 = vmul.f32 %v1368, %v1368
    %1440 = vmatprep.subr.mxu0 0.0
    %1441 = vmatpush1.msra.mxu0 %v153
    %1442 = vmatprep.subr.mxu0 0.0
    %1443 = vmatpush1.msra.mxu0 %v154
    %1444 = vmatprep.subr.mxu0 0.0
    %1445 = vmatpush1.msra.mxu0 %v155
    %1446 = vmatprep.subr.mxu0 0.0
    %1447 = vmatpush1.msra.mxu0 %v156
    %1448 = vmatprep.subr.mxu0 0.0
    %1449 = vmatpush1.msra.mxu0 %v157
    %1450 = vmatprep.subr.mxu0 0.0
    %1451 = vmatpush1.msra.mxu0 %v158
    %1452 = vmatprep.subr.mxu0 0.0
    %1453 = vmatpush1.msra.mxu0 %v159
    %1454 = vmatprep.subr.mxu0 0.0
    %1455 = vmatpush1.msra.mxu0 %v160
    %1456 = vmatprep.subr.mxu0 0.0
    %1457 = vmatpush1.msra.mxu0 %v161
    %1458 = vmatprep.subr.mxu0 0.0
    %1459 = vmatpush1.msra.mxu0 %v162
    %1460 = vmatprep.subr.mxu0 0.0
    %1461 = vmatpush1.msra.mxu0 %v163
    %1462 = vmatprep.subr.mxu0 0.0
    %1463 = vmatpush1.msra.mxu0 %v164
    %1464 = vmatprep.subr.mxu0 0.0
    %1465 = vmatpush1.msra.mxu0 %v165
    %1466 = vmatprep.subr.mxu0 0.0
    %1467 = vmatpush1.msra.mxu0 %v166
    %1468 = vmatprep.subr.mxu0 0.0
    %1469 = vmatpush1.msra.mxu0 %v167
    %1470 = vmatprep.subr.mxu0 0.0
    %1471 = vmatpush1.msra.mxu0 %v168
    %1472 = vmatprep.subr.mxu0 0.0
    %1473 = vmatpush1.msra.mxu0 0.0
    %1474 = vmatprep.subr.mxu0 0.0
    %1475 = vmatpush1.msra.mxu0 0.0
    %1476 = vmatprep.subr.mxu0 0.0
    %1477 = vmatpush1.msra.mxu0 0.0
    %1478 = vmatprep.subr.mxu0 0.0
    %1479 = vmatpush1.msra.mxu0 0.0
    %1480 = vmatprep.subr.mxu0 0.0
    %1481 = vmatpush1.msra.mxu0 0.0
    %1482 = vmatprep.subr.mxu0 0.0
    %1483 = vmatpush1.msra.mxu0 0.0
    %1484 = vmatprep.subr.mxu0 0.0
    %1485 = vmatpush1.msra.mxu0 0.0
    %1486 = vmatprep.subr.mxu0 0.0
    %1487 = vmatpush1.msra.mxu0 0.0
    %1488 = vmatprep.subr.mxu0 0.0
    %1489 = vmatpush1.msra.mxu0 0.0
    %1490 = vmatprep.subr.mxu0 0.0
    %1491 = vmatpush1.msra.mxu0 0.0
    %1492 = vmatprep.subr.mxu0 0.0
    %1493 = vmatpush1.msra.mxu0 0.0
    %1494 = vmatprep.subr.mxu0 0.0
    %1495 = vmatpush1.msra.mxu0 0.0
    %1496 = vmatprep.subr.mxu0 0.0
    %1497 = vmatpush1.msra.mxu0 0.0
    %1498 = vmatprep.subr.mxu0 0.0
    %1499 = vmatpush1.msra.mxu0 0.0
    %1500 = vmatprep.subr.mxu0 0.0
    %1501 = vmatpush1.msra.mxu0 0.0
    %1502 = vmatprep.subr.mxu0 0.0
    %1503 = vmatpush1.msra.mxu0 0.0
    %1504 = vmatprep.mubr.f32.mxu0 0.0
    %1505 = vmatmul.mubr.f32.gmra.mrb[0].mxu0 %v1439
    %v1506 = vpop.f32.mrb[0].mxu0
    %v1507 = vadd.f32 0.0, %v1506
    %v1508 = vpop.f32.mrb[0].mxu0
    %1509 = vdwg.mxu0
    %v1510 = vmul.f32 %v1436, %v1436
    %v1511 = vsub.f32 %v1507, %v1510
    %v1512 = vsub.f32 %v1368, %v1436
    %v1513 = vadd.f32 %v1511, 1e-05
    %v1514 = vrsqrt.pop %v1513
    %v1515 = vmul.f32 %v1512, %v1514
    %v1516 = vlaneseq
    %v1517 = vshrl.u32 %v1516, 7
    %v1518 = vsub.s32 3, %v1517
    %v1519 = vrot.slane %v148, %v1518
    %v1520 = vmul.f32 %v1515, %v1519
    %v1521 = vlaneseq
    %v1522 = vshrl.u32 %v1521, 7
    %v1523 = vsub.s32 4, %v1522
    %v1524 = vrot.slane %v148, %v1523
    %v1525 = vadd.f32 %v1520, %v1524
    %1526 = vmatprep.subr.mxu0 0.0
    %1527 = vmatpush1.msra.mxu0 %v153
    %1528 = vmatprep.subr.mxu0 0.0
    %1529 = vmatpush1.msra.mxu0 %v154
    %1530 = vmatprep.subr.mxu0 0.0
    %1531 = vmatpush1.msra.mxu0 %v155
    %1532 = vmatprep.subr.mxu0 0.0
    %1533 = vmatpush1.msra.mxu0 %v156
    %1534 = vmatprep.subr.mxu0 0.0
    %1535 = vmatpush1.msra.mxu0 %v157
    %1536 = vmatprep.subr.mxu0 0.0
    %1537 = vmatpush1.msra.mxu0 %v158
    %1538 = vmatprep.subr.mxu0 0.0
    %1539 = vmatpush1.msra.mxu0 %v159
    %1540 = vmatprep.subr.mxu0 0.0
    %1541 = vmatpush1.msra.mxu0 %v160
    %1542 = vmatprep.subr.mxu0 0.0
    %1543 = vmatpush1.msra.mxu0 %v161
    %1544 = vmatprep.subr.mxu0 0.0
    %1545 = vmatpush1.msra.mxu0 %v162
    %1546 = vmatprep.subr.mxu0 0.0
    %1547 = vmatpush1.msra.mxu0 %v163
    %1548 = vmatprep.subr.mxu0 0.0
    %1549 = vmatpush1.msra.mxu0 %v164
    %1550 = vmatprep.subr.mxu0 0.0
    %1551 = vmatpush1.msra.mxu0 %v165
    %1552 = vmatprep.subr.mxu0 0.0
    %1553 = vmatpush1.msra.mxu0 %v166
    %1554 = vmatprep.subr.mxu0 0.0
    %1555 = vmatpush1.msra.mxu0 %v167
    %1556 = vmatprep.subr.mxu0 0.0
    %1557 = vmatpush1.msra.mxu0 %v168
    %1558 = vmatprep.subr.mxu0 0.0
    %1559 = vmatpush1.msra.mxu0 0.0
    %1560 = vmatprep.subr.mxu0 0.0
    %1561 = vmatpush1.msra.mxu0 0.0
    %1562 = vmatprep.subr.mxu0 0.0
    %1563 = vmatpush1.msra.mxu0 0.0
    %1564 = vmatprep.subr.mxu0 0.0
    %1565 = vmatpush1.msra.mxu0 0.0
    %1566 = vmatprep.subr.mxu0 0.0
    %1567 = vmatpush1.msra.mxu0 0.0
    %1568 = vmatprep.subr.mxu0 0.0
    %1569 = vmatpush1.msra.mxu0 0.0
    %1570 = vmatprep.subr.mxu0 0.0
    %1571 = vmatpush1.msra.mxu0 0.0
    %1572 = vmatprep.subr.mxu0 0.0
    %1573 = vmatpush1.msra.mxu0 0.0
    %1574 = vmatprep.subr.mxu0 0.0
    %1575 = vmatpush1.msra.mxu0 0.0
    %1576 = vmatprep.subr.mxu0 0.0
    %1577 = vmatpush1.msra.mxu0 0.0
    %1578 = vmatprep.subr.mxu0 0.0
    %1579 = vmatpush1.msra.mxu0 0.0
    %1580 = vmatprep.subr.mxu0 0.0
    %1581 = vmatpush1.msra.mxu0 0.0
    %1582 = vmatprep.subr.mxu0 0.0
    %1583 = vmatpush1.msra.mxu0 0.0
    %1584 = vmatprep.subr.mxu0 0.0
    %1585 = vmatpush1.msra.mxu0 0.0
    %1586 = vmatprep.subr.mxu0 0.0
    %1587 = vmatpush1.msra.mxu0 0.0
    %1588 = vmatprep.subr.mxu0 0.0
    %1589 = vmatpush1.msra.mxu0 0.0
    %1590 = vmatprep.mubr.f32.mxu0 0.0
    %1591 = vmatmul.mubr.f32.gmra.mrb[0].mxu0 %v1525
    %v1592 = vpop.f32.mrb[0].mxu0
    %v1593 = vadd.f32 0.0, %v1592
    %v1594 = vpop.f32.mrb[0].mxu0
    %1595 = vdwg.mxu0
    %v1596 = vmul.f32 %v1525, %v1525
    %1597 = vmatprep.subr.mxu0 0.0
    %1598 = vmatpush1.msra.mxu0 %v153
    %1599 = vmatprep.subr.mxu0 0.0
    %1600 = vmatpush1.msra.mxu0 %v154
    %1601 = vmatprep.subr.mxu0 0.0
    %1602 = vmatpush1.msra.mxu0 %v155
    %1603 = vmatprep.subr.mxu0 0.0
    %1604 = vmatpush1.msra.mxu0 %v156
    %1605 = vmatprep.subr.mxu0 0.0
    %1606 = vmatpush1.msra.mxu0 %v157
    %1607 = vmatprep.subr.mxu0 0.0
    %1608 = vmatpush1.msra.mxu0 %v158
    %1609 = vmatprep.subr.mxu0 0.0
    %1610 = vmatpush1.msra.mxu0 %v159
    %1611 = vmatprep.subr.mxu0 0.0
    %1612 = vmatpush1.msra.mxu0 %v160
    %1613 = vmatprep.subr.mxu0 0.0
    %1614 = vmatpush1.msra.mxu0 %v161
    %1615 = vmatprep.subr.mxu0 0.0
    %1616 = vmatpush1.msra.mxu0 %v162
    %1617 = vmatprep.subr.mxu0 0.0
    %1618 = vmatpush1.msra.mxu0 %v163
    %1619 = vmatprep.subr.mxu0 0.0
    %1620 = vmatpush1.msra.mxu0 %v164
    %1621 = vmatprep.subr.mxu0 0.0
    %1622 = vmatpush1.msra.mxu0 %v165
    %1623 = vmatprep.subr.mxu0 0.0
    %1624 = vmatpush1.msra.mxu0 %v166
    %1625 = vmatprep.subr.mxu0 0.0
    %1626 = vmatpush1.msra.mxu0 %v167
    %1627 = vmatprep.subr.mxu0 0.0
    %1628 = vmatpush1.msra.mxu0 %v168
    %1629 = vmatprep.subr.mxu0 0.0
    %1630 = vmatpush1.msra.mxu0 0.0
    %1631 = vmatprep.subr.mxu0 0.0
    %1632 = vmatpush1.msra.mxu0 0.0
    %1633 = vmatprep.subr.mxu0 0.0
    %1634 = vmatpush1.msra.mxu0 0.0
    %1635 = vmatprep.subr.mxu0 0.0
    %1636 = vmatpush1.msra.mxu0 0.0
    %1637 = vmatprep.subr.mxu0 0.0
    %1638 = vmatpush1.msra.mxu0 0.0
    %1639 = vmatprep.subr.mxu0 0.0
    %1640 = vmatpush1.msra.mxu0 0.0
    %1641 = vmatprep.subr.mxu0 0.0
    %1642 = vmatpush1.msra.mxu0 0.0
    %1643 = vmatprep.subr.mxu0 0.0
    %1644 = vmatpush1.msra.mxu0 0.0
    %1645 = vmatprep.subr.mxu0 0.0
    %1646 = vmatpush1.msra.mxu0 0.0
    %1647 = vmatprep.subr.mxu0 0.0
    %1648 = vmatpush1.msra.mxu0 0.0
    %1649 = vmatprep.subr.mxu0 0.0
    %1650 = vmatpush1.msra.mxu0 0.0
    %1651 = vmatprep.subr.mxu0 0.0
    %1652 = vmatpush1.msra.mxu0 0.0
    %1653 = vmatprep.subr.mxu0 0.0
    %1654 = vmatpush1.msra.mxu0 0.0
    %1655 = vmatprep.subr.mxu0 0.0
    %1656 = vmatpush1.msra.mxu0 0.0
    %1657 = vmatprep.subr.mxu0 0.0
    %1658 = vmatpush1.msra.mxu0 0.0
    %1659 = vmatprep.subr.mxu0 0.0
    %1660 = vmatpush1.msra.mxu0 0.0
    %1661 = vmatprep.mubr.f32.mxu0 0.0
    %1662 = vmatmul.mubr.f32.gmra.mrb[0].mxu0 %v1596
    %v1663 = vpop.f32.mrb[0].mxu0
    %v1664 = vadd.f32 0.0, %v1663
    %v1665 = vpop.f32.mrb[0].mxu0
    %1666 = vdwg.mxu0
    %v1667 = vmul.f32 %v1593, %v1593
    %v1668 = vsub.f32 %v1664, %v1667
    %v1669 = vsub.f32 %v1525, %v1593
    %v1670 = vadd.f32 %v1668, 1e-05
    %v1671 = vrsqrt.pop %v1670
    %v1672 = vmul.f32 %v1669, %v1671
    %v1673 = vlaneseq
    %v1674 = vshrl.u32 %v1673, 7
    %v1675 = vsub.s32 5, %v1674
    %v1676 = vrot.slane %v148, %v1675
    %v1677 = vmul.f32 %v1672, %v1676
    %v1678 = vlaneseq
    %v1679 = vshrl.u32 %v1678, 7
    %v1680 = vsub.s32 6, %v1679
    %v1681 = vrot.slane %v148, %v1680
    %v1682 = vadd.f32 %v1677, %v1681
    %v1683 = vld [vmem:[#allocation9] sm:$0xff]
    %v1684 = vld [vmem:[#allocation9 + $0x8] sm:$0xff]
    %v1685 = vld [vmem:[#allocation9 + $0x10] sm:$0xff]
    %v1686 = vld [vmem:[#allocation9 + $0x18] sm:$0xff]
    %v1687 = vld [vmem:[#allocation9 + $0x20] sm:$0xff]
    %v1688 = vld [vmem:[#allocation9 + $0x28] sm:$0xff]
    %v1689 = vld [vmem:[#allocation9 + $0x30] sm:$0xff]
    %v1690 = vld [vmem:[#allocation9 + $0x38] sm:$0xff]
    %v1691 = vld [vmem:[#allocation9 + $0x40] sm:$0xff]
    %v1692 = vld [vmem:[#allocation9 + $0x48] sm:$0xff]
    %v1693 = vld [vmem:[#allocation9 + $0x50] sm:$0xff]
    %v1694 = vld [vmem:[#allocation9 + $0x58] sm:$0xff]
    %v1695 = vld [vmem:[#allocation9 + $0x60] sm:$0xff]
    %v1696 = vld [vmem:[#allocation9 + $0x68] sm:$0xff]
    %v1697 = vld [vmem:[#allocation9 + $0x70] sm:$0xff]
    %v1698 = vld [vmem:[#allocation9 + $0x78] sm:$0xff]
    %v1699 = vld [vmem:[#allocation9 + $0x80] sm:$0xff]
    %v1700 = vld [vmem:[#allocation9 + $0x88] sm:$0xff]
    %v1701 = vld [vmem:[#allocation9 + $0x90] sm:$0xff]
    %v1702 = vld [vmem:[#allocation9 + $0x98] sm:$0xff]
    %v1703 = vld [vmem:[#allocation9 + $0xa0] sm:$0xff]
    %v1704 = vld [vmem:[#allocation9 + $0xa8] sm:$0xff]
    %v1705 = vld [vmem:[#allocation9 + $0xb0] sm:$0xff]
    %v1706 = vld [vmem:[#allocation9 + $0xb8] sm:$0xff]
    %v1707 = vld [vmem:[#allocation9 + $0xc0] sm:$0xff]
    %v1708 = vld [vmem:[#allocation9 + $0xc8] sm:$0xff]
    %v1709 = vld [vmem:[#allocation9 + $0xd0] sm:$0xff]
    %v1710 = vld [vmem:[#allocation9 + $0xd8] sm:$0xff]
    %v1711 = vld [vmem:[#allocation9 + $0xe0] sm:$0xff]
    %v1712 = vld [vmem:[#allocation9 + $0xe8] sm:$0xff]
    %v1713 = vld [vmem:[#allocation9 + $0xf0] sm:$0xff]
    %v1714 = vld [vmem:[#allocation9 + $0xf8] sm:$0xff]
    %1715 = vmatprep.subr.mxu0 %v1684
    %1716 = vmatpush1.msra.mxu0 %v1683
    %1717 = vmatprep.subr.mxu0 %v1686
    %1718 = vmatpush1.msra.mxu0 %v1685
    %1719 = vmatprep.subr.mxu0 %v1688
    %1720 = vmatpush1.msra.mxu0 %v1687
    %1721 = vmatprep.subr.mxu0 %v1690
    %1722 = vmatpush1.msra.mxu0 %v1689
    %1723 = vmatprep.subr.mxu0 %v1692
    %1724 = vmatpush1.msra.mxu0 %v1691
    %1725 = vmatprep.subr.mxu0 %v1694
    %1726 = vmatpush1.msra.mxu0 %v1693
    %1727 = vmatprep.subr.mxu0 %v1696
    %1728 = vmatpush1.msra.mxu0 %v1695
    %1729 = vmatprep.subr.mxu0 %v1698
    %1730 = vmatpush1.msra.mxu0 %v1697
    %1731 = vmatprep.subr.mxu0 %v1700
    %1732 = vmatpush1.msra.mxu0 %v1699
    %1733 = vmatprep.subr.mxu0 %v1702
    %1734 = vmatpush1.msra.mxu0 %v1701
    %1735 = vmatprep.subr.mxu0 %v1704
    %1736 = vmatpush1.msra.mxu0 %v1703
    %1737 = vmatprep.subr.mxu0 %v1706
    %1738 = vmatpush1.msra.mxu0 %v1705
    %1739 = vmatprep.subr.mxu0 %v1708
    %1740 = vmatpush1.msra.mxu0 %v1707
    %1741 = vmatprep.subr.mxu0 %v1710
    %1742 = vmatpush1.msra.mxu0 %v1709
    %1743 = vmatprep.subr.mxu0 %v1712
    %1744 = vmatpush1.msra.mxu0 %v1711
    %1745 = vmatprep.subr.mxu0 %v1714
    %1746 = vmatpush1.msra.mxu0 %v1713
    %1747 = vmatprep.subr.mxu0 0.0
    %1748 = vmatpush1.msra.mxu0 0.0
    %1749 = vmatprep.subr.mxu0 0.0
    %1750 = vmatpush1.msra.mxu0 0.0
    %1751 = vmatprep.subr.mxu0 0.0
    %1752 = vmatpush1.msra.mxu0 0.0
    %1753 = vmatprep.subr.mxu0 0.0
    %1754 = vmatpush1.msra.mxu0 0.0
    %1755 = vmatprep.subr.mxu0 0.0
    %1756 = vmatpush1.msra.mxu0 0.0
    %1757 = vmatprep.subr.mxu0 0.0
    %1758 = vmatpush1.msra.mxu0 0.0
    %1759 = vmatprep.subr.mxu0 0.0
    %1760 = vmatpush1.msra.mxu0 0.0
    %1761 = vmatprep.subr.mxu0 0.0
    %1762 = vmatpush1.msra.mxu0 0.0
    %1763 = vmatprep.subr.mxu0 0.0
    %1764 = vmatpush1.msra.mxu0 0.0
    %1765 = vmatprep.subr.mxu0 0.0
    %1766 = vmatpush1.msra.mxu0 0.0
    %1767 = vmatprep.subr.mxu0 0.0
    %1768 = vmatpush1.msra.mxu0 0.0
    %1769 = vmatprep.subr.mxu0 0.0
    %1770 = vmatpush1.msra.mxu0 0.0
    %1771 = vmatprep.subr.mxu0 0.0
    %1772 = vmatpush1.msra.mxu0 0.0
    %1773 = vmatprep.subr.mxu0 0.0
    %1774 = vmatpush1.msra.mxu0 0.0
    %1775 = vmatprep.subr.mxu0 0.0
    %1776 = vmatpush1.msra.mxu0 0.0
    %1777 = vmatprep.subr.mxu0 0.0
    %1778 = vmatpush1.msra.mxu0 0.0
    %1779 = vmatprep.mubr.f32.mxu0 0.0
    %1780 = vmatmul.mubr.f32.gmra.mrb[0].mxu0 %v1682
    %v1781 = vpop.f32.mrb[0].mxu0
    %v1782 = vadd.f32 0.0, %v1781
    %v1783 = vpop.f32.mrb[0].mxu0
    %v1784 = vadd.f32 0.0, %v1783
    %1785 = vdwg.mxu0
    %s1786 = scalar_lea.vmem [#allocation8], 256
    %v1787 = vld [vmem:[%s1786] sm:$0xff]
    %v1788 = vld [vmem:[%s1786 + $0x8] sm:$0xff]
    %v1789 = vld [vmem:[%s1786 + $0x10] sm:$0xff]
    %v1790 = vld [vmem:[%s1786 + $0x18] sm:$0xff]
    %v1791 = vld [vmem:[%s1786 + $0x20] sm:$0xff]
    %v1792 = vld [vmem:[%s1786 + $0x28] sm:$0xff]
    %v1793 = vld [vmem:[%s1786 + $0x30] sm:$0xff]
    %v1794 = vld [vmem:[%s1786 + $0x38] sm:$0xff]
    %v1795 = vld [vmem:[%s1786 + $0x40] sm:$0xff]
    %v1796 = vld [vmem:[%s1786 + $0x48] sm:$0xff]
    %v1797 = vld [vmem:[%s1786 + $0x50] sm:$0xff]
    %v1798 = vld [vmem:[%s1786 + $0x58] sm:$0xff]
    %v1799 = vld [vmem:[%s1786 + $0x60] sm:$0xff]
    %v1800 = vld [vmem:[%s1786 + $0x68] sm:$0xff]
    %v1801 = vld [vmem:[%s1786 + $0x70] sm:$0xff]
    %v1802 = vld [vmem:[%s1786 + $0x78] sm:$0xff]
    %v1803 = vlaneseq
    %v1804 = vshrl.u32 %v1803, 7
    %v1805 = vsub.s32 7, %v1804
    %v1806 = vrot.slane %v148, %v1805
    %1807 = vmatprep.subr.mxu0 0.0
    %1808 = vmatpush1.msra.mxu0 %v1787
    %1809 = vmatprep.subr.mxu0 0.0
    %1810 = vmatpush1.msra.mxu0 %v1788
    %1811 = vmatprep.subr.mxu0 0.0
    %1812 = vmatpush1.msra.mxu0 %v1789
    %1813 = vmatprep.subr.mxu0 0.0
    %1814 = vmatpush1.msra.mxu0 %v1790
    %1815 = vmatprep.subr.mxu0 0.0
    %1816 = vmatpush1.msra.mxu0 %v1791
    %1817 = vmatprep.subr.mxu0 0.0
    %1818 = vmatpush1.msra.mxu0 %v1792
    %1819 = vmatprep.subr.mxu0 0.0
    %1820 = vmatpush1.msra.mxu0 %v1793
    %1821 = vmatprep.subr.mxu0 0.0
    %1822 = vmatpush1.msra.mxu0 %v1794
    %1823 = vmatprep.subr.mxu0 0.0
    %1824 = vmatpush1.msra.mxu0 %v1795
    %1825 = vmatprep.subr.mxu0 0.0
    %1826 = vmatpush1.msra.mxu0 %v1796
    %1827 = vmatprep.subr.mxu0 0.0
    %1828 = vmatpush1.msra.mxu0 %v1797
    %1829 = vmatprep.subr.mxu0 0.0
    %1830 = vmatpush1.msra.mxu0 %v1798
    %1831 = vmatprep.subr.mxu0 0.0
    %1832 = vmatpush1.msra.mxu0 %v1799
    %1833 = vmatprep.subr.mxu0 0.0
    %1834 = vmatpush1.msra.mxu0 %v1800
    %1835 = vmatprep.subr.mxu0 0.0
    %1836 = vmatpush1.msra.mxu0 %v1801
    %1837 = vmatprep.subr.mxu0 0.0
    %1838 = vmatpush1.msra.mxu0 %v1802
    %1839 = vmatprep.subr.mxu0 0.0
    %1840 = vmatpush1.msra.mxu0 0.0
    %1841 = vmatprep.subr.mxu0 0.0
    %1842 = vmatpush1.msra.mxu0 0.0
    %1843 = vmatprep.subr.mxu0 0.0
    %1844 = vmatpush1.msra.mxu0 0.0
    %1845 = vmatprep.subr.mxu0 0.0
    %1846 = vmatpush1.msra.mxu0 0.0
    %1847 = vmatprep.subr.mxu0 0.0
    %1848 = vmatpush1.msra.mxu0 0.0
    %1849 = vmatprep.subr.mxu0 0.0
    %1850 = vmatpush1.msra.mxu0 0.0
    %1851 = vmatprep.subr.mxu0 0.0
    %1852 = vmatpush1.msra.mxu0 0.0
    %1853 = vmatprep.subr.mxu0 0.0
    %1854 = vmatpush1.msra.mxu0 0.0
    %1855 = vmatprep.subr.mxu0 0.0
    %1856 = vmatpush1.msra.mxu0 0.0
    %1857 = vmatprep.subr.mxu0 0.0
    %1858 = vmatpush1.msra.mxu0 0.0
    %1859 = vmatprep.subr.mxu0 0.0
    %1860 = vmatpush1.msra.mxu0 0.0
    %1861 = vmatprep.subr.mxu0 0.0
    %1862 = vmatpush1.msra.mxu0 0.0
    %1863 = vmatprep.subr.mxu0 0.0
    %1864 = vmatpush1.msra.mxu0 0.0
    %1865 = vmatprep.subr.mxu0 0.0
    %1866 = vmatpush1.msra.mxu0 0.0
    %1867 = vmatprep.subr.mxu0 0.0
    %1868 = vmatpush1.msra.mxu0 0.0
    %1869 = vmatprep.subr.mxu0 0.0
    %1870 = vmatpush1.msra.mxu0 0.0
    %1871 = vmatprep.mubr.f32.mxu0 0.0
    %1872 = vmatmul.mubr.f32.gmra.mrb[0].mxu0 %v249
    %v1873 = vpop.f32.mrb[0].mxu0
    %v1874 = vadd.f32 %v1806, %v1873
    %v1875 = vpop.f32.mrb[0].mxu0
    %1876 = vdwg.mxu0
    %v1877 = vadd.f32 %v249, %v1874
    %1878 = vmatprep.subr.mxu0 0.0
    %1879 = vmatpush1.msra.mxu0 %v153
    %1880 = vmatprep.subr.mxu0 0.0
    %1881 = vmatpush1.msra.mxu0 %v154
    %1882 = vmatprep.subr.mxu0 0.0
    %1883 = vmatpush1.msra.mxu0 %v155
    %1884 = vmatprep.subr.mxu0 0.0
    %1885 = vmatpush1.msra.mxu0 %v156
    %1886 = vmatprep.subr.mxu0 0.0
    %1887 = vmatpush1.msra.mxu0 %v157
    %1888 = vmatprep.subr.mxu0 0.0
    %1889 = vmatpush1.msra.mxu0 %v158
    %1890 = vmatprep.subr.mxu0 0.0
    %1891 = vmatpush1.msra.mxu0 %v159
    %1892 = vmatprep.subr.mxu0 0.0
    %1893 = vmatpush1.msra.mxu0 %v160
    %1894 = vmatprep.subr.mxu0 0.0
    %1895 = vmatpush1.msra.mxu0 %v161
    %1896 = vmatprep.subr.mxu0 0.0
    %1897 = vmatpush1.msra.mxu0 %v162
    %1898 = vmatprep.subr.mxu0 0.0
    %1899 = vmatpush1.msra.mxu0 %v163
    %1900 = vmatprep.subr.mxu0 0.0
    %1901 = vmatpush1.msra.mxu0 %v164
    %1902 = vmatprep.subr.mxu0 0.0
    %1903 = vmatpush1.msra.mxu0 %v165
    %1904 = vmatprep.subr.mxu0 0.0
    %1905 = vmatpush1.msra.mxu0 %v166
    %1906 = vmatprep.subr.mxu0 0.0
    %1907 = vmatpush1.msra.mxu0 %v167
    %1908 = vmatprep.subr.mxu0 0.0
    %1909 = vmatpush1.msra.mxu0 %v168
    %1910 = vmatprep.subr.mxu0 0.0
    %1911 = vmatpush1.msra.mxu0 0.0
    %1912 = vmatprep.subr.mxu0 0.0
    %1913 = vmatpush1.msra.mxu0 0.0
    %1914 = vmatprep.subr.mxu0 0.0
    %1915 = vmatpush1.msra.mxu0 0.0
    %1916 = vmatprep.subr.mxu0 0.0
    %1917 = vmatpush1.msra.mxu0 0.0
    %1918 = vmatprep.subr.mxu0 0.0
    %1919 = vmatpush1.msra.mxu0 0.0
    %1920 = vmatprep.subr.mxu0 0.0
    %1921 = vmatpush1.msra.mxu0 0.0
    %1922 = vmatprep.subr.mxu0 0.0
    %1923 = vmatpush1.msra.mxu0 0.0
    %1924 = vmatprep.subr.mxu0 0.0
    %1925 = vmatpush1.msra.mxu0 0.0
    %1926 = vmatprep.subr.mxu0 0.0
    %1927 = vmatpush1.msra.mxu0 0.0
    %1928 = vmatprep.subr.mxu0 0.0
    %1929 = vmatpush1.msra.mxu0 0.0
    %1930 = vmatprep.subr.mxu0 0.0
    %1931 = vmatpush1.msra.mxu0 0.0
    %1932 = vmatprep.subr.mxu0 0.0
    %1933 = vmatpush1.msra.mxu0 0.0
    %1934 = vmatprep.subr.mxu0 0.0
    %1935 = vmatpush1.msra.mxu0 0.0
    %1936 = vmatprep.subr.mxu0 0.0
    %1937 = vmatpush1.msra.mxu0 0.0
    %1938 = vmatprep.subr.mxu0 0.0
    %1939 = vmatpush1.msra.mxu0 0.0
    %1940 = vmatprep.subr.mxu0 0.0
    %1941 = vmatpush1.msra.mxu0 0.0
    %1942 = vmatprep.mubr.f32.mxu0 0.0
    %1943 = vmatmul.mubr.f32.gmra.mrb[0].mxu0 %v1877
    %v1944 = vpop.f32.mrb[0].mxu0
    %v1945 = vadd.f32 0.0, %v1944
    %v1946 = vpop.f32.mrb[0].mxu0
    %1947 = vdwg.mxu0
    %v1948 = vmul.f32 %v1877, %v1877
    %1949 = vmatprep.subr.mxu0 0.0
    %1950 = vmatpush1.msra.mxu0 %v153
    %1951 = vmatprep.subr.mxu0 0.0
    %1952 = vmatpush1.msra.mxu0 %v154
    %1953 = vmatprep.subr.mxu0 0.0
    %1954 = vmatpush1.msra.mxu0 %v155
    %1955 = vmatprep.subr.mxu0 0.0
    %1956 = vmatpush1.msra.mxu0 %v156
    %1957 = vmatprep.subr.mxu0 0.0
    %1958 = vmatpush1.msra.mxu0 %v157
    %1959 = vmatprep.subr.mxu0 0.0
    %1960 = vmatpush1.msra.mxu0 %v158
    %1961 = vmatprep.subr.mxu0 0.0
    %1962 = vmatpush1.msra.mxu0 %v159
    %1963 = vmatprep.subr.mxu0 0.0
    %1964 = vmatpush1.msra.mxu0 %v160
    %1965 = vmatprep.subr.mxu0 0.0
    %1966 = vmatpush1.msra.mxu0 %v161
    %1967 = vmatprep.subr.mxu0 0.0
    %1968 = vmatpush1.msra.mxu0 %v162
    %1969 = vmatprep.subr.mxu0 0.0
    %1970 = vmatpush1.msra.mxu0 %v163
    %1971 = vmatprep.subr.mxu0 0.0
    %1972 = vmatpush1.msra.mxu0 %v164
    %1973 = vmatprep.subr.mxu0 0.0
    %1974 = vmatpush1.msra.mxu0 %v165
    %1975 = vmatprep.subr.mxu0 0.0
    %1976 = vmatpush1.msra.mxu0 %v166
    %1977 = vmatprep.subr.mxu0 0.0
    %1978 = vmatpush1.msra.mxu0 %v167
    %1979 = vmatprep.subr.mxu0 0.0
    %1980 = vmatpush1.msra.mxu0 %v168
    %1981 = vmatprep.subr.mxu0 0.0
    %1982 = vmatpush1.msra.mxu0 0.0
    %1983 = vmatprep.subr.mxu0 0.0
    %1984 = vmatpush1.msra.mxu0 0.0
    %1985 = vmatprep.subr.mxu0 0.0
    %1986 = vmatpush1.msra.mxu0 0.0
    %1987 = vmatprep.subr.mxu0 0.0
    %1988 = vmatpush1.msra.mxu0 0.0
    %1989 = vmatprep.subr.mxu0 0.0
    %1990 = vmatpush1.msra.mxu0 0.0
    %1991 = vmatprep.subr.mxu0 0.0
    %1992 = vmatpush1.msra.mxu0 0.0
    %1993 = vmatprep.subr.mxu0 0.0
    %1994 = vmatpush1.msra.mxu0 0.0
    %1995 = vmatprep.subr.mxu0 0.0
    %1996 = vmatpush1.msra.mxu0 0.0
    %1997 = vmatprep.subr.mxu0 0.0
    %1998 = vmatpush1.msra.mxu0 0.0
    %1999 = vmatprep.subr.mxu0 0.0
    %2000 = vmatpush1.msra.mxu0 0.0
    %2001 = vmatprep.subr.mxu0 0.0
    %2002 = vmatpush1.msra.mxu0 0.0
    %2003 = vmatprep.subr.mxu0 0.0
    %2004 = vmatpush1.msra.mxu0 0.0
    %2005 = vmatprep.subr.mxu0 0.0
    %2006 = vmatpush1.msra.mxu0 0.0
    %2007 = vmatprep.subr.mxu0 0.0
    %2008 = vmatpush1.msra.mxu0 0.0
    %2009 = vmatprep.subr.mxu0 0.0
    %2010 = vmatpush1.msra.mxu0 0.0
    %2011 = vmatprep.subr.mxu0 0.0
    %2012 = vmatpush1.msra.mxu0 0.0
    %2013 = vmatprep.mubr.f32.mxu0 0.0
    %2014 = vmatmul.mubr.f32.gmra.mrb[0].mxu0 %v1948
    %v2015 = vpop.f32.mrb[0].mxu0
    %v2016 = vadd.f32 0.0, %v2015
    %v2017 = vpop.f32.mrb[0].mxu0
    %2018 = vdwg.mxu0
    %v2019 = vmul.f32 %v1945, %v1945
    %v2020 = vsub.f32 %v2016, %v2019
    %v2021 = vsub.f32 %v1877, %v1945
    %v2022 = vadd.f32 %v2020, 1e-05
    %v2023 = vrsqrt.pop %v2022
    %v2024 = vmul.f32 %v2021, %v2023
    %v2025 = vlaneseq
    %v2026 = vshrl.u32 %v2025, 7
    %v2027 = vsub.s32 2, %v2026
    %v2028 = vrot.slane %v149, %v2027
    %v2029 = vmul.f32 %v2024, %v2028
    %v2030 = vlaneseq
    %v2031 = vshrl.u32 %v2030, 7
    %v2032 = vsub.s32 3, %v2031
    %v2033 = vrot.slane %v149, %v2032
    %v2034 = vadd.f32 %v2029, %v2033
    %v2035 = vlaneseq
    %v2036 = vshrl.u32 %v2035, 7
    %v2037 = vsub.s32 0, %v2036
    %v2038 = vrot.slane %v149, %v2037
    %v2039 = vadd.f32 %v1782, %v2038
    %v2040 = vadd.f32 %v2034, %v2039
    %2041 = vmatprep.subr.mxu0 0.0
    %2042 = vmatpush1.msra.mxu0 %v153
    %2043 = vmatprep.subr.mxu0 0.0
    %2044 = vmatpush1.msra.mxu0 %v154
    %2045 = vmatprep.subr.mxu0 0.0
    %2046 = vmatpush1.msra.mxu0 %v155
    %2047 = vmatprep.subr.mxu0 0.0
    %2048 = vmatpush1.msra.mxu0 %v156
    %2049 = vmatprep.subr.mxu0 0.0
    %2050 = vmatpush1.msra.mxu0 %v157
    %2051 = vmatprep.subr.mxu0 0.0
    %2052 = vmatpush1.msra.mxu0 %v158
    %2053 = vmatprep.subr.mxu0 0.0
    %2054 = vmatpush1.msra.mxu0 %v159
    %2055 = vmatprep.subr.mxu0 0.0
    %2056 = vmatpush1.msra.mxu0 %v160
    %2057 = vmatprep.subr.mxu0 0.0
    %2058 = vmatpush1.msra.mxu0 %v161
    %2059 = vmatprep.subr.mxu0 0.0
    %2060 = vmatpush1.msra.mxu0 %v162
    %2061 = vmatprep.subr.mxu0 0.0
    %2062 = vmatpush1.msra.mxu0 %v163
    %2063 = vmatprep.subr.mxu0 0.0
    %2064 = vmatpush1.msra.mxu0 %v164
    %2065 = vmatprep.subr.mxu0 0.0
    %2066 = vmatpush1.msra.mxu0 %v165
    %2067 = vmatprep.subr.mxu0 0.0
    %2068 = vmatpush1.msra.mxu0 %v166
    %2069 = vmatprep.subr.mxu0 0.0
    %2070 = vmatpush1.msra.mxu0 %v167
    %2071 = vmatprep.subr.mxu0 0.0
    %2072 = vmatpush1.msra.mxu0 %v168
    %2073 = vmatprep.subr.mxu0 0.0
    %2074 = vmatpush1.msra.mxu0 0.0
    %2075 = vmatprep.subr.mxu0 0.0
    %2076 = vmatpush1.msra.mxu0 0.0
    %2077 = vmatprep.subr.mxu0 0.0
    %2078 = vmatpush1.msra.mxu0 0.0
    %2079 = vmatprep.subr.mxu0 0.0
    %2080 = vmatpush1.msra.mxu0 0.0
    %2081 = vmatprep.subr.mxu0 0.0
    %2082 = vmatpush1.msra.mxu0 0.0
    %2083 = vmatprep.subr.mxu0 0.0
    %2084 = vmatpush1.msra.mxu0 0.0
    %2085 = vmatprep.subr.mxu0 0.0
    %2086 = vmatpush1.msra.mxu0 0.0
    %2087 = vmatprep.subr.mxu0 0.0
    %2088 = vmatpush1.msra.mxu0 0.0
    %2089 = vmatprep.subr.mxu0 0.0
    %2090 = vmatpush1.msra.mxu0 0.0
    %2091 = vmatprep.subr.mxu0 0.0
    %2092 = vmatpush1.msra.mxu0 0.0
    %2093 = vmatprep.subr.mxu0 0.0
    %2094 = vmatpush1.msra.mxu0 0.0
    %2095 = vmatprep.subr.mxu0 0.0
    %2096 = vmatpush1.msra.mxu0 0.0
    %2097 = vmatprep.subr.mxu0 0.0
    %2098 = vmatpush1.msra.mxu0 0.0
    %2099 = vmatprep.subr.mxu0 0.0
    %2100 = vmatpush1.msra.mxu0 0.0
    %2101 = vmatprep.subr.mxu0 0.0
    %2102 = vmatpush1.msra.mxu0 0.0
    %2103 = vmatprep.subr.mxu0 0.0
    %2104 = vmatpush1.msra.mxu0 0.0
    %2105 = vmatprep.mubr.f32.mxu0 0.0
    %2106 = vmatmul.mubr.f32.gmra.mrb[0].mxu0 %v2040
    %v2107 = vpop.f32.mrb[0].mxu0
    %v2108 = vadd.f32 0.0, %v2107
    %v2109 = vpop.f32.mrb[0].mxu0
    %2110 = vdwg.mxu0
    %v2111 = vmul.f32 %v2040, %v2040
    %2112 = vmatprep.subr.mxu0 0.0
    %2113 = vmatpush1.msra.mxu0 %v153
    %2114 = vmatprep.subr.mxu0 0.0
    %2115 = vmatpush1.msra.mxu0 %v154
    %2116 = vmatprep.subr.mxu0 0.0
    %2117 = vmatpush1.msra.mxu0 %v155
    %2118 = vmatprep.subr.mxu0 0.0
    %2119 = vmatpush1.msra.mxu0 %v156
    %2120 = vmatprep.subr.mxu0 0.0
    %2121 = vmatpush1.msra.mxu0 %v157
    %2122 = vmatprep.subr.mxu0 0.0
    %2123 = vmatpush1.msra.mxu0 %v158
    %2124 = vmatprep.subr.mxu0 0.0
    %2125 = vmatpush1.msra.mxu0 %v159
    %2126 = vmatprep.subr.mxu0 0.0
    %2127 = vmatpush1.msra.mxu0 %v160
    %2128 = vmatprep.subr.mxu0 0.0
    %2129 = vmatpush1.msra.mxu0 %v161
    %2130 = vmatprep.subr.mxu0 0.0
    %2131 = vmatpush1.msra.mxu0 %v162
    %2132 = vmatprep.subr.mxu0 0.0
    %2133 = vmatpush1.msra.mxu0 %v163
    %2134 = vmatprep.subr.mxu0 0.0
    %2135 = vmatpush1.msra.mxu0 %v164
    %2136 = vmatprep.subr.mxu0 0.0
    %2137 = vmatpush1.msra.mxu0 %v165
    %2138 = vmatprep.subr.mxu0 0.0
    %2139 = vmatpush1.msra.mxu0 %v166
    %2140 = vmatprep.subr.mxu0 0.0
    %2141 = vmatpush1.msra.mxu0 %v167
    %2142 = vmatprep.subr.mxu0 0.0
    %2143 = vmatpush1.msra.mxu0 %v168
    %2144 = vmatprep.subr.mxu0 0.0
    %2145 = vmatpush1.msra.mxu0 0.0
    %2146 = vmatprep.subr.mxu0 0.0
    %2147 = vmatpush1.msra.mxu0 0.0
    %2148 = vmatprep.subr.mxu0 0.0
    %2149 = vmatpush1.msra.mxu0 0.0
    %2150 = vmatprep.subr.mxu0 0.0
    %2151 = vmatpush1.msra.mxu0 0.0
    %2152 = vmatprep.subr.mxu0 0.0
    %2153 = vmatpush1.msra.mxu0 0.0
    %2154 = vmatprep.subr.mxu0 0.0
    %2155 = vmatpush1.msra.mxu0 0.0
    %2156 = vmatprep.subr.mxu0 0.0
    %2157 = vmatpush1.msra.mxu0 0.0
    %2158 = vmatprep.subr.mxu0 0.0
    %2159 = vmatpush1.msra.mxu0 0.0
    %2160 = vmatprep.subr.mxu0 0.0
    %2161 = vmatpush1.msra.mxu0 0.0
    %2162 = vmatprep.subr.mxu0 0.0
    %2163 = vmatpush1.msra.mxu0 0.0
    %2164 = vmatprep.subr.mxu0 0.0
    %2165 = vmatpush1.msra.mxu0 0.0
    %2166 = vmatprep.subr.mxu0 0.0
    %2167 = vmatpush1.msra.mxu0 0.0
    %2168 = vmatprep.subr.mxu0 0.0
    %2169 = vmatpush1.msra.mxu0 0.0
    %2170 = vmatprep.subr.mxu0 0.0
    %2171 = vmatpush1.msra.mxu0 0.0
    %2172 = vmatprep.subr.mxu0 0.0
    %2173 = vmatpush1.msra.mxu0 0.0
    %2174 = vmatprep.subr.mxu0 0.0
    %2175 = vmatpush1.msra.mxu0 0.0
    %2176 = vmatprep.mubr.f32.mxu0 0.0
    %2177 = vmatmul.mubr.f32.gmra.mrb[0].mxu0 %v2111
    %v2178 = vpop.f32.mrb[0].mxu0
    %v2179 = vadd.f32 0.0, %v2178
    %v2180 = vpop.f32.mrb[0].mxu0
    %2181 = vdwg.mxu0
    %v2182 = vmul.f32 %v2108, %v2108
    %v2183 = vsub.f32 %v2179, %v2182
    %v2184 = vsub.f32 %v2040, %v2108
    %v2185 = vadd.f32 %v2183, 1e-05
    %v2186 = vrsqrt.pop %v2185
    %v2187 = vmul.f32 %v2184, %v2186
    %v2188 = vlaneseq
    %v2189 = vshrl.u32 %v2188, 7
    %v2190 = vsub.s32 4, %v2189
    %v2191 = vrot.slane %v149, %v2190
    %v2192 = vmul.f32 %v2187, %v2191
    %v2193 = vlaneseq
    %v2194 = vshrl.u32 %v2193, 7
    %v2195 = vsub.s32 5, %v2194
    %v2196 = vrot.slane %v149, %v2195
    %v2197 = vadd.f32 %v2192, %v2196
    %s2198 = scalar_lea.vmem [#allocation11], 512
    %v2199 = vld [vmem:[%s2198] sm:$0xff]
    %v2200 = vld [vmem:[%s2198 + $0x8] sm:$0xff]
    %v2201 = vld [vmem:[%s2198 + $0x10] sm:$0xff]
    %v2202 = vld [vmem:[%s2198 + $0x18] sm:$0xff]
    %v2203 = vld [vmem:[%s2198 + $0x20] sm:$0xff]
    %v2204 = vld [vmem:[%s2198 + $0x28] sm:$0xff]
    %v2205 = vld [vmem:[%s2198 + $0x30] sm:$0xff]
    %v2206 = vld [vmem:[%s2198 + $0x38] sm:$0xff]
    %v2207 = vld [vmem:[%s2198 + $0x40] sm:$0xff]
    %v2208 = vld [vmem:[%s2198 + $0x48] sm:$0xff]
    %v2209 = vld [vmem:[%s2198 + $0x50] sm:$0xff]
    %v2210 = vld [vmem:[%s2198 + $0x58] sm:$0xff]
    %v2211 = vld [vmem:[%s2198 + $0x60] sm:$0xff]
    %v2212 = vld [vmem:[%s2198 + $0x68] sm:$0xff]
    %v2213 = vld [vmem:[%s2198 + $0x70] sm:$0xff]
    %v2214 = vld [vmem:[%s2198 + $0x78] sm:$0xff]
    %v2215 = vld [vmem:[%s2198 + $0x80] sm:$0xff]
    %v2216 = vld [vmem:[%s2198 + $0x88] sm:$0xff]
    %v2217 = vld [vmem:[%s2198 + $0x90] sm:$0xff]
    %v2218 = vld [vmem:[%s2198 + $0x98] sm:$0xff]
    %v2219 = vld [vmem:[%s2198 + $0xa0] sm:$0xff]
    %v2220 = vld [vmem:[%s2198 + $0xa8] sm:$0xff]
    %v2221 = vld [vmem:[%s2198 + $0xb0] sm:$0xff]
    %v2222 = vld [vmem:[%s2198 + $0xb8] sm:$0xff]
    %v2223 = vld [vmem:[%s2198 + $0xc0] sm:$0xff]
    %v2224 = vld [vmem:[%s2198 + $0xc8] sm:$0xff]
    %v2225 = vld [vmem:[%s2198 + $0xd0] sm:$0xff]
    %v2226 = vld [vmem:[%s2198 + $0xd8] sm:$0xff]
    %v2227 = vld [vmem:[%s2198 + $0xe0] sm:$0xff]
    %v2228 = vld [vmem:[%s2198 + $0xe8] sm:$0xff]
    %v2229 = vld [vmem:[%s2198 + $0xf0] sm:$0xff]
    %v2230 = vld [vmem:[%s2198 + $0xf8] sm:$0xff]
    %v2231 = vlaneseq
    %v2232 = vshrl.u32 %v2231, 7
    %v2233 = vsub.s32 2, %v2232
    %v2234 = vrot.slane %v152, %v2233
    %v2235 = vlaneseq
    %v2236 = vshrl.u32 %v2235, 7
    %v2237 = vsub.s32 6, %v2236
    %v2238 = vrot.slane %v152, %v2237
    %v2241 = vlaneseq
    %v2242 = vshrl.u32 %v2241, 7
    %v2243 = vsub.s32 2, %v2242
    %v2244 = vrot.slane %v2234, %v2243
    %v2245 = vlaneseq
    %v2246 = vshrl.u32 %v2245, 7
    %v2247 = vsub.s32 2, %v2246
    %v2248 = vrot.slane %v2238, %v2247
    %2249 = vmatprep.subr.mxu0 %v2200
    %2250 = vmatpush1.msra.mxu0 %v2199
    %2251 = vmatprep.subr.mxu0 %v2202
    %2252 = vmatpush1.msra.mxu0 %v2201
    %2253 = vmatprep.subr.mxu0 %v2204
    %2254 = vmatpush1.msra.mxu0 %v2203
    %2255 = vmatprep.subr.mxu0 %v2206
    %2256 = vmatpush1.msra.mxu0 %v2205
    %2257 = vmatprep.subr.mxu0 %v2208
    %2258 = vmatpush1.msra.mxu0 %v2207
    %2259 = vmatprep.subr.mxu0 %v2210
    %2260 = vmatpush1.msra.mxu0 %v2209
    %2261 = vmatprep.subr.mxu0 %v2212
    %2262 = vmatpush1.msra.mxu0 %v2211
    %2263 = vmatprep.subr.mxu0 %v2214
    %2264 = vmatpush1.msra.mxu0 %v2213
    %2265 = vmatprep.subr.mxu0 %v2216
    %2266 = vmatpush1.msra.mxu0 %v2215
    %2267 = vmatprep.subr.mxu0 %v2218
    %2268 = vmatpush1.msra.mxu0 %v2217
    %2269 = vmatprep.subr.mxu0 %v2220
    %2270 = vmatpush1.msra.mxu0 %v2219
    %2271 = vmatprep.subr.mxu0 %v2222
    %2272 = vmatpush1.msra.mxu0 %v2221
    %2273 = vmatprep.subr.mxu0 %v2224
    %2274 = vmatpush1.msra.mxu0 %v2223
    %2275 = vmatprep.subr.mxu0 %v2226
    %2276 = vmatpush1.msra.mxu0 %v2225
    %2277 = vmatprep.subr.mxu0 %v2228
    %2278 = vmatpush1.msra.mxu0 %v2227
    %2279 = vmatprep.subr.mxu0 %v2230
    %2280 = vmatpush1.msra.mxu0 %v2229
    %2281 = vmatprep.subr.mxu0 0.0
    %2282 = vmatpush1.msra.mxu0 0.0
    %2283 = vmatprep.subr.mxu0 0.0
    %2284 = vmatpush1.msra.mxu0 0.0
    %2285 = vmatprep.subr.mxu0 0.0
    %2286 = vmatpush1.msra.mxu0 0.0
    %2287 = vmatprep.subr.mxu0 0.0
    %2288 = vmatpush1.msra.mxu0 0.0
    %2289 = vmatprep.subr.mxu0 0.0
    %2290 = vmatpush1.msra.mxu0 0.0
    %2291 = vmatprep.subr.mxu0 0.0
    %2292 = vmatpush1.msra.mxu0 0.0
    %2293 = vmatprep.subr.mxu0 0.0
    %2294 = vmatpush1.msra.mxu0 0.0
    %2295 = vmatprep.subr.mxu0 0.0
    %2296 = vmatpush1.msra.mxu0 0.0
    %2297 = vmatprep.subr.mxu0 0.0
    %2298 = vmatpush1.msra.mxu0 0.0
    %2299 = vmatprep.subr.mxu0 0.0
    %2300 = vmatpush1.msra.mxu0 0.0
    %2301 = vmatprep.subr.mxu0 0.0
    %2302 = vmatpush1.msra.mxu0 0.0
    %2303 = vmatprep.subr.mxu0 0.0
    %2304 = vmatpush1.msra.mxu0 0.0
    %2305 = vmatprep.subr.mxu0 0.0
    %2306 = vmatpush1.msra.mxu0 0.0
    %2307 = vmatprep.subr.mxu0 0.0
    %2308 = vmatpush1.msra.mxu0 0.0
    %2309 = vmatprep.subr.mxu0 0.0
    %2310 = vmatpush1.msra.mxu0 0.0
    %2311 = vmatprep.subr.mxu0 0.0
    %2312 = vmatpush1.msra.mxu0 0.0
    %2313 = vmatprep.mubr.f32.mxu0 0.0
    %2314 = vmatmul.mubr.f32.gmra.mrb[0].mxu0 %v2197
    %v2315 = vpop.f32.mrb[0].mxu0
    %v2316 = vadd.f32 %v2244, %v2315
    %v2317 = vpop.f32.mrb[0].mxu0
    %v2318 = vadd.f32 %v2248, %v2317
    %2319 = vdwg.mxu0
    %v2320 = vmax.f32 %v2316, 0.0
    %v2321 = vmax.f32 %v2318, 0.0
    %s2322 = scalar_lea.vmem [#allocation12], 512
    %v2323 = vld [vmem:[%s2322] sm:$0xff]
    %v2324 = vld [vmem:[%s2322 + $0x8] sm:$0xff]
    %v2325 = vld [vmem:[%s2322 + $0x10] sm:$0xff]
    %v2326 = vld [vmem:[%s2322 + $0x18] sm:$0xff]
    %v2327 = vld [vmem:[%s2322 + $0x20] sm:$0xff]
    %v2328 = vld [vmem:[%s2322 + $0x28] sm:$0xff]
    %v2329 = vld [vmem:[%s2322 + $0x30] sm:$0xff]
    %v2330 = vld [vmem:[%s2322 + $0x38] sm:$0xff]
    %v2331 = vld [vmem:[%s2322 + $0x40] sm:$0xff]
    %v2332 = vld [vmem:[%s2322 + $0x48] sm:$0xff]
    %v2333 = vld [vmem:[%s2322 + $0x50] sm:$0xff]
    %v2334 = vld [vmem:[%s2322 + $0x58] sm:$0xff]
    %v2335 = vld [vmem:[%s2322 + $0x60] sm:$0xff]
    %v2336 = vld [vmem:[%s2322 + $0x68] sm:$0xff]
    %v2337 = vld [vmem:[%s2322 + $0x70] sm:$0xff]
    %v2338 = vld [vmem:[%s2322 + $0x78] sm:$0xff]
    %v2339 = vld [vmem:[%s2322 + $0x80] sm:$0xff]
    %v2340 = vld [vmem:[%s2322 + $0x88] sm:$0xff]
    %v2341 = vld [vmem:[%s2322 + $0x90] sm:$0xff]
    %v2342 = vld [vmem:[%s2322 + $0x98] sm:$0xff]
    %v2343 = vld [vmem:[%s2322 + $0xa0] sm:$0xff]
    %v2344 = vld [vmem:[%s2322 + $0xa8] sm:$0xff]
    %v2345 = vld [vmem:[%s2322 + $0xb0] sm:$0xff]
    %v2346 = vld [vmem:[%s2322 + $0xb8] sm:$0xff]
    %v2347 = vld [vmem:[%s2322 + $0xc0] sm:$0xff]
    %v2348 = vld [vmem:[%s2322 + $0xc8] sm:$0xff]
    %v2349 = vld [vmem:[%s2322 + $0xd0] sm:$0xff]
    %v2350 = vld [vmem:[%s2322 + $0xd8] sm:$0xff]
    %v2351 = vld [vmem:[%s2322 + $0xe0] sm:$0xff]
    %v2352 = vld [vmem:[%s2322 + $0xe8] sm:$0xff]
    %v2353 = vld [vmem:[%s2322 + $0xf0] sm:$0xff]
    %v2354 = vld [vmem:[%s2322 + $0xf8] sm:$0xff]
    %v2355 = vlaneseq
    %v2356 = vshrl.u32 %v2355, 7
    %v2357 = vsub.s32 1, %v2356
    %v2358 = vrot.slane %v149, %v2357
    %2359 = vmatprep.subr.mxu0 0.0
    %2360 = vmatpush1.msra.mxu0 %v2323
    %2361 = vmatprep.subr.mxu0 0.0
    %2362 = vmatpush1.msra.mxu0 %v2324
    %2363 = vmatprep.subr.mxu0 0.0
    %2364 = vmatpush1.msra.mxu0 %v2325
    %2365 = vmatprep.subr.mxu0 0.0
    %2366 = vmatpush1.msra.mxu0 %v2326
    %2367 = vmatprep.subr.mxu0 0.0
    %2368 = vmatpush1.msra.mxu0 %v2327
    %2369 = vmatprep.subr.mxu0 0.0
    %2370 = vmatpush1.msra.mxu0 %v2328
    %2371 = vmatprep.subr.mxu0 0.0
    %2372 = vmatpush1.msra.mxu0 %v2329
    %2373 = vmatprep.subr.mxu0 0.0
    %2374 = vmatpush1.msra.mxu0 %v2330
    %2375 = vmatprep.subr.mxu0 0.0
    %2376 = vmatpush1.msra.mxu0 %v2331
    %2377 = vmatprep.subr.mxu0 0.0
    %2378 = vmatpush1.msra.mxu0 %v2332
    %2379 = vmatprep.subr.mxu0 0.0
    %2380 = vmatpush1.msra.mxu0 %v2333
    %2381 = vmatprep.subr.mxu0 0.0
    %2382 = vmatpush1.msra.mxu0 %v2334
    %2383 = vmatprep.subr.mxu0 0.0
    %2384 = vmatpush1.msra.mxu0 %v2335
    %2385 = vmatprep.subr.mxu0 0.0
    %2386 = vmatpush1.msra.mxu0 %v2336
    %2387 = vmatprep.subr.mxu0 0.0
    %2388 = vmatpush1.msra.mxu0 %v2337
    %2389 = vmatprep.subr.mxu0 0.0
    %2390 = vmatpush1.msra.mxu0 %v2338
    %2391 = vmatprep.subr.mxu0 0.0
    %2392 = vmatpush1.msra.mxu0 %v2339
    %2393 = vmatprep.subr.mxu0 0.0
    %2394 = vmatpush1.msra.mxu0 %v2340
    %2395 = vmatprep.subr.mxu0 0.0
    %2396 = vmatpush1.msra.mxu0 %v2341
    %2397 = vmatprep.subr.mxu0 0.0
    %2398 = vmatpush1.msra.mxu0 %v2342
    %2399 = vmatprep.subr.mxu0 0.0
    %2400 = vmatpush1.msra.mxu0 %v2343
    %2401 = vmatprep.subr.mxu0 0.0
    %2402 = vmatpush1.msra.mxu0 %v2344
    %2403 = vmatprep.subr.mxu0 0.0
    %2404 = vmatpush1.msra.mxu0 %v2345
    %2405 = vmatprep.subr.mxu0 0.0
    %2406 = vmatpush1.msra.mxu0 %v2346
    %2407 = vmatprep.subr.mxu0 0.0
    %2408 = vmatpush1.msra.mxu0 %v2347
    %2409 = vmatprep.subr.mxu0 0.0
    %2410 = vmatpush1.msra.mxu0 %v2348
    %2411 = vmatprep.subr.mxu0 0.0
    %2412 = vmatpush1.msra.mxu0 %v2349
    %2413 = vmatprep.subr.mxu0 0.0
    %2414 = vmatpush1.msra.mxu0 %v2350
    %2415 = vmatprep.subr.mxu0 0.0
    %2416 = vmatpush1.msra.mxu0 %v2351
    %2417 = vmatprep.subr.mxu0 0.0
    %2418 = vmatpush1.msra.mxu0 %v2352
    %2419 = vmatprep.subr.mxu0 0.0
    %2420 = vmatpush1.msra.mxu0 %v2353
    %2421 = vmatprep.subr.mxu0 0.0
    %2422 = vmatpush1.msra.mxu0 %v2354
    %2423 = vmatprep.mubr.f32.mxu0 %v2321
    %2424 = vmatmul.mubr.f32.gmra.mrb[0].mxu0 %v2320
    %v2425 = vpop.f32.mrb[0].mxu0
    %v2426 = vadd.f32 %v2358, %v2425
    %v2427 = vpop.f32.mrb[0].mxu0
    %2428 = vdwg.mxu0
    %v2429 = vadd.f32 %v2197, %v2426
    %2430 = vmatprep.subr.mxu0 0.0
    %2431 = vmatpush1.msra.mxu0 %v153
    %2432 = vmatprep.subr.mxu0 0.0
    %2433 = vmatpush1.msra.mxu0 %v154
    %2434 = vmatprep.subr.mxu0 0.0
    %2435 = vmatpush1.msra.mxu0 %v155
    %2436 = vmatprep.subr.mxu0 0.0
    %2437 = vmatpush1.msra.mxu0 %v156
    %2438 = vmatprep.subr.mxu0 0.0
    %2439 = vmatpush1.msra.mxu0 %v157
    %2440 = vmatprep.subr.mxu0 0.0
    %2441 = vmatpush1.msra.mxu0 %v158
    %2442 = vmatprep.subr.mxu0 0.0
    %2443 = vmatpush1.msra.mxu0 %v159
    %2444 = vmatprep.subr.mxu0 0.0
    %2445 = vmatpush1.msra.mxu0 %v160
    %2446 = vmatprep.subr.mxu0 0.0
    %2447 = vmatpush1.msra.mxu0 %v161
    %2448 = vmatprep.subr.mxu0 0.0
    %2449 = vmatpush1.msra.mxu0 %v162
    %2450 = vmatprep.subr.mxu0 0.0
    %2451 = vmatpush1.msra.mxu0 %v163
    %2452 = vmatprep.subr.mxu0 0.0
    %2453 = vmatpush1.msra.mxu0 %v164
    %2454 = vmatprep.subr.mxu0 0.0
    %2455 = vmatpush1.msra.mxu0 %v165
    %2456 = vmatprep.subr.mxu0 0.0
    %2457 = vmatpush1.msra.mxu0 %v166
    %2458 = vmatprep.subr.mxu0 0.0
    %2459 = vmatpush1.msra.mxu0 %v167
    %2460 = vmatprep.subr.mxu0 0.0
    %2461 = vmatpush1.msra.mxu0 %v168
    %2462 = vmatprep.subr.mxu0 0.0
    %2463 = vmatpush1.msra.mxu0 0.0
    %2464 = vmatprep.subr.mxu0 0.0
    %2465 = vmatpush1.msra.mxu0 0.0
    %2466 = vmatprep.subr.mxu0 0.0
    %2467 = vmatpush1.msra.mxu0 0.0
    %2468 = vmatprep.subr.mxu0 0.0
    %2469 = vmatpush1.msra.mxu0 0.0
    %2470 = vmatprep.subr.mxu0 0.0
    %2471 = vmatpush1.msra.mxu0 0.0
    %2472 = vmatprep.subr.mxu0 0.0
    %2473 = vmatpush1.msra.mxu0 0.0
    %2474 = vmatprep.subr.mxu0 0.0
    %2475 = vmatpush1.msra.mxu0 0.0
    %2476 = vmatprep.subr.mxu0 0.0
    %2477 = vmatpush1.msra.mxu0 0.0
    %2478 = vmatprep.subr.mxu0 0.0
    %2479 = vmatpush1.msra.mxu0 0.0
    %2480 = vmatprep.subr.mxu0 0.0
    %2481 = vmatpush1.msra.mxu0 0.0
    %2482 = vmatprep.subr.mxu0 0.0
    %2483 = vmatpush1.msra.mxu0 0.0
    %2484 = vmatprep.subr.mxu0 0.0
    %2485 = vmatpush1.msra.mxu0 0.0
    %2486 = vmatprep.subr.mxu0 0.0
    %2487 = vmatpush1.msra.mxu0 0.0
    %2488 = vmatprep.subr.mxu0 0.0
    %2489 = vmatpush1.msra.mxu0 0.0
    %2490 = vmatprep.subr.mxu0 0.0
    %2491 = vmatpush1.msra.mxu0 0.0
    %2492 = vmatprep.subr.mxu0 0.0
    %2493 = vmatpush1.msra.mxu0 0.0
    %2494 = vmatprep.mubr.f32.mxu0 0.0
    %2495 = vmatmul.mubr.f32.gmra.mrb[0].mxu0 %v2429
    %v2496 = vpop.f32.mrb[0].mxu0
    %v2497 = vadd.f32 0.0, %v2496
    %v2498 = vpop.f32.mrb[0].mxu0
    %2499 = vdwg.mxu0
    %v2500 = vmul.f32 %v2429, %v2429
    %2501 = vmatprep.subr.mxu0 0.0
    %2502 = vmatpush1.msra.mxu0 %v153
    %2503 = vmatprep.subr.mxu0 0.0
    %2504 = vmatpush1.msra.mxu0 %v154
    %2505 = vmatprep.subr.mxu0 0.0
    %2506 = vmatpush1.msra.mxu0 %v155
    %2507 = vmatprep.subr.mxu0 0.0
    %2508 = vmatpush1.msra.mxu0 %v156
    %2509 = vmatprep.subr.mxu0 0.0
    %2510 = vmatpush1.msra.mxu0 %v157
    %2511 = vmatprep.subr.mxu0 0.0
    %2512 = vmatpush1.msra.mxu0 %v158
    %2513 = vmatprep.subr.mxu0 0.0
    %2514 = vmatpush1.msra.mxu0 %v159
    %2515 = vmatprep.subr.mxu0 0.0
    %2516 = vmatpush1.msra.mxu0 %v160
    %2517 = vmatprep.subr.mxu0 0.0
    %2518 = vmatpush1.msra.mxu0 %v161
    %2519 = vmatprep.subr.mxu0 0.0
    %2520 = vmatpush1.msra.mxu0 %v162
    %2521 = vmatprep.subr.mxu0 0.0
    %2522 = vmatpush1.msra.mxu0 %v163
    %2523 = vmatprep.subr.mxu0 0.0
    %2524 = vmatpush1.msra.mxu0 %v164
    %2525 = vmatprep.subr.mxu0 0.0
    %2526 = vmatpush1.msra.mxu0 %v165
    %2527 = vmatprep.subr.mxu0 0.0
    %2528 = vmatpush1.msra.mxu0 %v166
    %2529 = vmatprep.subr.mxu0 0.0
    %2530 = vmatpush1.msra.mxu0 %v167
    %2531 = vmatprep.subr.mxu0 0.0
    %2532 = vmatpush1.msra.mxu0 %v168
    %2533 = vmatprep.subr.mxu0 0.0
    %2534 = vmatpush1.msra.mxu0 0.0
    %2535 = vmatprep.subr.mxu0 0.0
    %2536 = vmatpush1.msra.mxu0 0.0
    %2537 = vmatprep.subr.mxu0 0.0
    %2538 = vmatpush1.msra.mxu0 0.0
    %2539 = vmatprep.subr.mxu0 0.0
    %2540 = vmatpush1.msra.mxu0 0.0
    %2541 = vmatprep.subr.mxu0 0.0
    %2542 = vmatpush1.msra.mxu0 0.0
    %2543 = vmatprep.subr.mxu0 0.0
    %2544 = vmatpush1.msra.mxu0 0.0
    %2545 = vmatprep.subr.mxu0 0.0
    %2546 = vmatpush1.msra.mxu0 0.0
    %2547 = vmatprep.subr.mxu0 0.0
    %2548 = vmatpush1.msra.mxu0 0.0
    %2549 = vmatprep.subr.mxu0 0.0
    %2550 = vmatpush1.msra.mxu0 0.0
    %2551 = vmatprep.subr.mxu0 0.0
    %2552 = vmatpush1.msra.mxu0 0.0
    %2553 = vmatprep.subr.mxu0 0.0
    %2554 = vmatpush1.msra.mxu0 0.0
    %2555 = vmatprep.subr.mxu0 0.0
    %2556 = vmatpush1.msra.mxu0 0.0
    %2557 = vmatprep.subr.mxu0 0.0
    %2558 = vmatpush1.msra.mxu0 0.0
    %2559 = vmatprep.subr.mxu0 0.0
    %2560 = vmatpush1.msra.mxu0 0.0
    %2561 = vmatprep.subr.mxu0 0.0
    %2562 = vmatpush1.msra.mxu0 0.0
    %2563 = vmatprep.subr.mxu0 0.0
    %2564 = vmatpush1.msra.mxu0 0.0
    %2565 = vmatprep.mubr.f32.mxu0 0.0
    %2566 = vmatmul.mubr.f32.gmra.mrb[0].mxu0 %v2500
    %v2567 = vpop.f32.mrb[0].mxu0
    %v2568 = vadd.f32 0.0, %v2567
    %v2569 = vpop.f32.mrb[0].mxu0
    %2570 = vdwg.mxu0
    %v2571 = vmul.f32 %v2497, %v2497
    %v2572 = vsub.f32 %v2568, %v2571
    %v2573 = vsub.f32 %v2429, %v2497
    %v2574 = vadd.f32 %v2572, 1e-05
    %v2575 = vrsqrt.pop %v2574
    %v2576 = vmul.f32 %v2573, %v2575
    %v2577 = vlaneseq
    %v2578 = vshrl.u32 %v2577, 7
    %v2579 = vsub.s32 6, %v2578
    %v2580 = vrot.slane %v149, %v2579
    %v2581 = vmul.f32 %v2576, %v2580
    %v2582 = vlaneseq
    %v2583 = vshrl.u32 %v2582, 7
    %v2584 = vsub.s32 7, %v2583
    %v2585 = vrot.slane %v149, %v2584
    %v2586 = vadd.f32 %v2581, %v2585
    %s2587 = scalar_lea.vmem [#allocation8], 384
    %v2588 = vld [vmem:[%s2587] sm:$0xff]
    %v2589 = vld [vmem:[%s2587 + $0x8] sm:$0xff]
    %v2590 = vld [vmem:[%s2587 + $0x10] sm:$0xff]
    %v2591 = vld [vmem:[%s2587 + $0x18] sm:$0xff]
    %v2592 = vld [vmem:[%s2587 + $0x20] sm:$0xff]
    %v2593 = vld [vmem:[%s2587 + $0x28] sm:$0xff]
    %v2594 = vld [vmem:[%s2587 + $0x30] sm:$0xff]
    %v2595 = vld [vmem:[%s2587 + $0x38] sm:$0xff]
    %v2596 = vld [vmem:[%s2587 + $0x40] sm:$0xff]
    %v2597 = vld [vmem:[%s2587 + $0x48] sm:$0xff]
    %v2598 = vld [vmem:[%s2587 + $0x50] sm:$0xff]
    %v2599 = vld [vmem:[%s2587 + $0x58] sm:$0xff]
    %v2600 = vld [vmem:[%s2587 + $0x60] sm:$0xff]
    %v2601 = vld [vmem:[%s2587 + $0x68] sm:$0xff]
    %v2602 = vld [vmem:[%s2587 + $0x70] sm:$0xff]
    %v2603 = vld [vmem:[%s2587 + $0x78] sm:$0xff]
    %v2604 = vlaneseq
    %v2605 = vshrl.u32 %v2604, 7
    %v2606 = vsub.s32 0, %v2605
    %v2607 = vrot.slane %v150, %v2606
    %2608 = vmatprep.subr.mxu0 0.0
    %2609 = vmatpush1.msra.mxu0 %v2588
    %2610 = vmatprep.subr.mxu0 0.0
    %2611 = vmatpush1.msra.mxu0 %v2589
    %2612 = vmatprep.subr.mxu0 0.0
    %2613 = vmatpush1.msra.mxu0 %v2590
    %2614 = vmatprep.subr.mxu0 0.0
    %2615 = vmatpush1.msra.mxu0 %v2591
    %2616 = vmatprep.subr.mxu0 0.0
    %2617 = vmatpush1.msra.mxu0 %v2592
    %2618 = vmatprep.subr.mxu0 0.0
    %2619 = vmatpush1.msra.mxu0 %v2593
    %2620 = vmatprep.subr.mxu0 0.0
    %2621 = vmatpush1.msra.mxu0 %v2594
    %2622 = vmatprep.subr.mxu0 0.0
    %2623 = vmatpush1.msra.mxu0 %v2595
    %2624 = vmatprep.subr.mxu0 0.0
    %2625 = vmatpush1.msra.mxu0 %v2596
    %2626 = vmatprep.subr.mxu0 0.0
    %2627 = vmatpush1.msra.mxu0 %v2597
    %2628 = vmatprep.subr.mxu0 0.0
    %2629 = vmatpush1.msra.mxu0 %v2598
    %2630 = vmatprep.subr.mxu0 0.0
    %2631 = vmatpush1.msra.mxu0 %v2599
    %2632 = vmatprep.subr.mxu0 0.0
    %2633 = vmatpush1.msra.mxu0 %v2600
    %2634 = vmatprep.subr.mxu0 0.0
    %2635 = vmatpush1.msra.mxu0 %v2601
    %2636 = vmatprep.subr.mxu0 0.0
    %2637 = vmatpush1.msra.mxu0 %v2602
    %2638 = vmatprep.subr.mxu0 0.0
    %2639 = vmatpush1.msra.mxu0 %v2603
    %2640 = vmatprep.subr.mxu0 0.0
    %2641 = vmatpush1.msra.mxu0 0.0
    %2642 = vmatprep.subr.mxu0 0.0
    %2643 = vmatpush1.msra.mxu0 0.0
    %2644 = vmatprep.subr.mxu0 0.0
    %2645 = vmatpush1.msra.mxu0 0.0
    %2646 = vmatprep.subr.mxu0 0.0
    %2647 = vmatpush1.msra.mxu0 0.0
    %2648 = vmatprep.subr.mxu0 0.0
    %2649 = vmatpush1.msra.mxu0 0.0
    %2650 = vmatprep.subr.mxu0 0.0
    %2651 = vmatpush1.msra.mxu0 0.0
    %2652 = vmatprep.subr.mxu0 0.0
    %2653 = vmatpush1.msra.mxu0 0.0
    %2654 = vmatprep.subr.mxu0 0.0
    %2655 = vmatpush1.msra.mxu0 0.0
    %2656 = vmatprep.subr.mxu0 0.0
    %2657 = vmatpush1.msra.mxu0 0.0
    %2658 = vmatprep.subr.mxu0 0.0
    %2659 = vmatpush1.msra.mxu0 0.0
    %2660 = vmatprep.subr.mxu0 0.0
    %2661 = vmatpush1.msra.mxu0 0.0
    %2662 = vmatprep.subr.mxu0 0.0
    %2663 = vmatpush1.msra.mxu0 0.0
    %2664 = vmatprep.subr.mxu0 0.0
    %2665 = vmatpush1.msra.mxu0 0.0
    %2666 = vmatprep.subr.mxu0 0.0
    %2667 = vmatpush1.msra.mxu0 0.0
    %2668 = vmatprep.subr.mxu0 0.0
    %2669 = vmatpush1.msra.mxu0 0.0
    %2670 = vmatprep.subr.mxu0 0.0
    %2671 = vmatpush1.msra.mxu0 0.0
    %2672 = vmatprep.mubr.f32.mxu0 0.0
    %2673 = vmatmul.mubr.f32.gmra.mrb[0].mxu0 %v2586
    %v2674 = vpop.f32.mrb[0].mxu0
    %v2675 = vadd.f32 %v2607, %v2674
    %v2676 = vpop.f32.mrb[0].mxu0
    %2677 = vdwg.mxu0
    %v2678 = vadd.f32 %v2586, %v2675
    %2679 = vmatprep.subr.mxu0 0.0
    %2680 = vmatpush1.msra.mxu0 %v153
    %2681 = vmatprep.subr.mxu0 0.0
    %2682 = vmatpush1.msra.mxu0 %v154
    %2683 = vmatprep.subr.mxu0 0.0
    %2684 = vmatpush1.msra.mxu0 %v155
    %2685 = vmatprep.subr.mxu0 0.0
    %2686 = vmatpush1.msra.mxu0 %v156
    %2687 = vmatprep.subr.mxu0 0.0
    %2688 = vmatpush1.msra.mxu0 %v157
    %2689 = vmatprep.subr.mxu0 0.0
    %2690 = vmatpush1.msra.mxu0 %v158
    %2691 = vmatprep.subr.mxu0 0.0
    %2692 = vmatpush1.msra.mxu0 %v159
    %2693 = vmatprep.subr.mxu0 0.0
    %2694 = vmatpush1.msra.mxu0 %v160
    %2695 = vmatprep.subr.mxu0 0.0
    %2696 = vmatpush1.msra.mxu0 %v161
    %2697 = vmatprep.subr.mxu0 0.0
    %2698 = vmatpush1.msra.mxu0 %v162
    %2699 = vmatprep.subr.mxu0 0.0
    %2700 = vmatpush1.msra.mxu0 %v163
    %2701 = vmatprep.subr.mxu0 0.0
    %2702 = vmatpush1.msra.mxu0 %v164
    %2703 = vmatprep.subr.mxu0 0.0
    %2704 = vmatpush1.msra.mxu0 %v165
    %2705 = vmatprep.subr.mxu0 0.0
    %2706 = vmatpush1.msra.mxu0 %v166
    %2707 = vmatprep.subr.mxu0 0.0
    %2708 = vmatpush1.msra.mxu0 %v167
    %2709 = vmatprep.subr.mxu0 0.0
    %2710 = vmatpush1.msra.mxu0 %v168
    %2711 = vmatprep.subr.mxu0 0.0
    %2712 = vmatpush1.msra.mxu0 0.0
    %2713 = vmatprep.subr.mxu0 0.0
    %2714 = vmatpush1.msra.mxu0 0.0
    %2715 = vmatprep.subr.mxu0 0.0
    %2716 = vmatpush1.msra.mxu0 0.0
    %2717 = vmatprep.subr.mxu0 0.0
    %2718 = vmatpush1.msra.mxu0 0.0
    %2719 = vmatprep.subr.mxu0 0.0
    %2720 = vmatpush1.msra.mxu0 0.0
    %2721 = vmatprep.subr.mxu0 0.0
    %2722 = vmatpush1.msra.mxu0 0.0
    %2723 = vmatprep.subr.mxu0 0.0
    %2724 = vmatpush1.msra.mxu0 0.0
    %2725 = vmatprep.subr.mxu0 0.0
    %2726 = vmatpush1.msra.mxu0 0.0
    %2727 = vmatprep.subr.mxu0 0.0
    %2728 = vmatpush1.msra.mxu0 0.0
    %2729 = vmatprep.subr.mxu0 0.0
    %2730 = vmatpush1.msra.mxu0 0.0
    %2731 = vmatprep.subr.mxu0 0.0
    %2732 = vmatpush1.msra.mxu0 0.0
    %2733 = vmatprep.subr.mxu0 0.0
    %2734 = vmatpush1.msra.mxu0 0.0
    %2735 = vmatprep.subr.mxu0 0.0
    %2736 = vmatpush1.msra.mxu0 0.0
    %2737 = vmatprep.subr.mxu0 0.0
    %2738 = vmatpush1.msra.mxu0 0.0
    %2739 = vmatprep.subr.mxu0 0.0
    %2740 = vmatpush1.msra.mxu0 0.0
    %2741 = vmatprep.subr.mxu0 0.0
    %2742 = vmatpush1.msra.mxu0 0.0
    %2743 = vmatprep.mubr.f32.mxu0 0.0
    %2744 = vmatmul.mubr.f32.gmra.mrb[0].mxu0 %v2678
    %v2745 = vpop.f32.mrb[0].mxu0
    %v2746 = vadd.f32 0.0, %v2745
    %v2747 = vpop.f32.mrb[0].mxu0
    %2748 = vdwg.mxu0
    %v2749 = vmul.f32 %v2678, %v2678
    %2750 = vmatprep.subr.mxu0 0.0
    %2751 = vmatpush1.msra.mxu0 %v153
    %2752 = vmatprep.subr.mxu0 0.0
    %2753 = vmatpush1.msra.mxu0 %v154
    %2754 = vmatprep.subr.mxu0 0.0
    %2755 = vmatpush1.msra.mxu0 %v155
    %2756 = vmatprep.subr.mxu0 0.0
    %2757 = vmatpush1.msra.mxu0 %v156
    %2758 = vmatprep.subr.mxu0 0.0
    %2759 = vmatpush1.msra.mxu0 %v157
    %2760 = vmatprep.subr.mxu0 0.0
    %2761 = vmatpush1.msra.mxu0 %v158
    %2762 = vmatprep.subr.mxu0 0.0
    %2763 = vmatpush1.msra.mxu0 %v159
    %2764 = vmatprep.subr.mxu0 0.0
    %2765 = vmatpush1.msra.mxu0 %v160
    %2766 = vmatprep.subr.mxu0 0.0
    %2767 = vmatpush1.msra.mxu0 %v161
    %2768 = vmatprep.subr.mxu0 0.0
    %2769 = vmatpush1.msra.mxu0 %v162
    %2770 = vmatprep.subr.mxu0 0.0
    %2771 = vmatpush1.msra.mxu0 %v163
    %2772 = vmatprep.subr.mxu0 0.0
    %2773 = vmatpush1.msra.mxu0 %v164
    %2774 = vmatprep.subr.mxu0 0.0
    %2775 = vmatpush1.msra.mxu0 %v165
    %2776 = vmatprep.subr.mxu0 0.0
    %2777 = vmatpush1.msra.mxu0 %v166
    %2778 = vmatprep.subr.mxu0 0.0
    %2779 = vmatpush1.msra.mxu0 %v167
    %2780 = vmatprep.subr.mxu0 0.0
    %2781 = vmatpush1.msra.mxu0 %v168
    %2782 = vmatprep.subr.mxu0 0.0
    %2783 = vmatpush1.msra.mxu0 0.0
    %2784 = vmatprep.subr.mxu0 0.0
    %2785 = vmatpush1.msra.mxu0 0.0
    %2786 = vmatprep.subr.mxu0 0.0
    %2787 = vmatpush1.msra.mxu0 0.0
    %2788 = vmatprep.subr.mxu0 0.0
    %2789 = vmatpush1.msra.mxu0 0.0
    %2790 = vmatprep.subr.mxu0 0.0
    %2791 = vmatpush1.msra.mxu0 0.0
    %2792 = vmatprep.subr.mxu0 0.0
    %2793 = vmatpush1.msra.mxu0 0.0
    %2794 = vmatprep.subr.mxu0 0.0
    %2795 = vmatpush1.msra.mxu0 0.0
    %2796 = vmatprep.subr.mxu0 0.0
    %2797 = vmatpush1.msra.mxu0 0.0
    %2798 = vmatprep.subr.mxu0 0.0
    %2799 = vmatpush1.msra.mxu0 0.0
    %2800 = vmatprep.subr.mxu0 0.0
    %2801 = vmatpush1.msra.mxu0 0.0
    %2802 = vmatprep.subr.mxu0 0.0
    %2803 = vmatpush1.msra.mxu0 0.0
    %2804 = vmatprep.subr.mxu0 0.0
    %2805 = vmatpush1.msra.mxu0 0.0
    %2806 = vmatprep.subr.mxu0 0.0
    %2807 = vmatpush1.msra.mxu0 0.0
    %2808 = vmatprep.subr.mxu0 0.0
    %2809 = vmatpush1.msra.mxu0 0.0
    %2810 = vmatprep.subr.mxu0 0.0
    %2811 = vmatpush1.msra.mxu0 0.0
    %2812 = vmatprep.subr.mxu0 0.0
    %2813 = vmatpush1.msra.mxu0 0.0
    %2814 = vmatprep.mubr.f32.mxu0 0.0
    %2815 = vmatmul.mubr.f32.gmra.mrb[0].mxu0 %v2749
    %v2816 = vpop.f32.mrb[0].mxu0
    %v2817 = vadd.f32 0.0, %v2816
    %v2818 = vpop.f32.mrb[0].mxu0
    %2819 = vdwg.mxu0
    %v2820 = vmul.f32 %v2746, %v2746
    %v2821 = vsub.f32 %v2817, %v2820
    %v2822 = vsub.f32 %v2678, %v2746
    %v2823 = vadd.f32 %v2821, 1e-05
    %v2824 = vrsqrt.pop %v2823
    %v2825 = vmul.f32 %v2822, %v2824
    %v2826 = vlaneseq
    %v2827 = vshrl.u32 %v2826, 7
    %v2828 = vsub.s32 3, %v2827
    %v2829 = vrot.slane %v150, %v2828
    %v2830 = vmul.f32 %v2825, %v2829
    %v2831 = vlaneseq
    %v2832 = vshrl.u32 %v2831, 7
    %v2833 = vsub.s32 4, %v2832
    %v2834 = vrot.slane %v150, %v2833
    %v2835 = vadd.f32 %v2830, %v2834
    %v2836 = vlaneseq
    %v2837 = vshrl.u32 %v2836, 7
    %v2838 = vsub.s32 1, %v2837
    %v2839 = vrot.slane %v150, %v2838
    %v2840 = vadd.f32 %v1784, %v2839
    %v2841 = vadd.f32 %v2835, %v2840
    %2842 = vmatprep.subr.mxu0 0.0
    %2843 = vmatpush1.msra.mxu0 %v153
    %2844 = vmatprep.subr.mxu0 0.0
    %2845 = vmatpush1.msra.mxu0 %v154
    %2846 = vmatprep.subr.mxu0 0.0
    %2847 = vmatpush1.msra.mxu0 %v155
    %2848 = vmatprep.subr.mxu0 0.0
    %2849 = vmatpush1.msra.mxu0 %v156
    %2850 = vmatprep.subr.mxu0 0.0
    %2851 = vmatpush1.msra.mxu0 %v157
    %2852 = vmatprep.subr.mxu0 0.0
    %2853 = vmatpush1.msra.mxu0 %v158
    %2854 = vmatprep.subr.mxu0 0.0
    %2855 = vmatpush1.msra.mxu0 %v159
    %2856 = vmatprep.subr.mxu0 0.0
    %2857 = vmatpush1.msra.mxu0 %v160
    %2858 = vmatprep.subr.mxu0 0.0
    %2859 = vmatpush1.msra.mxu0 %v161
    %2860 = vmatprep.subr.mxu0 0.0
    %2861 = vmatpush1.msra.mxu0 %v162
    %2862 = vmatprep.subr.mxu0 0.0
    %2863 = vmatpush1.msra.mxu0 %v163
    %2864 = vmatprep.subr.mxu0 0.0
    %2865 = vmatpush1.msra.mxu0 %v164
    %2866 = vmatprep.subr.mxu0 0.0
    %2867 = vmatpush1.msra.mxu0 %v165
    %2868 = vmatprep.subr.mxu0 0.0
    %2869 = vmatpush1.msra.mxu0 %v166
    %2870 = vmatprep.subr.mxu0 0.0
    %2871 = vmatpush1.msra.mxu0 %v167
    %2872 = vmatprep.subr.mxu0 0.0
    %2873 = vmatpush1.msra.mxu0 %v168
    %2874 = vmatprep.subr.mxu0 0.0
    %2875 = vmatpush1.msra.mxu0 0.0
    %2876 = vmatprep.subr.mxu0 0.0
    %2877 = vmatpush1.msra.mxu0 0.0
    %2878 = vmatprep.subr.mxu0 0.0
    %2879 = vmatpush1.msra.mxu0 0.0
    %2880 = vmatprep.subr.mxu0 0.0
    %2881 = vmatpush1.msra.mxu0 0.0
    %2882 = vmatprep.subr.mxu0 0.0
    %2883 = vmatpush1.msra.mxu0 0.0
    %2884 = vmatprep.subr.mxu0 0.0
    %2885 = vmatpush1.msra.mxu0 0.0
    %2886 = vmatprep.subr.mxu0 0.0
    %2887 = vmatpush1.msra.mxu0 0.0
    %2888 = vmatprep.subr.mxu0 0.0
    %2889 = vmatpush1.msra.mxu0 0.0
    %2890 = vmatprep.subr.mxu0 0.0
    %2891 = vmatpush1.msra.mxu0 0.0
    %2892 = vmatprep.subr.mxu0 0.0
    %2893 = vmatpush1.msra.mxu0 0.0
    %2894 = vmatprep.subr.mxu0 0.0
    %2895 = vmatpush1.msra.mxu0 0.0
    %2896 = vmatprep.subr.mxu0 0.0
    %2897 = vmatpush1.msra.mxu0 0.0
    %2898 = vmatprep.subr.mxu0 0.0
    %2899 = vmatpush1.msra.mxu0 0.0
    %2900 = vmatprep.subr.mxu0 0.0
    %2901 = vmatpush1.msra.mxu0 0.0
    %2902 = vmatprep.subr.mxu0 0.0
    %2903 = vmatpush1.msra.mxu0 0.0
    %2904 = vmatprep.subr.mxu0 0.0
    %2905 = vmatpush1.msra.mxu0 0.0
    %2906 = vmatprep.mubr.f32.mxu0 0.0
    %2907 = vmatmul.mubr.f32.gmra.mrb[0].mxu0 %v2841
    %v2908 = vpop.f32.mrb[0].mxu0
    %v2909 = vadd.f32 0.0, %v2908
    %v2910 = vpop.f32.mrb[0].mxu0
    %2911 = vdwg.mxu0
    %v2912 = vmul.f32 %v2841, %v2841
    %2913 = vmatprep.subr.mxu0 0.0
    %2914 = vmatpush1.msra.mxu0 %v153
    %2915 = vmatprep.subr.mxu0 0.0
    %2916 = vmatpush1.msra.mxu0 %v154
    %2917 = vmatprep.subr.mxu0 0.0
    %2918 = vmatpush1.msra.mxu0 %v155
    %2919 = vmatprep.subr.mxu0 0.0
    %2920 = vmatpush1.msra.mxu0 %v156
    %2921 = vmatprep.subr.mxu0 0.0
    %2922 = vmatpush1.msra.mxu0 %v157
    %2923 = vmatprep.subr.mxu0 0.0
    %2924 = vmatpush1.msra.mxu0 %v158
    %2925 = vmatprep.subr.mxu0 0.0
    %2926 = vmatpush1.msra.mxu0 %v159
    %2927 = vmatprep.subr.mxu0 0.0
    %2928 = vmatpush1.msra.mxu0 %v160
    %2929 = vmatprep.subr.mxu0 0.0
    %2930 = vmatpush1.msra.mxu0 %v161
    %2931 = vmatprep.subr.mxu0 0.0
    %2932 = vmatpush1.msra.mxu0 %v162
    %2933 = vmatprep.subr.mxu0 0.0
    %2934 = vmatpush1.msra.mxu0 %v163
    %2935 = vmatprep.subr.mxu0 0.0
    %2936 = vmatpush1.msra.mxu0 %v164
    %2937 = vmatprep.subr.mxu0 0.0
    %2938 = vmatpush1.msra.mxu0 %v165
    %2939 = vmatprep.subr.mxu0 0.0
    %2940 = vmatpush1.msra.mxu0 %v166
    %2941 = vmatprep.subr.mxu0 0.0
    %2942 = vmatpush1.msra.mxu0 %v167
    %2943 = vmatprep.subr.mxu0 0.0
    %2944 = vmatpush1.msra.mxu0 %v168
    %2945 = vmatprep.subr.mxu0 0.0
    %2946 = vmatpush1.msra.mxu0 0.0
    %2947 = vmatprep.subr.mxu0 0.0
    %2948 = vmatpush1.msra.mxu0 0.0
    %2949 = vmatprep.subr.mxu0 0.0
    %2950 = vmatpush1.msra.mxu0 0.0
    %2951 = vmatprep.subr.mxu0 0.0
    %2952 = vmatpush1.msra.mxu0 0.0
    %2953 = vmatprep.subr.mxu0 0.0
    %2954 = vmatpush1.msra.mxu0 0.0
    %2955 = vmatprep.subr.mxu0 0.0
    %2956 = vmatpush1.msra.mxu0 0.0
    %2957 = vmatprep.subr.mxu0 0.0
    %2958 = vmatpush1.msra.mxu0 0.0
    %2959 = vmatprep.subr.mxu0 0.0
    %2960 = vmatpush1.msra.mxu0 0.0
    %2961 = vmatprep.subr.mxu0 0.0
    %2962 = vmatpush1.msra.mxu0 0.0
    %2963 = vmatprep.subr.mxu0 0.0
    %2964 = vmatpush1.msra.mxu0 0.0
    %2965 = vmatprep.subr.mxu0 0.0
    %2966 = vmatpush1.msra.mxu0 0.0
    %2967 = vmatprep.subr.mxu0 0.0
    %2968 = vmatpush1.msra.mxu0 0.0
    %2969 = vmatprep.subr.mxu0 0.0
    %2970 = vmatpush1.msra.mxu0 0.0
    %2971 = vmatprep.subr.mxu0 0.0
    %2972 = vmatpush1.msra.mxu0 0.0
    %2973 = vmatprep.subr.mxu0 0.0
    %2974 = vmatpush1.msra.mxu0 0.0
    %2975 = vmatprep.subr.mxu0 0.0
    %2976 = vmatpush1.msra.mxu0 0.0
    %2977 = vmatprep.mubr.f32.mxu0 0.0
    %2978 = vmatmul.mubr.f32.gmra.mrb[0].mxu0 %v2912
    %v2979 = vpop.f32.mrb[0].mxu0
    %v2980 = vadd.f32 0.0, %v2979
    %v2981 = vpop.f32.mrb[0].mxu0
    %2982 = vdwg.mxu0
    %v2983 = vmul.f32 %v2909, %v2909
    %v2984 = vsub.f32 %v2980, %v2983
    %v2985 = vsub.f32 %v2841, %v2909
    %v2986 = vadd.f32 %v2984, 1e-05
    %v2987 = vrsqrt.pop %v2986
    %v2988 = vmul.f32 %v2985, %v2987
    %v2989 = vlaneseq
    %v2990 = vshrl.u32 %v2989, 7
    %v2991 = vsub.s32 5, %v2990
    %v2992 = vrot.slane %v150, %v2991
    %v2993 = vmul.f32 %v2988, %v2992
    %v2994 = vlaneseq
    %v2995 = vshrl.u32 %v2994, 7
    %v2996 = vsub.s32 6, %v2995
    %v2997 = vrot.slane %v150, %v2996
    %v2998 = vadd.f32 %v2993, %v2997
    %s2999 = scalar_lea.vmem [#allocation11], 768
    %v3000 = vld [vmem:[%s2999] sm:$0xff]
    %v3001 = vld [vmem:[%s2999 + $0x8] sm:$0xff]
    %v3002 = vld [vmem:[%s2999 + $0x10] sm:$0xff]
    %v3003 = vld [vmem:[%s2999 + $0x18] sm:$0xff]
    %v3004 = vld [vmem:[%s2999 + $0x20] sm:$0xff]
    %v3005 = vld [vmem:[%s2999 + $0x28] sm:$0xff]
    %v3006 = vld [vmem:[%s2999 + $0x30] sm:$0xff]
    %v3007 = vld [vmem:[%s2999 + $0x38] sm:$0xff]
    %v3008 = vld [vmem:[%s2999 + $0x40] sm:$0xff]
    %v3009 = vld [vmem:[%s2999 + $0x48] sm:$0xff]
    %v3010 = vld [vmem:[%s2999 + $0x50] sm:$0xff]
    %v3011 = vld [vmem:[%s2999 + $0x58] sm:$0xff]
    %v3012 = vld [vmem:[%s2999 + $0x60] sm:$0xff]
    %v3013 = vld [vmem:[%s2999 + $0x68] sm:$0xff]
    %v3014 = vld [vmem:[%s2999 + $0x70] sm:$0xff]
    %v3015 = vld [vmem:[%s2999 + $0x78] sm:$0xff]
    %v3016 = vld [vmem:[%s2999 + $0x80] sm:$0xff]
    %v3017 = vld [vmem:[%s2999 + $0x88] sm:$0xff]
    %v3018 = vld [vmem:[%s2999 + $0x90] sm:$0xff]
    %v3019 = vld [vmem:[%s2999 + $0x98] sm:$0xff]
    %v3020 = vld [vmem:[%s2999 + $0xa0] sm:$0xff]
    %v3021 = vld [vmem:[%s2999 + $0xa8] sm:$0xff]
    %v3022 = vld [vmem:[%s2999 + $0xb0] sm:$0xff]
    %v3023 = vld [vmem:[%s2999 + $0xb8] sm:$0xff]
    %v3024 = vld [vmem:[%s2999 + $0xc0] sm:$0xff]
    %v3025 = vld [vmem:[%s2999 + $0xc8] sm:$0xff]
    %v3026 = vld [vmem:[%s2999 + $0xd0] sm:$0xff]
    %v3027 = vld [vmem:[%s2999 + $0xd8] sm:$0xff]
    %v3028 = vld [vmem:[%s2999 + $0xe0] sm:$0xff]
    %v3029 = vld [vmem:[%s2999 + $0xe8] sm:$0xff]
    %v3030 = vld [vmem:[%s2999 + $0xf0] sm:$0xff]
    %v3031 = vld [vmem:[%s2999 + $0xf8] sm:$0xff]
    %v3032 = vlaneseq
    %v3033 = vshrl.u32 %v3032, 7
    %v3034 = vsub.s32 3, %v3033
    %v3035 = vrot.slane %v152, %v3034
    %v3036 = vlaneseq
    %v3037 = vshrl.u32 %v3036, 7
    %v3038 = vsub.s32 7, %v3037
    %v3039 = vrot.slane %v152, %v3038
    %v3042 = vlaneseq
    %v3043 = vshrl.u32 %v3042, 7
    %v3044 = vsub.s32 3, %v3043
    %v3045 = vrot.slane %v3035, %v3044
    %v3046 = vlaneseq
    %v3047 = vshrl.u32 %v3046, 7
    %v3048 = vsub.s32 3, %v3047
    %v3049 = vrot.slane %v3039, %v3048
    %3050 = vmatprep.subr.mxu0 %v3001
    %3051 = vmatpush1.msra.mxu0 %v3000
    %3052 = vmatprep.subr.mxu0 %v3003
    %3053 = vmatpush1.msra.mxu0 %v3002
    %3054 = vmatprep.subr.mxu0 %v3005
    %3055 = vmatpush1.msra.mxu0 %v3004
    %3056 = vmatprep.subr.mxu0 %v3007
    %3057 = vmatpush1.msra.mxu0 %v3006
    %3058 = vmatprep.subr.mxu0 %v3009
    %3059 = vmatpush1.msra.mxu0 %v3008
    %3060 = vmatprep.subr.mxu0 %v3011
    %3061 = vmatpush1.msra.mxu0 %v3010
    %3062 = vmatprep.subr.mxu0 %v3013
    %3063 = vmatpush1.msra.mxu0 %v3012
    %3064 = vmatprep.subr.mxu0 %v3015
    %3065 = vmatpush1.msra.mxu0 %v3014
    %3066 = vmatprep.subr.mxu0 %v3017
    %3067 = vmatpush1.msra.mxu0 %v3016
    %3068 = vmatprep.subr.mxu0 %v3019
    %3069 = vmatpush1.msra.mxu0 %v3018
    %3070 = vmatprep.subr.mxu0 %v3021
    %3071 = vmatpush1.msra.mxu0 %v3020
    %3072 = vmatprep.subr.mxu0 %v3023
    %3073 = vmatpush1.msra.mxu0 %v3022
    %3074 = vmatprep.subr.mxu0 %v3025
    %3075 = vmatpush1.msra.mxu0 %v3024
    %3076 = vmatprep.subr.mxu0 %v3027
    %3077 = vmatpush1.msra.mxu0 %v3026
    %3078 = vmatprep.subr.mxu0 %v3029
    %3079 = vmatpush1.msra.mxu0 %v3028
    %3080 = vmatprep.subr.mxu0 %v3031
    %3081 = vmatpush1.msra.mxu0 %v3030
    %3082 = vmatprep.subr.mxu0 0.0
    %3083 = vmatpush1.msra.mxu0 0.0
    %3084 = vmatprep.subr.mxu0 0.0
    %3085 = vmatpush1.msra.mxu0 0.0
    %3086 = vmatprep.subr.mxu0 0.0
    %3087 = vmatpush1.msra.mxu0 0.0
    %3088 = vmatprep.subr.mxu0 0.0
    %3089 = vmatpush1.msra.mxu0 0.0
    %3090 = vmatprep.subr.mxu0 0.0
    %3091 = vmatpush1.msra.mxu0 0.0
    %3092 = vmatprep.subr.mxu0 0.0
    %3093 = vmatpush1.msra.mxu0 0.0
    %3094 = vmatprep.subr.mxu0 0.0
    %3095 = vmatpush1.msra.mxu0 0.0
    %3096 = vmatprep.subr.mxu0 0.0
    %3097 = vmatpush1.msra.mxu0 0.0
    %3098 = vmatprep.subr.mxu0 0.0
    %3099 = vmatpush1.msra.mxu0 0.0
    %3100 = vmatprep.subr.mxu0 0.0
    %3101 = vmatpush1.msra.mxu0 0.0
    %3102 = vmatprep.subr.mxu0 0.0
    %3103 = vmatpush1.msra.mxu0 0.0
    %3104 = vmatprep.subr.mxu0 0.0
    %3105 = vmatpush1.msra.mxu0 0.0
    %3106 = vmatprep.subr.mxu0 0.0
    %3107 = vmatpush1.msra.mxu0 0.0
    %3108 = vmatprep.subr.mxu0 0.0
    %3109 = vmatpush1.msra.mxu0 0.0
    %3110 = vmatprep.subr.mxu0 0.0
    %3111 = vmatpush1.msra.mxu0 0.0
    %3112 = vmatprep.subr.mxu0 0.0
    %3113 = vmatpush1.msra.mxu0 0.0
    %3114 = vmatprep.mubr.f32.mxu0 0.0
    %3115 = vmatmul.mubr.f32.gmra.mrb[0].mxu0 %v2998
    %v3116 = vpop.f32.mrb[0].mxu0
    %v3117 = vadd.f32 %v3045, %v3116
    %v3118 = vpop.f32.mrb[0].mxu0
    %v3119 = vadd.f32 %v3049, %v3118
    %3120 = vdwg.mxu0
    %v3121 = vmax.f32 %v3117, 0.0
    %v3122 = vmax.f32 %v3119, 0.0
    %s3123 = scalar_lea.vmem [#allocation12], 768
    %v3124 = vld [vmem:[%s3123] sm:$0xff]
    %v3125 = vld [vmem:[%s3123 + $0x8] sm:$0xff]
    %v3126 = vld [vmem:[%s3123 + $0x10] sm:$0xff]
    %v3127 = vld [vmem:[%s3123 + $0x18] sm:$0xff]
    %v3128 = vld [vmem:[%s3123 + $0x20] sm:$0xff]
    %v3129 = vld [vmem:[%s3123 + $0x28] sm:$0xff]
    %v3130 = vld [vmem:[%s3123 + $0x30] sm:$0xff]
    %v3131 = vld [vmem:[%s3123 + $0x38] sm:$0xff]
    %v3132 = vld [vmem:[%s3123 + $0x40] sm:$0xff]
    %v3133 = vld [vmem:[%s3123 + $0x48] sm:$0xff]
    %v3134 = vld [vmem:[%s3123 + $0x50] sm:$0xff]
    %v3135 = vld [vmem:[%s3123 + $0x58] sm:$0xff]
    %v3136 = vld [vmem:[%s3123 + $0x60] sm:$0xff]
    %v3137 = vld [vmem:[%s3123 + $0x68] sm:$0xff]
    %v3138 = vld [vmem:[%s3123 + $0x70] sm:$0xff]
    %v3139 = vld [vmem:[%s3123 + $0x78] sm:$0xff]
    %v3140 = vld [vmem:[%s3123 + $0x80] sm:$0xff]
    %v3141 = vld [vmem:[%s3123 + $0x88] sm:$0xff]
    %v3142 = vld [vmem:[%s3123 + $0x90] sm:$0xff]
    %v3143 = vld [vmem:[%s3123 + $0x98] sm:$0xff]
    %v3144 = vld [vmem:[%s3123 + $0xa0] sm:$0xff]
    %v3145 = vld [vmem:[%s3123 + $0xa8] sm:$0xff]
    %v3146 = vld [vmem:[%s3123 + $0xb0] sm:$0xff]
    %v3147 = vld [vmem:[%s3123 + $0xb8] sm:$0xff]
    %v3148 = vld [vmem:[%s3123 + $0xc0] sm:$0xff]
    %v3149 = vld [vmem:[%s3123 + $0xc8] sm:$0xff]
    %v3150 = vld [vmem:[%s3123 + $0xd0] sm:$0xff]
    %v3151 = vld [vmem:[%s3123 + $0xd8] sm:$0xff]
    %v3152 = vld [vmem:[%s3123 + $0xe0] sm:$0xff]
    %v3153 = vld [vmem:[%s3123 + $0xe8] sm:$0xff]
    %v3154 = vld [vmem:[%s3123 + $0xf0] sm:$0xff]
    %v3155 = vld [vmem:[%s3123 + $0xf8] sm:$0xff]
    %v3156 = vlaneseq
    %v3157 = vshrl.u32 %v3156, 7
    %v3158 = vsub.s32 2, %v3157
    %v3159 = vrot.slane %v150, %v3158
    %3160 = vmatprep.subr.mxu0 0.0
    %3161 = vmatpush1.msra.mxu0 %v3124
    %3162 = vmatprep.subr.mxu0 0.0
    %3163 = vmatpush1.msra.mxu0 %v3125
    %3164 = vmatprep.subr.mxu0 0.0
    %3165 = vmatpush1.msra.mxu0 %v3126
    %3166 = vmatprep.subr.mxu0 0.0
    %3167 = vmatpush1.msra.mxu0 %v3127
    %3168 = vmatprep.subr.mxu0 0.0
    %3169 = vmatpush1.msra.mxu0 %v3128
    %3170 = vmatprep.subr.mxu0 0.0
    %3171 = vmatpush1.msra.mxu0 %v3129
    %3172 = vmatprep.subr.mxu0 0.0
    %3173 = vmatpush1.msra.mxu0 %v3130
    %3174 = vmatprep.subr.mxu0 0.0
    %3175 = vmatpush1.msra.mxu0 %v3131
    %3176 = vmatprep.subr.mxu0 0.0
    %3177 = vmatpush1.msra.mxu0 %v3132
    %3178 = vmatprep.subr.mxu0 0.0
    %3179 = vmatpush1.msra.mxu0 %v3133
    %3180 = vmatprep.subr.mxu0 0.0
    %3181 = vmatpush1.msra.mxu0 %v3134
    %3182 = vmatprep.subr.mxu0 0.0
    %3183 = vmatpush1.msra.mxu0 %v3135
    %3184 = vmatprep.subr.mxu0 0.0
    %3185 = vmatpush1.msra.mxu0 %v3136
    %3186 = vmatprep.subr.mxu0 0.0
    %3187 = vmatpush1.msra.mxu0 %v3137
    %3188 = vmatprep.subr.mxu0 0.0
    %3189 = vmatpush1.msra.mxu0 %v3138
    %3190 = vmatprep.subr.mxu0 0.0
    %3191 = vmatpush1.msra.mxu0 %v3139
    %3192 = vmatprep.subr.mxu0 0.0
    %3193 = vmatpush1.msra.mxu0 %v3140
    %3194 = vmatprep.subr.mxu0 0.0
    %3195 = vmatpush1.msra.mxu0 %v3141
    %3196 = vmatprep.subr.mxu0 0.0
    %3197 = vmatpush1.msra.mxu0 %v3142
    %3198 = vmatprep.subr.mxu0 0.0
    %3199 = vmatpush1.msra.mxu0 %v3143
    %3200 = vmatprep.subr.mxu0 0.0
    %3201 = vmatpush1.msra.mxu0 %v3144
    %3202 = vmatprep.subr.mxu0 0.0
    %3203 = vmatpush1.msra.mxu0 %v3145
    %3204 = vmatprep.subr.mxu0 0.0
    %3205 = vmatpush1.msra.mxu0 %v3146
    %3206 = vmatprep.subr.mxu0 0.0
    %3207 = vmatpush1.msra.mxu0 %v3147
    %3208 = vmatprep.subr.mxu0 0.0
    %3209 = vmatpush1.msra.mxu0 %v3148
    %3210 = vmatprep.subr.mxu0 0.0
    %3211 = vmatpush1.msra.mxu0 %v3149
    %3212 = vmatprep.subr.mxu0 0.0
    %3213 = vmatpush1.msra.mxu0 %v3150
    %3214 = vmatprep.subr.mxu0 0.0
    %3215 = vmatpush1.msra.mxu0 %v3151
    %3216 = vmatprep.subr.mxu0 0.0
    %3217 = vmatpush1.msra.mxu0 %v3152
    %3218 = vmatprep.subr.mxu0 0.0
    %3219 = vmatpush1.msra.mxu0 %v3153
    %3220 = vmatprep.subr.mxu0 0.0
    %3221 = vmatpush1.msra.mxu0 %v3154
    %3222 = vmatprep.subr.mxu0 0.0
    %3223 = vmatpush1.msra.mxu0 %v3155
    %3224 = vmatprep.mubr.f32.mxu0 %v3122
    %3225 = vmatmul.mubr.f32.gmra.mrb[0].mxu0 %v3121
    %v3226 = vpop.f32.mrb[0].mxu0
    %v3227 = vadd.f32 %v3159, %v3226
    %v3228 = vpop.f32.mrb[0].mxu0
    %3229 = vdwg.mxu0
    %v3230 = vadd.f32 %v2998, %v3227
    %3231 = vmatprep.subr.mxu0 0.0
    %3232 = vmatpush1.msra.mxu0 %v153
    %3233 = vmatprep.subr.mxu0 0.0
    %3234 = vmatpush1.msra.mxu0 %v154
    %3235 = vmatprep.subr.mxu0 0.0
    %3236 = vmatpush1.msra.mxu0 %v155
    %3237 = vmatprep.subr.mxu0 0.0
    %3238 = vmatpush1.msra.mxu0 %v156
    %3239 = vmatprep.subr.mxu0 0.0
    %3240 = vmatpush1.msra.mxu0 %v157
    %3241 = vmatprep.subr.mxu0 0.0
    %3242 = vmatpush1.msra.mxu0 %v158
    %3243 = vmatprep.subr.mxu0 0.0
    %3244 = vmatpush1.msra.mxu0 %v159
    %3245 = vmatprep.subr.mxu0 0.0
    %3246 = vmatpush1.msra.mxu0 %v160
    %3247 = vmatprep.subr.mxu0 0.0
    %3248 = vmatpush1.msra.mxu0 %v161
    %3249 = vmatprep.subr.mxu0 0.0
    %3250 = vmatpush1.msra.mxu0 %v162
    %3251 = vmatprep.subr.mxu0 0.0
    %3252 = vmatpush1.msra.mxu0 %v163
    %3253 = vmatprep.subr.mxu0 0.0
    %3254 = vmatpush1.msra.mxu0 %v164
    %3255 = vmatprep.subr.mxu0 0.0
    %3256 = vmatpush1.msra.mxu0 %v165
    %3257 = vmatprep.subr.mxu0 0.0
    %3258 = vmatpush1.msra.mxu0 %v166
    %3259 = vmatprep.subr.mxu0 0.0
    %3260 = vmatpush1.msra.mxu0 %v167
    %3261 = vmatprep.subr.mxu0 0.0
    %3262 = vmatpush1.msra.mxu0 %v168
    %3263 = vmatprep.subr.mxu0 0.0
    %3264 = vmatpush1.msra.mxu0 0.0
    %3265 = vmatprep.subr.mxu0 0.0
    %3266 = vmatpush1.msra.mxu0 0.0
    %3267 = vmatprep.subr.mxu0 0.0
    %3268 = vmatpush1.msra.mxu0 0.0
    %3269 = vmatprep.subr.mxu0 0.0
    %3270 = vmatpush1.msra.mxu0 0.0
    %3271 = vmatprep.subr.mxu0 0.0
    %3272 = vmatpush1.msra.mxu0 0.0
    %3273 = vmatprep.subr.mxu0 0.0
    %3274 = vmatpush1.msra.mxu0 0.0
    %3275 = vmatprep.subr.mxu0 0.0
    %3276 = vmatpush1.msra.mxu0 0.0
    %3277 = vmatprep.subr.mxu0 0.0
    %3278 = vmatpush1.msra.mxu0 0.0
    %3279 = vmatprep.subr.mxu0 0.0
    %3280 = vmatpush1.msra.mxu0 0.0
    %3281 = vmatprep.subr.mxu0 0.0
    %3282 = vmatpush1.msra.mxu0 0.0
    %3283 = vmatprep.subr.mxu0 0.0
    %3284 = vmatpush1.msra.mxu0 0.0
    %3285 = vmatprep.subr.mxu0 0.0
    %3286 = vmatpush1.msra.mxu0 0.0
    %3287 = vmatprep.subr.mxu0 0.0
    %3288 = vmatpush1.msra.mxu0 0.0
    %3289 = vmatprep.subr.mxu0 0.0
    %3290 = vmatpush1.msra.mxu0 0.0
    %3291 = vmatprep.subr.mxu0 0.0
    %3292 = vmatpush1.msra.mxu0 0.0
    %3293 = vmatprep.subr.mxu0 0.0
    %3294 = vmatpush1.msra.mxu0 0.0
    %3295 = vmatprep.mubr.f32.mxu0 0.0
    %3296 = vmatmul.mubr.f32.gmra.mrb[0].mxu0 %v3230
    %v3297 = vpop.f32.mrb[0].mxu0
    %v3298 = vadd.f32 0.0, %v3297
    %v3299 = vpop.f32.mrb[0].mxu0
    %3300 = vdwg.mxu0
    %v3301 = vmul.f32 %v3230, %v3230
    %3302 = vmatprep.subr.mxu0 0.0
    %3303 = vmatpush1.msra.mxu0 %v153
    %3304 = vmatprep.subr.mxu0 0.0
    %3305 = vmatpush1.msra.mxu0 %v154
    %3306 = vmatprep.subr.mxu0 0.0
    %3307 = vmatpush1.msra.mxu0 %v155
    %3308 = vmatprep.subr.mxu0 0.0
    %3309 = vmatpush1.msra.mxu0 %v156
    %3310 = vmatprep.subr.mxu0 0.0
    %3311 = vmatpush1.msra.mxu0 %v157
    %3312 = vmatprep.subr.mxu0 0.0
    %3313 = vmatpush1.msra.mxu0 %v158
    %3314 = vmatprep.subr.mxu0 0.0
    %3315 = vmatpush1.msra.mxu0 %v159
    %3316 = vmatprep.subr.mxu0 0.0
    %3317 = vmatpush1.msra.mxu0 %v160
    %3318 = vmatprep.subr.mxu0 0.0
    %3319 = vmatpush1.msra.mxu0 %v161
    %3320 = vmatprep.subr.mxu0 0.0
    %3321 = vmatpush1.msra.mxu0 %v162
    %3322 = vmatprep.subr.mxu0 0.0
    %3323 = vmatpush1.msra.mxu0 %v163
    %3324 = vmatprep.subr.mxu0 0.0
    %3325 = vmatpush1.msra.mxu0 %v164
    %3326 = vmatprep.subr.mxu0 0.0
    %3327 = vmatpush1.msra.mxu0 %v165
    %3328 = vmatprep.subr.mxu0 0.0
    %3329 = vmatpush1.msra.mxu0 %v166
    %3330 = vmatprep.subr.mxu0 0.0
    %3331 = vmatpush1.msra.mxu0 %v167
    %3332 = vmatprep.subr.mxu0 0.0
    %3333 = vmatpush1.msra.mxu0 %v168
    %3334 = vmatprep.subr.mxu0 0.0
    %3335 = vmatpush1.msra.mxu0 0.0
    %3336 = vmatprep.subr.mxu0 0.0
    %3337 = vmatpush1.msra.mxu0 0.0
    %3338 = vmatprep.subr.mxu0 0.0
    %3339 = vmatpush1.msra.mxu0 0.0
    %3340 = vmatprep.subr.mxu0 0.0
    %3341 = vmatpush1.msra.mxu0 0.0
    %3342 = vmatprep.subr.mxu0 0.0
    %3343 = vmatpush1.msra.mxu0 0.0
    %3344 = vmatprep.subr.mxu0 0.0
    %3345 = vmatpush1.msra.mxu0 0.0
    %3346 = vmatprep.subr.mxu0 0.0
    %3347 = vmatpush1.msra.mxu0 0.0
    %3348 = vmatprep.subr.mxu0 0.0
    %3349 = vmatpush1.msra.mxu0 0.0
    %3350 = vmatprep.subr.mxu0 0.0
    %3351 = vmatpush1.msra.mxu0 0.0
    %3352 = vmatprep.subr.mxu0 0.0
    %3353 = vmatpush1.msra.mxu0 0.0
    %3354 = vmatprep.subr.mxu0 0.0
    %3355 = vmatpush1.msra.mxu0 0.0
    %3356 = vmatprep.subr.mxu0 0.0
    %3357 = vmatpush1.msra.mxu0 0.0
    %3358 = vmatprep.subr.mxu0 0.0
    %3359 = vmatpush1.msra.mxu0 0.0
    %3360 = vmatprep.subr.mxu0 0.0
    %3361 = vmatpush1.msra.mxu0 0.0
    %3362 = vmatprep.subr.mxu0 0.0
    %3363 = vmatpush1.msra.mxu0 0.0
    %3364 = vmatprep.subr.mxu0 0.0
    %3365 = vmatpush1.msra.mxu0 0.0
    %3366 = vmatprep.mubr.f32.mxu0 0.0
    %3367 = vmatmul.mubr.f32.gmra.mrb[0].mxu0 %v3301
    %v3368 = vpop.f32.mrb[0].mxu0
    %v3369 = vadd.f32 0.0, %v3368
    %v3370 = vpop.f32.mrb[0].mxu0
    %3371 = vdwg.mxu0
    %v3372 = vmul.f32 %v3298, %v3298
    %v3373 = vsub.f32 %v3369, %v3372
    %v3374 = vsub.f32 %v3230, %v3298
    %v3375 = vadd.f32 %v3373, 1e-05
    %v3376 = vrsqrt.pop %v3375
    %v3377 = vmul.f32 %v3374, %v3376
    %v3378 = vlaneseq
    %v3379 = vshrl.u32 %v3378, 7
    %v3380 = vsub.s32 7, %v3379
    %v3381 = vrot.slane %v150, %v3380
    %v3382 = vmul.f32 %v3377, %v3381
    %v3383 = vlaneseq
    %v3384 = vshrl.u32 %v3383, 7
    %v3385 = vsub.s32 0, %v3384
    %v3386 = vrot.slane %v151, %v3385
    %v3387 = vadd.f32 %v3382, %v3386
    %3388 = vmatprep.subr.mxu0 0.0
    %3389 = vmatpush1.msra.mxu0 %v153
    %3390 = vmatprep.subr.mxu0 0.0
    %3391 = vmatpush1.msra.mxu0 %v154
    %3392 = vmatprep.subr.mxu0 0.0
    %3393 = vmatpush1.msra.mxu0 %v155
    %3394 = vmatprep.subr.mxu0 0.0
    %3395 = vmatpush1.msra.mxu0 %v156
    %3396 = vmatprep.subr.mxu0 0.0
    %3397 = vmatpush1.msra.mxu0 %v157
    %3398 = vmatprep.subr.mxu0 0.0
    %3399 = vmatpush1.msra.mxu0 %v158
    %3400 = vmatprep.subr.mxu0 0.0
    %3401 = vmatpush1.msra.mxu0 %v159
    %3402 = vmatprep.subr.mxu0 0.0
    %3403 = vmatpush1.msra.mxu0 %v160
    %3404 = vmatprep.subr.mxu0 0.0
    %3405 = vmatpush1.msra.mxu0 %v161
    %3406 = vmatprep.subr.mxu0 0.0
    %3407 = vmatpush1.msra.mxu0 %v162
    %3408 = vmatprep.subr.mxu0 0.0
    %3409 = vmatpush1.msra.mxu0 %v163
    %3410 = vmatprep.subr.mxu0 0.0
    %3411 = vmatpush1.msra.mxu0 %v164
    %3412 = vmatprep.subr.mxu0 0.0
    %3413 = vmatpush1.msra.mxu0 %v165
    %3414 = vmatprep.subr.mxu0 0.0
    %3415 = vmatpush1.msra.mxu0 %v166
    %3416 = vmatprep.subr.mxu0 0.0
    %3417 = vmatpush1.msra.mxu0 %v167
    %3418 = vmatprep.subr.mxu0 0.0
    %3419 = vmatpush1.msra.mxu0 %v168
    %3420 = vmatprep.subr.mxu0 0.0
    %3421 = vmatpush1.msra.mxu0 0.0
    %3422 = vmatprep.subr.mxu0 0.0
    %3423 = vmatpush1.msra.mxu0 0.0
    %3424 = vmatprep.subr.mxu0 0.0
    %3425 = vmatpush1.msra.mxu0 0.0
    %3426 = vmatprep.subr.mxu0 0.0
    %3427 = vmatpush1.msra.mxu0 0.0
    %3428 = vmatprep.subr.mxu0 0.0
    %3429 = vmatpush1.msra.mxu0 0.0
    %3430 = vmatprep.subr.mxu0 0.0
    %3431 = vmatpush1.msra.mxu0 0.0
    %3432 = vmatprep.subr.mxu0 0.0
    %3433 = vmatpush1.msra.mxu0 0.0
    %3434 = vmatprep.subr.mxu0 0.0
    %3435 = vmatpush1.msra.mxu0 0.0
    %3436 = vmatprep.subr.mxu0 0.0
    %3437 = vmatpush1.msra.mxu0 0.0
    %3438 = vmatprep.subr.mxu0 0.0
    %3439 = vmatpush1.msra.mxu0 0.0
    %3440 = vmatprep.subr.mxu0 0.0
    %3441 = vmatpush1.msra.mxu0 0.0
    %3442 = vmatprep.subr.mxu0 0.0
    %3443 = vmatpush1.msra.mxu0 0.0
    %3444 = vmatprep.subr.mxu0 0.0
    %3445 = vmatpush1.msra.mxu0 0.0
    %3446 = vmatprep.subr.mxu0 0.0
    %3447 = vmatpush1.msra.mxu0 0.0
    %3448 = vmatprep.subr.mxu0 0.0
    %3449 = vmatpush1.msra.mxu0 0.0
    %3450 = vmatprep.subr.mxu0 0.0
    %3451 = vmatpush1.msra.mxu0 0.0
    %3452 = vmatprep.mubr.f32.mxu0 0.0
    %3453 = vmatmul.mubr.f32.gmra.mrb[0].mxu0 %v3387
    %v3454 = vpop.f32.mrb[0].mxu0
    %v3455 = vadd.f32 0.0, %v3454
    %v3456 = vpop.f32.mrb[0].mxu0
    %3457 = vdwg.mxu0
    %v3458 = vmul.f32 %v3387, %v3387
    %3459 = vmatprep.subr.mxu0 0.0
    %3460 = vmatpush1.msra.mxu0 %v153
    %3461 = vmatprep.subr.mxu0 0.0
    %3462 = vmatpush1.msra.mxu0 %v154
    %3463 = vmatprep.subr.mxu0 0.0
    %3464 = vmatpush1.msra.mxu0 %v155
    %3465 = vmatprep.subr.mxu0 0.0
    %3466 = vmatpush1.msra.mxu0 %v156
    %3467 = vmatprep.subr.mxu0 0.0
    %3468 = vmatpush1.msra.mxu0 %v157
    %3469 = vmatprep.subr.mxu0 0.0
    %3470 = vmatpush1.msra.mxu0 %v158
    %3471 = vmatprep.subr.mxu0 0.0
    %3472 = vmatpush1.msra.mxu0 %v159
    %3473 = vmatprep.subr.mxu0 0.0
    %3474 = vmatpush1.msra.mxu0 %v160
    %3475 = vmatprep.subr.mxu0 0.0
    %3476 = vmatpush1.msra.mxu0 %v161
    %3477 = vmatprep.subr.mxu0 0.0
    %3478 = vmatpush1.msra.mxu0 %v162
    %3479 = vmatprep.subr.mxu0 0.0
    %3480 = vmatpush1.msra.mxu0 %v163
    %3481 = vmatprep.subr.mxu0 0.0
    %3482 = vmatpush1.msra.mxu0 %v164
    %3483 = vmatprep.subr.mxu0 0.0
    %3484 = vmatpush1.msra.mxu0 %v165
    %3485 = vmatprep.subr.mxu0 0.0
    %3486 = vmatpush1.msra.mxu0 %v166
    %3487 = vmatprep.subr.mxu0 0.0
    %3488 = vmatpush1.msra.mxu0 %v167
    %3489 = vmatprep.subr.mxu0 0.0
    %3490 = vmatpush1.msra.mxu0 %v168
    %3491 = vmatprep.subr.mxu0 0.0
    %3492 = vmatpush1.msra.mxu0 0.0
    %3493 = vmatprep.subr.mxu0 0.0
    %3494 = vmatpush1.msra.mxu0 0.0
    %3495 = vmatprep.subr.mxu0 0.0
    %3496 = vmatpush1.msra.mxu0 0.0
    %3497 = vmatprep.subr.mxu0 0.0
    %3498 = vmatpush1.msra.mxu0 0.0
    %3499 = vmatprep.subr.mxu0 0.0
    %3500 = vmatpush1.msra.mxu0 0.0
    %3501 = vmatprep.subr.mxu0 0.0
    %3502 = vmatpush1.msra.mxu0 0.0
    %3503 = vmatprep.subr.mxu0 0.0
    %3504 = vmatpush1.msra.mxu0 0.0
    %3505 = vmatprep.subr.mxu0 0.0
    %3506 = vmatpush1.msra.mxu0 0.0
    %3507 = vmatprep.subr.mxu0 0.0
    %3508 = vmatpush1.msra.mxu0 0.0
    %3509 = vmatprep.subr.mxu0 0.0
    %3510 = vmatpush1.msra.mxu0 0.0
    %3511 = vmatprep.subr.mxu0 0.0
    %3512 = vmatpush1.msra.mxu0 0.0
    %3513 = vmatprep.subr.mxu0 0.0
    %3514 = vmatpush1.msra.mxu0 0.0
    %3515 = vmatprep.subr.mxu0 0.0
    %3516 = vmatpush1.msra.mxu0 0.0
    %3517 = vmatprep.subr.mxu0 0.0
    %3518 = vmatpush1.msra.mxu0 0.0
    %3519 = vmatprep.subr.mxu0 0.0
    %3520 = vmatpush1.msra.mxu0 0.0
    %3521 = vmatprep.subr.mxu0 0.0
    %3522 = vmatpush1.msra.mxu0 0.0
    %3523 = vmatprep.mubr.f32.mxu0 0.0
    %3524 = vmatmul.mubr.f32.gmra.mrb[0].mxu0 %v3458
    %v3525 = vpop.f32.mrb[0].mxu0
    %v3526 = vadd.f32 0.0, %v3525
    %v3527 = vpop.f32.mrb[0].mxu0
    %3528 = vdwg.mxu0
    %v3529 = vmul.f32 %v3455, %v3455
    %v3530 = vsub.f32 %v3526, %v3529
    %v3531 = vsub.f32 %v3387, %v3455
    %v3532 = vadd.f32 %v3530, 1e-05
    %v3533 = vrsqrt.pop %v3532
    %v3534 = vmul.f32 %v3531, %v3533
    %v3535 = vlaneseq
    %v3536 = vshrl.u32 %v3535, 7
    %v3537 = vsub.s32 1, %v3536
    %v3538 = vrot.slane %v151, %v3537
    %v3539 = vmul.f32 %v3534, %v3538
    %v3540 = vlaneseq
    %v3541 = vshrl.u32 %v3540, 7
    %v3542 = vsub.s32 2, %v3541
    %v3543 = vrot.slane %v151, %v3542
    %v3544 = vadd.f32 %v3539, %v3543
    %v3545 = vld [vmem:[%s8] sm:$0xf]
    %s3546 = sld [smem:[#allocation2]]
    %v3547 = vstv %s3546
    %3548 = vmatprep.subr.mxu0 0.0
    %3549 = vmatpush1.xpose.msra.mxu0 %v3544
    %3550 = vmatprep.subr.mxu0 0.0
    %3551 = vmatpush1.xpose.msra.mxu0 0.0
    %3552 = vmatprep.subr.mxu0 0.0
    %3553 = vmatpush1.xpose.msra.mxu0 0.0
    %3554 = vmatprep.subr.mxu0 0.0
    %3555 = vmatpush1.xpose.msra.mxu0 0.0
    %3556 = vmatprep.subr.mxu0 0.0
    %3557 = vmatpush1.xpose.msra.mxu0 0.0
    %3558 = vmatprep.subr.mxu0 0.0
    %3559 = vmatpush1.xpose.msra.mxu0 0.0
    %3560 = vmatprep.subr.mxu0 0.0
    %3561 = vmatpush1.xpose.msra.mxu0 0.0
    %3562 = vmatprep.subr.mxu0 0.0
    %3563 = vmatpush1.xpose.msra.mxu0 0.0
    %3564 = vmatprep.subr.mxu0 0.0
    %3565 = vmatpush1.xpose.msra.mxu0 0.0
    %3566 = vmatprep.subr.mxu0 0.0
    %3567 = vmatpush1.xpose.msra.mxu0 0.0
    %3568 = vmatprep.subr.mxu0 0.0
    %3569 = vmatpush1.xpose.msra.mxu0 0.0
    %3570 = vmatprep.subr.mxu0 0.0
    %3571 = vmatpush1.xpose.msra.mxu0 0.0
    %3572 = vmatprep.subr.mxu0 0.0
    %3573 = vmatpush1.xpose.msra.mxu0 0.0
    %3574 = vmatprep.subr.mxu0 0.0
    %3575 = vmatpush1.xpose.msra.mxu0 0.0
    %3576 = vmatprep.subr.mxu0 0.0
    %3577 = vmatpush1.xpose.msra.mxu0 0.0
    %3578 = vmatprep.subr.mxu0 0.0
    %3579 = vmatpush1.xpose.msra.mxu0 0.0
    %3580 = vmatprep.subr.mxu0 0.0
    %3581 = vmatpush1.xpose.msra.mxu0 0.0
    %3582 = vmatprep.subr.mxu0 0.0
    %3583 = vmatpush1.xpose.msra.mxu0 0.0
    %3584 = vmatprep.subr.mxu0 0.0
    %3585 = vmatpush1.xpose.msra.mxu0 0.0
    %3586 = vmatprep.subr.mxu0 0.0
    %3587 = vmatpush1.xpose.msra.mxu0 0.0
    %3588 = vmatprep.subr.mxu0 0.0
    %3589 = vmatpush1.xpose.msra.mxu0 0.0
    %3590 = vmatprep.subr.mxu0 0.0
    %3591 = vmatpush1.xpose.msra.mxu0 0.0
    %3592 = vmatprep.subr.mxu0 0.0
    %3593 = vmatpush1.xpose.msra.mxu0 0.0
    %3594 = vmatprep.subr.mxu0 0.0
    %3595 = vmatpush1.xpose.msra.mxu0 0.0
    %3596 = vmatprep.subr.mxu0 0.0
    %3597 = vmatpush1.xpose.msra.mxu0 0.0
    %3598 = vmatprep.subr.mxu0 0.0
    %3599 = vmatpush1.xpose.msra.mxu0 0.0
    %3600 = vmatprep.subr.mxu0 0.0
    %3601 = vmatpush1.xpose.msra.mxu0 0.0
    %3602 = vmatprep.subr.mxu0 0.0
    %3603 = vmatpush1.xpose.msra.mxu0 0.0
    %3604 = vmatprep.subr.mxu0 0.0
    %3605 = vmatpush1.xpose.msra.mxu0 0.0
    %3606 = vmatprep.subr.mxu0 0.0
    %3607 = vmatpush1.xpose.msra.mxu0 0.0
    %3608 = vmatprep.subr.mxu0 0.0
    %3609 = vmatpush1.xpose.msra.mxu0 0.0
    %3610 = vmatprep.subr.mxu0 0.0
    %3611 = vmatpush1.xpose.msra.mxu0 0.0
    %3612 = vmatprep.mubr.f32.mxu0 0.0
    %3613 = vmatmul.mubr.f32.gmra.mrb[0].mxu0 %v3545
    %v3614 = vpop.f32.mrb[0].mxu0
    %v3615 = vadd.f32 %v3547, %v3614
    %v3616 = vpop.f32.mrb[0].mxu0
    %3617 = vdwg.mxu0
    %vm3618 = vcmask 60416
    %3619 = vst.msk [vmem:[#allocation17] sm:$0xf] %vm3618, %v3615
    // Predicated region
    $region78: #{tpu_custom_call.1} parent=1 // pred_check
      _
    $region79: #{tpu_custom_call.1} parent=1 // pred_check_branch
      %3621 = sbr.rel (0) target = $region81
    $region80: #{tpu_custom_call.1} parent=1 // pred_region
      %s3623 = ssub.s32 64, 64
      %3624 = vsyncadd [#allocation5], %s3623
      %s3626 = sshll.u32 [#allocation17], 4
      %s3627 = int_to_ptr.vmem [resolvable:$true] %s3626
      %3629 = dma.vmem_to_hbm [thread:$0]  %s3627, 64, %s11, [#allocation5]
    $region81: #{tpu_custom_call.1} parent=1 // pred_fallthru
      _
    // Predicated region
    $region82: #{tpu_custom_call.1} parent=1 // pred_check
      _
    $region83: #{tpu_custom_call.1} parent=1 // pred_check_branch
      %3631 = sbr.rel (0) target = $region85
    $region84: #{tpu_custom_call.1} parent=1 // pred_region
      %3632 = dma.done [#allocation5], 64
    $region85: #{tpu_custom_call.1} parent=1 // pred_fallthru
      _
    %3633 = vsyncpa [#allocation4], 1
    %3634 = vsyncpa [#allocation7], 1
    %3635 = vsyncpa [#allocation10], 1
    %3636 = vsyncpa [#allocation13], 1
    %3637 = vsyncpa [#allocation16], 1
    %3638 = vsyncpa [#allocation5], 1

</llo_original>
